<compile_context>
chip_gen: v5e
topology: v5e:2x2
jax: 0.10.0
libtpu: 0.0.40
codegen_flags: <defaults>
</compile_context>

<pallas_src>
import functools

import jax
import jax.numpy as jnp
from jax.experimental import pallas as pl
from jax.experimental.pallas import tpu as pltpu


# ----------------------------- in-kernel helpers -----------------------------

def _conv3x3(y, w_ref, b_ref, pad_ref, *, h, w, cin, cout):
    """3x3 'same' conv + bias + ReLU on one image held in VMEM.

    y:       (h*w, cin) f32 activations, rows ordered (y, x).
    w_ref:   (9*cin, cout) bf16 weights, rows ordered (ky, kx, cin).
    b_ref:   (1, cout) f32 bias.
    pad_ref: ((h+2)*w, 3*cin) bf16 scratch.  Rows = [w-row zero halo | h*w
             interior | w-row zero halo]; lanes = [x-1 | centre | x+1] * cin.
    Returns (h*w, cout) f32.
    """
    m = h * w
    # x-boundary masks from a tiny (m, 1) iota (h, w are powers of two here).
    xx = jax.lax.broadcasted_iota(jnp.int32, (m, 1), 0) % w
    # pltpu.roll follows jnp.roll: roll(y, s)[p] = y[p - s].
    xm1 = jnp.where(xx >= 1, pltpu.roll(y, 1, axis=0), 0.0)          # in[y, x-1]
    xp1 = jnp.where(xx <= w - 2, pltpu.roll(y, m - 1, axis=0), 0.0)  # in[y, x+1]

    # Zero only the halo rows; the interior is fully overwritten below.
    zero_halo = jnp.zeros((w, 3 * cin), jnp.bfloat16)
    pad_ref[0:w, :] = zero_halo
    pad_ref[(h + 1) * w:(h + 2) * w, :] = zero_halo
    # Interior stores at sublane-aligned row offset w; one bf16 cast each.
    pad_ref[w:(h + 1) * w, 0:cin] = xm1.astype(jnp.bfloat16)
    pad_ref[w:(h + 1) * w, cin:2 * cin] = y.astype(jnp.bfloat16)
    pad_ref[w:(h + 1) * w, 2 * cin:3 * cin] = xp1.astype(jnp.bfloat16)

    # One K=3*cin MXU dot per kernel row ky; row offsets ky*w are aligned.
    acc = jnp.zeros((m, cout), jnp.float32)
    for ky in range(3):
        taps = pad_ref[ky * w:ky * w + m, :]                          # (m, 3*cin) bf16
        acc = acc + jnp.dot(taps, w_ref[ky * 3 * cin:(ky + 1) * 3 * cin, :],
                            preferred_element_type=jnp.float32)
    return jnp.maximum(acc + b_ref[...], 0.0)


# ------------------------------- fused kernel --------------------------------

def _smallcnn_kernel(x1_ref, w1_ref, b1_ref, w2_ref, b2_ref, w3_ref, b3_ref,
                     w4_ref, b4_ref, fc1w_ref, fc1b_ref, fc3w_ref, fc3b_ref,
                     o_ref, pad2_ref, pad3_ref, pad4_ref, ps1_ref, ps2_ref,
                     *, h, w):
    f32 = jnp.float32
    hp, wp = h // 2, w // 2
    m, mp = h * w, hp * wp

    # conv1 + ReLU (Cin=1): tiny (m, 9) @ (9, 32) im2col dot, kept in f32.
    y1 = jnp.dot(x1_ref[...], w1_ref[...], preferred_element_type=f32)
    y1 = jnp.maximum(y1 + b1_ref[...], 0.0)                           # (m, 32)

    # conv2 + ReLU
    y2 = _conv3x3(y1, w2_ref, b2_ref, pad2_ref, h=h, w=w, cin=32, cout=32)

    # AvgPool2d(2, 2): two XLU neighbour adds, then compact even rows/columns.
    t = y2 + pltpu.roll(y2, m - 1, axis=0)            # + right neighbour (x+1)
    t = t + pltpu.roll(t, m - w, axis=0)              # + row below       (y+1)
    ty = jnp.concatenate([t[2 * a * w:(2 * a + 1) * w] for a in range(hp)],
                         axis=0)                      # keep even image rows
    ps1_ref[...] = ty.reshape(hp, w, 32)
    for b in range(wp):                               # keep even columns
        ps2_ref[:, pl.ds(b, 1), :] = ps1_ref[:, pl.ds(2 * b, 1), :]
    yp = ps2_ref[...].reshape(mp, 32) * 0.25          # (mp, 32), rows (yo, xo)

    # conv3 + ReLU, conv4 + ReLU
    y3 = _conv3x3(yp, w3_ref, b3_ref, pad3_ref, h=hp, w=wp, cin=32, cout=64)
    y4 = _conv3x3(y3, w4_ref, b4_ref, pad4_ref, h=hp, w=wp, cin=64, cout=64)

    # AdaptiveAvgPool2d(1): global spatial mean of this image (sublane sum).
    feat = jnp.sum(y4, axis=0, keepdims=True) * (1.0 / mp)            # (1, 64)

    # classifier: fc1 + ReLU + fc3 (tiny, kept in f32).
    hid = jnp.maximum(
        jnp.dot(feat, fc1w_ref[...], preferred_element_type=f32) + fc1b_ref[...],
        0.0)                                                          # (1, 200)
    logits = (jnp.dot(hid, fc3w_ref[...], preferred_element_type=f32)
              + fc3b_ref[...])                                        # (1, labels)
    o_ref[...] = logits.reshape(1, 1, -1).astype(o_ref.dtype)


# --------------------------------- wrapper -----------------------------------

@jax.jit
def small_cnn_forward(x_nchw, params):
    n, c_in, h, w = x_nchw.shape
    assert c_in == 1 and h % 2 == 0 and w % 2 == 0
    num_labels = params["fc3_w"].shape[1]

    # num_channels == 1: NCHW -> NHWC is layout-identical, so just reshape.
    x = x_nchw.reshape(n, h, w).astype(jnp.float32)
    # conv1's im2col is tiny (Cin=1 -> 9 columns); build it in plain JAX.
    # TODO(synk): fold conv1's im2col into the kernel; the Cin=1 lane layout
    # does not fit the in-kernel tap packing nicely and the win is tiny.
    xp = jnp.pad(x, ((0, 0), (1, 1), (1, 1)))
    cols = [xp[:, dy:dy + h, dx:dx + w] for dy in range(3) for dx in range(3)]
    x1col = jnp.stack(cols, axis=-1).reshape(n * h * w, 9)

    hp, wp = h // 2, w // 2
    m1, mp = h * w, hp * wp

    flops = 2 * n * (m1 * 9 * 32 + m1 * (9 * 32) * 32 + mp * (9 * 32) * 64
                     + mp * (9 * 64) * 64 + 64 * 200 + 200 * num_labels
                     + 2 * m1 * 32 + mp * 64)
    bytes_accessed = (4 * n * m1 * 9 + 4 * 9 * 32
                      + 2 * (9 * 32 * 32 + 9 * 32 * 64 + 9 * 64 * 64)
                      + 4 * (64 * 200 + 200 * num_labels)
                      + 4 * (32 * 2 + 64 * 2 + 200 + num_labels)
                      + 4 * n * num_labels)

    kernel = functools.partial(_smallcnn_kernel, h=h, w=w)
    full = lambda shape: pl.BlockSpec(shape, lambda i: (0, 0))

    out = pl.pallas_call(
        kernel,
        out_shape=jax.ShapeDtypeStruct((n, 1, num_labels), jnp.float32),
        grid=(n,),
        in_specs=[
            pl.BlockSpec((m1, 9), lambda i: (i, 0)),           # per-image im2col
            full((9, 32)), full((1, 32)),                      # conv1 w, b
            full((9 * 32, 32)), full((1, 32)),                 # conv2 w, b
            full((9 * 32, 64)), full((1, 64)),                 # conv3 w, b
            full((9 * 64, 64)), full((1, 64)),                 # conv4 w, b
            full((64, 200)), full((1, 200)),                   # fc1  w, b
            full((200, num_labels)), full((1, num_labels)),    # fc3  w, b
        ],
        out_specs=pl.BlockSpec((1, 1, num_labels), lambda i: (i, 0, 0)),
        scratch_shapes=[
            pltpu.VMEM(((h + 2) * w, 3 * 32), jnp.bfloat16),    # conv2 tap slab
            pltpu.VMEM(((hp + 2) * wp, 3 * 32), jnp.bfloat16),  # conv3 tap slab
            pltpu.VMEM(((hp + 2) * wp, 3 * 64), jnp.bfloat16),  # conv4 tap slab
            pltpu.VMEM((hp, w, 32), jnp.float32),               # pool stage 1
            pltpu.VMEM((hp, wp, 32), jnp.float32),              # pool stage 2
        ],
        compiler_params=pltpu.CompilerParams(
            dimension_semantics=("parallel",)),
        cost_estimate=pl.CostEstimate(flops=flops, transcendentals=0,
                                      bytes_accessed=bytes_accessed),
    )(x1col,
      params["w1"], params["b1"].reshape(1, -1),
      params["w2"].astype(jnp.bfloat16), params["b2"].reshape(1, -1),
      params["w3"].astype(jnp.bfloat16), params["b3"].reshape(1, -1),
      params["w4"].astype(jnp.bfloat16), params["b4"].reshape(1, -1),
      params["fc1_w"], params["fc1_b"].reshape(1, -1),
      params["fc3_w"], params["fc3_b"].reshape(1, -1))
    return out.reshape(n, num_labels)


# ------------- deterministic parameter init (mirrors __init__) ---------------

def init_params(key):
    ks = jax.random.split(key, 7)

    def conv_w(k, cin, cout):
        std = (2.0 / (cin * 9)) ** 0.5            # kaiming_normal_, fan_in
        return std * jax.random.normal(k, (9 * cin, cout), jnp.float32)

    p = {}
    p["w1"], p["b1"] = conv_w(ks[0], 1, 32), jnp.zeros((32,), jnp.float32)
    p["w2"], p["b2"] = conv_w(ks[1], 32, 32), jnp.zeros((32,), jnp.float32)
    p["w3"], p["b3"] = conv_w(ks[2], 32, 64), jnp.zeros((64,), jnp.float32)
    p["w4"], p["b4"] = conv_w(ks[3], 64, 64), jnp.zeros((64,), jnp.float32)
    lim = 1.0 / (64.0 ** 0.5)                     # fc1: default nn.Linear init
    p["fc1_w"] = jax.random.uniform(ks[4], (64, 200), jnp.float32, -lim, lim)
    p["fc1_b"] = jax.random.uniform(ks[5], (200,), jnp.float32, -lim, lim)
    p["fc3_w"] = ((2.0 / 200.0) ** 0.5) * jax.random.normal(ks[6], (200, 10),
                                                            jnp.float32)
    p["fc3_b"] = jnp.zeros((10,), jnp.float32)    # fc3: kaiming_normal_, zero bias
    return p


if __name__ == "__main__":
    key = jax.random.PRNGKey(0)
    k_in, k_par = jax.random.split(key)
    # PyTorch module: num_channels=1 -> NCHW input (batch=2, 1, 16, 16)
    x = jax.random.normal(k_in, (2, 1, 16, 16), jnp.float32)
    params = init_params(k_par)
    logits = small_cnn_forward(x, params)
    jax.block_until_ready(logits)
    assert logits.shape == (2, 10) and logits.dtype == jnp.float32
    assert bool(jnp.all(jnp.isfinite(logits)))
    print("KERNEL_OK")
</pallas_src>

<mosaic_0001>
module attributes {stable_mosaic.version = 11 : i64} {
  func.func @_smallcnn_kernel(%arg0: i32, %arg1: memref<256x9xf32, #tpu.memory_space<vmem>>, %arg2: memref<9x32xf32, #tpu.memory_space<vmem>>, %arg3: memref<1x32xf32, #tpu.memory_space<vmem>>, %arg4: memref<288x32xbf16, #tpu.memory_space<vmem>>, %arg5: memref<1x32xf32, #tpu.memory_space<vmem>>, %arg6: memref<288x64xbf16, #tpu.memory_space<vmem>>, %arg7: memref<1x64xf32, #tpu.memory_space<vmem>>, %arg8: memref<576x64xbf16, #tpu.memory_space<vmem>>, %arg9: memref<1x64xf32, #tpu.memory_space<vmem>>, %arg10: memref<64x200xf32, #tpu.memory_space<vmem>>, %arg11: memref<1x200xf32, #tpu.memory_space<vmem>>, %arg12: memref<200x10xf32, #tpu.memory_space<vmem>>, %arg13: memref<1x10xf32, #tpu.memory_space<vmem>>, %arg14: memref<1x1x10xf32, #tpu.memory_space<vmem>>, %arg15: memref<288x96xbf16, #tpu.memory_space<vmem>>, %arg16: memref<80x96xbf16, #tpu.memory_space<vmem>>, %arg17: memref<80x192xbf16, #tpu.memory_space<vmem>>, %arg18: memref<8x16x32xf32, #tpu.memory_space<vmem>>, %arg19: memref<8x8x32xf32, #tpu.memory_space<vmem>>) attributes {dimension_semantics = [#tpu.dimension_semantics<parallel>], iteration_bounds = array<i64: 2>, scalar_prefetch = 0 : i64, scratch_operands = 5 : i64, tpu.core_type = #tpu.core_type<tc>, window_params = [{transform_indices = @transform_0, window_bounds = array<i64: 256, 9>}, {pipeline_mode = #tpu.pipeline_mode<synchronous>, transform_indices = @transform_1, window_bounds = array<i64: 9, 32>}, {pipeline_mode = #tpu.pipeline_mode<synchronous>, transform_indices = @transform_2, window_bounds = array<i64: 1, 32>}, {pipeline_mode = #tpu.pipeline_mode<synchronous>, transform_indices = @transform_3, window_bounds = array<i64: 288, 32>}, {pipeline_mode = #tpu.pipeline_mode<synchronous>, transform_indices = @transform_4, window_bounds = array<i64: 1, 32>}, {pipeline_mode = #tpu.pipeline_mode<synchronous>, transform_indices = @transform_5, window_bounds = array<i64: 288, 64>}, {pipeline_mode = #tpu.pipeline_mode<synchronous>, transform_indices = @transform_6, window_bounds = array<i64: 1, 64>}, {pipeline_mode = #tpu.pipeline_mode<synchronous>, transform_indices = @transform_7, window_bounds = array<i64: 576, 64>}, {pipeline_mode = #tpu.pipeline_mode<synchronous>, transform_indices = @transform_8, window_bounds = array<i64: 1, 64>}, {pipeline_mode = #tpu.pipeline_mode<synchronous>, transform_indices = @transform_9, window_bounds = array<i64: 64, 200>}, {pipeline_mode = #tpu.pipeline_mode<synchronous>, transform_indices = @transform_10, window_bounds = array<i64: 1, 200>}, {pipeline_mode = #tpu.pipeline_mode<synchronous>, transform_indices = @transform_11, window_bounds = array<i64: 200, 10>}, {pipeline_mode = #tpu.pipeline_mode<synchronous>, transform_indices = @transform_12, window_bounds = array<i64: 1, 10>}, {transform_indices = @transform_13, window_bounds = array<i64: 1, 1, 10>}]} {
    %c0 = arith.constant 0 : index
    %c0_0 = arith.constant 0 : index
    %0 = vector.load %arg1[%c0, %c0_0] : memref<256x9xf32, #tpu.memory_space<vmem>>, vector<256x9xf32>
    %c0_1 = arith.constant 0 : index
    %c0_2 = arith.constant 0 : index
    %1 = vector.load %arg2[%c0_1, %c0_2] : memref<9x32xf32, #tpu.memory_space<vmem>>, vector<9x32xf32>
    %cst = arith.constant dense<0.000000e+00> : vector<256x32xf32>
    %2 = tpu.matmul %0, %1, %cst {dimension_numbers = #tpu.dot_dimension_numbers<[1], [0], [0], [1], [0, 0, 1, 1], [], []>} : vector<256x9xf32>, vector<9x32xf32>, vector<256x32xf32> -> vector<256x32xf32>
    %c0_3 = arith.constant 0 : index
    %c0_4 = arith.constant 0 : index
    %3 = vector.load %arg3[%c0_3, %c0_4] : memref<1x32xf32, #tpu.memory_space<vmem>>, vector<1x32xf32>
    %4 = vector.broadcast %3 : vector<1x32xf32> to vector<256x32xf32>
    %5 = arith.addf %2, %4 : vector<256x32xf32>
    %cst_5 = arith.constant 0.000000e+00 : f32
    %6 = vector.broadcast %cst_5 : f32 to vector<256x32xf32>
    %7 = arith.maximumf %5, %6 : vector<256x32xf32>
    %8 = tpu.iota {dimensions = array<i32: 0>} : vector<256x1xi32>
    %c16_i32 = arith.constant 16 : i32
    %c0_i32 = arith.constant 0 : i32
    %9 = arith.cmpi eq, %c16_i32, %c0_i32 : i32
    %c1_i32 = arith.constant 1 : i32
    %10 = arith.select %9, %c1_i32, %c16_i32 : i32
    %11 = vector.broadcast %10 : i32 to vector<256x1xi32>
    %12 = arith.remsi %8, %11 : vector<256x1xi32>
    %c0_i32_6 = arith.constant 0 : i32
    %13 = vector.broadcast %c0_i32_6 : i32 to vector<256x1xi32>
    %14 = arith.cmpi ne, %12, %13 : vector<256x1xi32>
    %c0_i32_7 = arith.constant 0 : i32
    %15 = vector.broadcast %c0_i32_7 : i32 to vector<256x1xi32>
    %16 = arith.cmpi slt, %12, %15 : vector<256x1xi32>
    %c0_i32_8 = arith.constant 0 : i32
    %17 = arith.cmpi slt, %10, %c0_i32_8 : i32
    %18 = vector.broadcast %17 : i1 to vector<256x1xi1>
    %19 = vector.broadcast %18 : vector<256x1xi1> to vector<256x1xi1>
    %20 = arith.xori %16, %19 : vector<256x1xi1>
    %21 = arith.andi %20, %14 : vector<256x1xi1>
    %22 = vector.broadcast %10 : i32 to vector<256x1xi32>
    %23 = arith.addi %12, %22 : vector<256x1xi32>
    %24 = arith.select %21, %23, %12 : vector<256x1xi1>, vector<256x1xi32>
    %c1_i32_9 = arith.constant 1 : i32
    %25 = vector.broadcast %c1_i32_9 : i32 to vector<256x1xi32>
    %26 = arith.cmpi sge, %24, %25 : vector<256x1xi32>
    %c1_i32_10 = arith.constant 1 : i32
    %27 = tpu.dynamic_rotate %7 by %c1_i32_10 dim 0 : vector<256x32xf32>, i32 -> vector<256x32xf32>
    %cst_11 = arith.constant 0.000000e+00 : f32
    %28 = vector.shape_cast %26 : vector<256x1xi1> to vector<256x1xi1>
    %29 = vector.broadcast %28 : vector<256x1xi1> to vector<256x32xi1>
    %30 = vector.broadcast %cst_11 : f32 to vector<256x32xf32>
    %31 = arith.select %29, %27, %30 : vector<256x32xi1>, vector<256x32xf32>
    %c14_i32 = arith.constant 14 : i32
    %32 = vector.broadcast %c14_i32 : i32 to vector<256x1xi32>
    %33 = arith.cmpi sle, %24, %32 : vector<256x1xi32>
    %c255_i32 = arith.constant 255 : i32
    %34 = tpu.dynamic_rotate %7 by %c255_i32 dim 0 : vector<256x32xf32>, i32 -> vector<256x32xf32>
    %cst_12 = arith.constant 0.000000e+00 : f32
    %35 = vector.shape_cast %33 : vector<256x1xi1> to vector<256x1xi1>
    %36 = vector.broadcast %35 : vector<256x1xi1> to vector<256x32xi1>
    %37 = vector.broadcast %cst_12 : f32 to vector<256x32xf32>
    %38 = arith.select %36, %34, %37 : vector<256x32xi1>, vector<256x32xf32>
    %cst_13 = arith.constant 0.000000e+00 : bf16
    %39 = vector.broadcast %cst_13 : bf16 to vector<16x96xbf16>
    %c0_14 = arith.constant 0 : index
    %c0_15 = arith.constant 0 : index
    %40 = vector.load %arg15[%c0_14, %c0_15] : memref<288x96xbf16, #tpu.memory_space<vmem>>, vector<16x96xbf16>
    tpu.vector_store %arg15[%c0_14, %c0_15], %39 {strides = array<i32>} : memref<288x96xbf16, #tpu.memory_space<vmem>>, vector<16x96xbf16>,
    %c272 = arith.constant 272 : index
    %c0_16 = arith.constant 0 : index
    %41 = vector.load %arg15[%c272, %c0_16] : memref<288x96xbf16, #tpu.memory_space<vmem>>, vector<16x96xbf16>
    tpu.vector_store %arg15[%c272, %c0_16], %39 {strides = array<i32>} : memref<288x96xbf16, #tpu.memory_space<vmem>>, vector<16x96xbf16>,
    %42 = arith.truncf %31 : vector<256x32xf32> to vector<256x32xbf16>
    %c16 = arith.constant 16 : index
    %c0_17 = arith.constant 0 : index
    %43 = vector.load %arg15[%c16, %c0_17] : memref<288x96xbf16, #tpu.memory_space<vmem>>, vector<256x32xbf16>
    tpu.vector_store %arg15[%c16, %c0_17], %42 {strides = array<i32>} : memref<288x96xbf16, #tpu.memory_space<vmem>>, vector<256x32xbf16>,
    %44 = arith.truncf %7 : vector<256x32xf32> to vector<256x32xbf16>
    %c16_18 = arith.constant 16 : index
    %c32 = arith.constant 32 : index
    %45 = vector.load %arg15[%c16_18, %c32] : memref<288x96xbf16, #tpu.memory_space<vmem>>, vector<256x32xbf16>
    tpu.vector_store %arg15[%c16_18, %c32], %44 {strides = array<i32>} : memref<288x96xbf16, #tpu.memory_space<vmem>>, vector<256x32xbf16>,
    %46 = arith.truncf %38 : vector<256x32xf32> to vector<256x32xbf16>
    %c16_19 = arith.constant 16 : index
    %c64 = arith.constant 64 : index
    %47 = vector.load %arg15[%c16_19, %c64] : memref<288x96xbf16, #tpu.memory_space<vmem>>, vector<256x32xbf16>
    tpu.vector_store %arg15[%c16_19, %c64], %46 {strides = array<i32>} : memref<288x96xbf16, #tpu.memory_space<vmem>>, vector<256x32xbf16>,
    %cst_20 = arith.constant 0.000000e+00 : f32
    %48 = vector.broadcast %cst_20 : f32 to vector<256x32xf32>
    %c0_21 = arith.constant 0 : index
    %c0_22 = arith.constant 0 : index
    %49 = vector.load %arg15[%c0_21, %c0_22] : memref<288x96xbf16, #tpu.memory_space<vmem>>, vector<256x96xbf16>
    %c0_23 = arith.constant 0 : index
    %c0_24 = arith.constant 0 : index
    %50 = vector.load %arg4[%c0_23, %c0_24] : memref<288x32xbf16, #tpu.memory_space<vmem>>, vector<96x32xbf16>
    %cst_25 = arith.constant dense<0.000000e+00> : vector<256x32xf32>
    %51 = tpu.matmul %49, %50, %cst_25 {dimension_numbers = #tpu.dot_dimension_numbers<[1], [0], [0], [1], [0, 0, 1, 1], [], []>} : vector<256x96xbf16>, vector<96x32xbf16>, vector<256x32xf32> -> vector<256x32xf32>
    %52 = arith.addf %48, %51 : vector<256x32xf32>
    %c16_26 = arith.constant 16 : index
    %c0_27 = arith.constant 0 : index
    %53 = vector.load %arg15[%c16_26, %c0_27] : memref<288x96xbf16, #tpu.memory_space<vmem>>, vector<256x96xbf16>
    %c96 = arith.constant 96 : index
    %c0_28 = arith.constant 0 : index
    %54 = vector.load %arg4[%c96, %c0_28] : memref<288x32xbf16, #tpu.memory_space<vmem>>, vector<96x32xbf16>
    %cst_29 = arith.constant dense<0.000000e+00> : vector<256x32xf32>
    %55 = tpu.matmul %53, %54, %cst_29 {dimension_numbers = #tpu.dot_dimension_numbers<[1], [0], [0], [1], [0, 0, 1, 1], [], []>} : vector<256x96xbf16>, vector<96x32xbf16>, vector<256x32xf32> -> vector<256x32xf32>
    %56 = arith.addf %52, %55 : vector<256x32xf32>
    %c32_30 = arith.constant 32 : index
    %c0_31 = arith.constant 0 : index
    %57 = vector.load %arg15[%c32_30, %c0_31] : memref<288x96xbf16, #tpu.memory_space<vmem>>, vector<256x96xbf16>
    %c192 = arith.constant 192 : index
    %c0_32 = arith.constant 0 : index
    %58 = vector.load %arg4[%c192, %c0_32] : memref<288x32xbf16, #tpu.memory_space<vmem>>, vector<96x32xbf16>
    %cst_33 = arith.constant dense<0.000000e+00> : vector<256x32xf32>
    %59 = tpu.matmul %57, %58, %cst_33 {dimension_numbers = #tpu.dot_dimension_numbers<[1], [0], [0], [1], [0, 0, 1, 1], [], []>} : vector<256x96xbf16>, vector<96x32xbf16>, vector<256x32xf32> -> vector<256x32xf32>
    %60 = arith.addf %56, %59 : vector<256x32xf32>
    %c0_34 = arith.constant 0 : index
    %c0_35 = arith.constant 0 : index
    %61 = vector.load %arg5[%c0_34, %c0_35] : memref<1x32xf32, #tpu.memory_space<vmem>>, vector<1x32xf32>
    %62 = vector.broadcast %61 : vector<1x32xf32> to vector<256x32xf32>
    %63 = arith.addf %60, %62 : vector<256x32xf32>
    %cst_36 = arith.constant 0.000000e+00 : f32
    %64 = vector.broadcast %cst_36 : f32 to vector<256x32xf32>
    %65 = arith.maximumf %63, %64 : vector<256x32xf32>
    %c255_i32_37 = arith.constant 255 : i32
    %66 = tpu.dynamic_rotate %65 by %c255_i32_37 dim 0 : vector<256x32xf32>, i32 -> vector<256x32xf32>
    %67 = arith.addf %65, %66 : vector<256x32xf32>
    %c240_i32 = arith.constant 240 : i32
    %68 = tpu.dynamic_rotate %67 by %c240_i32 dim 0 : vector<256x32xf32>, i32 -> vector<256x32xf32>
    %69 = arith.addf %67, %68 : vector<256x32xf32>
    %70 = vector.extract_strided_slice %69 {offsets = [0, 0], sizes = [16, 32], strides = [1, 1]} : vector<256x32xf32> to vector<16x32xf32>
    %71 = vector.extract_strided_slice %69 {offsets = [32, 0], sizes = [16, 32], strides = [1, 1]} : vector<256x32xf32> to vector<16x32xf32>
    %72 = vector.extract_strided_slice %69 {offsets = [64, 0], sizes = [16, 32], strides = [1, 1]} : vector<256x32xf32> to vector<16x32xf32>
    %73 = vector.extract_strided_slice %69 {offsets = [96, 0], sizes = [16, 32], strides = [1, 1]} : vector<256x32xf32> to vector<16x32xf32>
    %74 = vector.extract_strided_slice %69 {offsets = [128, 0], sizes = [16, 32], strides = [1, 1]} : vector<256x32xf32> to vector<16x32xf32>
    %75 = vector.extract_strided_slice %69 {offsets = [160, 0], sizes = [16, 32], strides = [1, 1]} : vector<256x32xf32> to vector<16x32xf32>
    %76 = vector.extract_strided_slice %69 {offsets = [192, 0], sizes = [16, 32], strides = [1, 1]} : vector<256x32xf32> to vector<16x32xf32>
    %77 = vector.extract_strided_slice %69 {offsets = [224, 0], sizes = [16, 32], strides = [1, 1]} : vector<256x32xf32> to vector<16x32xf32>
    %78 = tpu.concatenate %70, %71, %72, %73, %74, %75, %76, %77 in 0 : vector<16x32xf32>, vector<16x32xf32>, vector<16x32xf32>, vector<16x32xf32>, vector<16x32xf32>, vector<16x32xf32>, vector<16x32xf32>, vector<16x32xf32> -> vector<128x32xf32>
    %79 = vector.shape_cast %78 : vector<128x32xf32> to vector<8x16x32xf32>
    %c0_38 = arith.constant 0 : index
    %c0_39 = arith.constant 0 : index
    %c0_40 = arith.constant 0 : index
    %80 = vector.load %arg18[%c0_38, %c0_39, %c0_40] : memref<8x16x32xf32, #tpu.memory_space<vmem>>, vector<8x16x32xf32>
    tpu.vector_store %arg18[%c0_38, %c0_39, %c0_40], %79 {strides = array<i32>} : memref<8x16x32xf32, #tpu.memory_space<vmem>>, vector<8x16x32xf32>,
    %c0_41 = arith.constant 0 : index
    %c0_42 = arith.constant 0 : index
    %c0_43 = arith.constant 0 : index
    %81 = vector.load %arg18[%c0_41, %c0_42, %c0_43] : memref<8x16x32xf32, #tpu.memory_space<vmem>>, vector<8x1x32xf32>
    %c0_44 = arith.constant 0 : index
    %c0_45 = arith.constant 0 : index
    %c0_46 = arith.constant 0 : index
    %82 = vector.load %arg19[%c0_44, %c0_45, %c0_46] : memref<8x8x32xf32, #tpu.memory_space<vmem>>, vector<8x1x32xf32>
    tpu.vector_store %arg19[%c0_44, %c0_45, %c0_46], %81 {strides = array<i32>} : memref<8x8x32xf32, #tpu.memory_space<vmem>>, vector<8x1x32xf32>,
    %c0_47 = arith.constant 0 : index
    %c2 = arith.constant 2 : index
    %c0_48 = arith.constant 0 : index
    %83 = vector.load %arg18[%c0_47, %c2, %c0_48] : memref<8x16x32xf32, #tpu.memory_space<vmem>>, vector<8x1x32xf32>
    %c0_49 = arith.constant 0 : index
    %c1 = arith.constant 1 : index
    %c0_50 = arith.constant 0 : index
    %84 = vector.load %arg19[%c0_49, %c1, %c0_50] : memref<8x8x32xf32, #tpu.memory_space<vmem>>, vector<8x1x32xf32>
    tpu.vector_store %arg19[%c0_49, %c1, %c0_50], %83 {strides = array<i32>} : memref<8x8x32xf32, #tpu.memory_space<vmem>>, vector<8x1x32xf32>,
    %c0_51 = arith.constant 0 : index
    %c4 = arith.constant 4 : index
    %c0_52 = arith.constant 0 : index
    %85 = vector.load %arg18[%c0_51, %c4, %c0_52] : memref<8x16x32xf32, #tpu.memory_space<vmem>>, vector<8x1x32xf32>
    %c0_53 = arith.constant 0 : index
    %c2_54 = arith.constant 2 : index
    %c0_55 = arith.constant 0 : index
    %86 = vector.load %arg19[%c0_53, %c2_54, %c0_55] : memref<8x8x32xf32, #tpu.memory_space<vmem>>, vector<8x1x32xf32>
    tpu.vector_store %arg19[%c0_53, %c2_54, %c0_55], %85 {strides = array<i32>} : memref<8x8x32xf32, #tpu.memory_space<vmem>>, vector<8x1x32xf32>,
    %c0_56 = arith.constant 0 : index
    %c6 = arith.constant 6 : index
    %c0_57 = arith.constant 0 : index
    %87 = vector.load %arg18[%c0_56, %c6, %c0_57] : memref<8x16x32xf32, #tpu.memory_space<vmem>>, vector<8x1x32xf32>
    %c0_58 = arith.constant 0 : index
    %c3 = arith.constant 3 : index
    %c0_59 = arith.constant 0 : index
    %88 = vector.load %arg19[%c0_58, %c3, %c0_59] : memref<8x8x32xf32, #tpu.memory_space<vmem>>, vector<8x1x32xf32>
    tpu.vector_store %arg19[%c0_58, %c3, %c0_59], %87 {strides = array<i32>} : memref<8x8x32xf32, #tpu.memory_space<vmem>>, vector<8x1x32xf32>,
    %c0_60 = arith.constant 0 : index
    %c8 = arith.constant 8 : index
    %c0_61 = arith.constant 0 : index
    %89 = vector.load %arg18[%c0_60, %c8, %c0_61] : memref<8x16x32xf32, #tpu.memory_space<vmem>>, vector<8x1x32xf32>
    %c0_62 = arith.constant 0 : index
    %c4_63 = arith.constant 4 : index
    %c0_64 = arith.constant 0 : index
    %90 = vector.load %arg19[%c0_62, %c4_63, %c0_64] : memref<8x8x32xf32, #tpu.memory_space<vmem>>, vector<8x1x32xf32>
    tpu.vector_store %arg19[%c0_62, %c4_63, %c0_64], %89 {strides = array<i32>} : memref<8x8x32xf32, #tpu.memory_space<vmem>>, vector<8x1x32xf32>,
    %c0_65 = arith.constant 0 : index
    %c10 = arith.constant 10 : index
    %c0_66 = arith.constant 0 : index
    %91 = vector.load %arg18[%c0_65, %c10, %c0_66] : memref<8x16x32xf32, #tpu.memory_space<vmem>>, vector<8x1x32xf32>
    %c0_67 = arith.constant 0 : index
    %c5 = arith.constant 5 : index
    %c0_68 = arith.constant 0 : index
    %92 = vector.load %arg19[%c0_67, %c5, %c0_68] : memref<8x8x32xf32, #tpu.memory_space<vmem>>, vector<8x1x32xf32>
    tpu.vector_store %arg19[%c0_67, %c5, %c0_68], %91 {strides = array<i32>} : memref<8x8x32xf32, #tpu.memory_space<vmem>>, vector<8x1x32xf32>,
    %c0_69 = arith.constant 0 : index
    %c12 = arith.constant 12 : index
    %c0_70 = arith.constant 0 : index
    %93 = vector.load %arg18[%c0_69, %c12, %c0_70] : memref<8x16x32xf32, #tpu.memory_space<vmem>>, vector<8x1x32xf32>
    %c0_71 = arith.constant 0 : index
    %c6_72 = arith.constant 6 : index
    %c0_73 = arith.constant 0 : index
    %94 = vector.load %arg19[%c0_71, %c6_72, %c0_73] : memref<8x8x32xf32, #tpu.memory_space<vmem>>, vector<8x1x32xf32>
    tpu.vector_store %arg19[%c0_71, %c6_72, %c0_73], %93 {strides = array<i32>} : memref<8x8x32xf32, #tpu.memory_space<vmem>>, vector<8x1x32xf32>,
    %c0_74 = arith.constant 0 : index
    %c14 = arith.constant 14 : index
    %c0_75 = arith.constant 0 : index
    %95 = vector.load %arg18[%c0_74, %c14, %c0_75] : memref<8x16x32xf32, #tpu.memory_space<vmem>>, vector<8x1x32xf32>
    %c0_76 = arith.constant 0 : index
    %c7 = arith.constant 7 : index
    %c0_77 = arith.constant 0 : index
    %96 = vector.load %arg19[%c0_76, %c7, %c0_77] : memref<8x8x32xf32, #tpu.memory_space<vmem>>, vector<8x1x32xf32>
    tpu.vector_store %arg19[%c0_76, %c7, %c0_77], %95 {strides = array<i32>} : memref<8x8x32xf32, #tpu.memory_space<vmem>>, vector<8x1x32xf32>,
    %c0_78 = arith.constant 0 : index
    %c0_79 = arith.constant 0 : index
    %c0_80 = arith.constant 0 : index
    %97 = vector.load %arg19[%c0_78, %c0_79, %c0_80] : memref<8x8x32xf32, #tpu.memory_space<vmem>>, vector<8x8x32xf32>
    %98 = vector.shape_cast %97 : vector<8x8x32xf32> to vector<64x32xf32>
    %cst_81 = arith.constant 2.500000e-01 : f32
    %99 = vector.broadcast %cst_81 : f32 to vector<64x32xf32>
    %100 = arith.mulf %98, %99 : vector<64x32xf32>
    %101 = tpu.iota {dimensions = array<i32: 0>} : vector<64x1xi32>
    %c8_i32 = arith.constant 8 : i32
    %c0_i32_82 = arith.constant 0 : i32
    %102 = arith.cmpi eq, %c8_i32, %c0_i32_82 : i32
    %c1_i32_83 = arith.constant 1 : i32
    %103 = arith.select %102, %c1_i32_83, %c8_i32 : i32
    %104 = vector.broadcast %103 : i32 to vector<64x1xi32>
    %105 = arith.remsi %101, %104 : vector<64x1xi32>
    %c0_i32_84 = arith.constant 0 : i32
    %106 = vector.broadcast %c0_i32_84 : i32 to vector<64x1xi32>
    %107 = arith.cmpi ne, %105, %106 : vector<64x1xi32>
    %c0_i32_85 = arith.constant 0 : i32
    %108 = vector.broadcast %c0_i32_85 : i32 to vector<64x1xi32>
    %109 = arith.cmpi slt, %105, %108 : vector<64x1xi32>
    %c0_i32_86 = arith.constant 0 : i32
    %110 = arith.cmpi slt, %103, %c0_i32_86 : i32
    %111 = vector.broadcast %110 : i1 to vector<64x1xi1>
    %112 = vector.broadcast %111 : vector<64x1xi1> to vector<64x1xi1>
    %113 = arith.xori %109, %112 : vector<64x1xi1>
    %114 = arith.andi %113, %107 : vector<64x1xi1>
    %115 = vector.broadcast %103 : i32 to vector<64x1xi32>
    %116 = arith.addi %105, %115 : vector<64x1xi32>
    %117 = arith.select %114, %116, %105 : vector<64x1xi1>, vector<64x1xi32>
    %c1_i32_87 = arith.constant 1 : i32
    %118 = vector.broadcast %c1_i32_87 : i32 to vector<64x1xi32>
    %119 = arith.cmpi sge, %117, %118 : vector<64x1xi32>
    %c1_i32_88 = arith.constant 1 : i32
    %120 = tpu.dynamic_rotate %100 by %c1_i32_88 dim 0 : vector<64x32xf32>, i32 -> vector<64x32xf32>
    %cst_89 = arith.constant 0.000000e+00 : f32
    %121 = vector.shape_cast %119 : vector<64x1xi1> to vector<64x1xi1>
    %122 = vector.broadcast %121 : vector<64x1xi1> to vector<64x32xi1>
    %123 = vector.broadcast %cst_89 : f32 to vector<64x32xf32>
    %124 = arith.select %122, %120, %123 : vector<64x32xi1>, vector<64x32xf32>
    %c6_i32 = arith.constant 6 : i32
    %125 = vector.broadcast %c6_i32 : i32 to vector<64x1xi32>
    %126 = arith.cmpi sle, %117, %125 : vector<64x1xi32>
    %c63_i32 = arith.constant 63 : i32
    %127 = tpu.dynamic_rotate %100 by %c63_i32 dim 0 : vector<64x32xf32>, i32 -> vector<64x32xf32>
    %cst_90 = arith.constant 0.000000e+00 : f32
    %128 = vector.shape_cast %126 : vector<64x1xi1> to vector<64x1xi1>
    %129 = vector.broadcast %128 : vector<64x1xi1> to vector<64x32xi1>
    %130 = vector.broadcast %cst_90 : f32 to vector<64x32xf32>
    %131 = arith.select %129, %127, %130 : vector<64x32xi1>, vector<64x32xf32>
    %cst_91 = arith.constant 0.000000e+00 : bf16
    %132 = vector.broadcast %cst_91 : bf16 to vector<8x96xbf16>
    %c0_92 = arith.constant 0 : index
    %c0_93 = arith.constant 0 : index
    %133 = vector.load %arg16[%c0_92, %c0_93] : memref<80x96xbf16, #tpu.memory_space<vmem>>, vector<8x96xbf16>
    tpu.vector_store %arg16[%c0_92, %c0_93], %132 {strides = array<i32>} : memref<80x96xbf16, #tpu.memory_space<vmem>>, vector<8x96xbf16>,
    %c72 = arith.constant 72 : index
    %c0_94 = arith.constant 0 : index
    %134 = vector.load %arg16[%c72, %c0_94] : memref<80x96xbf16, #tpu.memory_space<vmem>>, vector<8x96xbf16>
    tpu.vector_store %arg16[%c72, %c0_94], %132 {strides = array<i32>} : memref<80x96xbf16, #tpu.memory_space<vmem>>, vector<8x96xbf16>,
    %135 = arith.truncf %124 : vector<64x32xf32> to vector<64x32xbf16>
    %c8_95 = arith.constant 8 : index
    %c0_96 = arith.constant 0 : index
    %136 = vector.load %arg16[%c8_95, %c0_96] : memref<80x96xbf16, #tpu.memory_space<vmem>>, vector<64x32xbf16>
    tpu.vector_store %arg16[%c8_95, %c0_96], %135 {strides = array<i32>} : memref<80x96xbf16, #tpu.memory_space<vmem>>, vector<64x32xbf16>,
    %137 = arith.truncf %100 : vector<64x32xf32> to vector<64x32xbf16>
    %c8_97 = arith.constant 8 : index
    %c32_98 = arith.constant 32 : index
    %138 = vector.load %arg16[%c8_97, %c32_98] : memref<80x96xbf16, #tpu.memory_space<vmem>>, vector<64x32xbf16>
    tpu.vector_store %arg16[%c8_97, %c32_98], %137 {strides = array<i32>} : memref<80x96xbf16, #tpu.memory_space<vmem>>, vector<64x32xbf16>,
    %139 = arith.truncf %131 : vector<64x32xf32> to vector<64x32xbf16>
    %c8_99 = arith.constant 8 : index
    %c64_100 = arith.constant 64 : index
    %140 = vector.load %arg16[%c8_99, %c64_100] : memref<80x96xbf16, #tpu.memory_space<vmem>>, vector<64x32xbf16>
    tpu.vector_store %arg16[%c8_99, %c64_100], %139 {strides = array<i32>} : memref<80x96xbf16, #tpu.memory_space<vmem>>, vector<64x32xbf16>,
    %cst_101 = arith.constant 0.000000e+00 : f32
    %141 = vector.broadcast %cst_101 : f32 to vector<64x64xf32>
    %c0_102 = arith.constant 0 : index
    %c0_103 = arith.constant 0 : index
    %142 = vector.load %arg16[%c0_102, %c0_103] : memref<80x96xbf16, #tpu.memory_space<vmem>>, vector<64x96xbf16>
    %c0_104 = arith.constant 0 : index
    %c0_105 = arith.constant 0 : index
    %143 = vector.load %arg6[%c0_104, %c0_105] : memref<288x64xbf16, #tpu.memory_space<vmem>>, vector<96x64xbf16>
    %cst_106 = arith.constant dense<0.000000e+00> : vector<64x64xf32>
    %144 = tpu.matmul %142, %143, %cst_106 {dimension_numbers = #tpu.dot_dimension_numbers<[1], [0], [0], [1], [0, 0, 1, 1], [], []>} : vector<64x96xbf16>, vector<96x64xbf16>, vector<64x64xf32> -> vector<64x64xf32>
    %145 = arith.addf %141, %144 : vector<64x64xf32>
    %c8_107 = arith.constant 8 : index
    %c0_108 = arith.constant 0 : index
    %146 = vector.load %arg16[%c8_107, %c0_108] : memref<80x96xbf16, #tpu.memory_space<vmem>>, vector<64x96xbf16>
    %c96_109 = arith.constant 96 : index
    %c0_110 = arith.constant 0 : index
    %147 = vector.load %arg6[%c96_109, %c0_110] : memref<288x64xbf16, #tpu.memory_space<vmem>>, vector<96x64xbf16>
    %cst_111 = arith.constant dense<0.000000e+00> : vector<64x64xf32>
    %148 = tpu.matmul %146, %147, %cst_111 {dimension_numbers = #tpu.dot_dimension_numbers<[1], [0], [0], [1], [0, 0, 1, 1], [], []>} : vector<64x96xbf16>, vector<96x64xbf16>, vector<64x64xf32> -> vector<64x64xf32>
    %149 = arith.addf %145, %148 : vector<64x64xf32>
    %c16_112 = arith.constant 16 : index
    %c0_113 = arith.constant 0 : index
    %150 = vector.load %arg16[%c16_112, %c0_113] : memref<80x96xbf16, #tpu.memory_space<vmem>>, vector<64x96xbf16>
    %c192_114 = arith.constant 192 : index
    %c0_115 = arith.constant 0 : index
    %151 = vector.load %arg6[%c192_114, %c0_115] : memref<288x64xbf16, #tpu.memory_space<vmem>>, vector<96x64xbf16>
    %cst_116 = arith.constant dense<0.000000e+00> : vector<64x64xf32>
    %152 = tpu.matmul %150, %151, %cst_116 {dimension_numbers = #tpu.dot_dimension_numbers<[1], [0], [0], [1], [0, 0, 1, 1], [], []>} : vector<64x96xbf16>, vector<96x64xbf16>, vector<64x64xf32> -> vector<64x64xf32>
    %153 = arith.addf %149, %152 : vector<64x64xf32>
    %c0_117 = arith.constant 0 : index
    %c0_118 = arith.constant 0 : index
    %154 = vector.load %arg7[%c0_117, %c0_118] : memref<1x64xf32, #tpu.memory_space<vmem>>, vector<1x64xf32>
    %155 = vector.broadcast %154 : vector<1x64xf32> to vector<64x64xf32>
    %156 = arith.addf %153, %155 : vector<64x64xf32>
    %cst_119 = arith.constant 0.000000e+00 : f32
    %157 = vector.broadcast %cst_119 : f32 to vector<64x64xf32>
    %158 = arith.maximumf %156, %157 : vector<64x64xf32>
    %159 = tpu.iota {dimensions = array<i32: 0>} : vector<64x1xi32>
    %c8_i32_120 = arith.constant 8 : i32
    %c0_i32_121 = arith.constant 0 : i32
    %160 = arith.cmpi eq, %c8_i32_120, %c0_i32_121 : i32
    %c1_i32_122 = arith.constant 1 : i32
    %161 = arith.select %160, %c1_i32_122, %c8_i32_120 : i32
    %162 = vector.broadcast %161 : i32 to vector<64x1xi32>
    %163 = arith.remsi %159, %162 : vector<64x1xi32>
    %c0_i32_123 = arith.constant 0 : i32
    %164 = vector.broadcast %c0_i32_123 : i32 to vector<64x1xi32>
    %165 = arith.cmpi ne, %163, %164 : vector<64x1xi32>
    %c0_i32_124 = arith.constant 0 : i32
    %166 = vector.broadcast %c0_i32_124 : i32 to vector<64x1xi32>
    %167 = arith.cmpi slt, %163, %166 : vector<64x1xi32>
    %c0_i32_125 = arith.constant 0 : i32
    %168 = arith.cmpi slt, %161, %c0_i32_125 : i32
    %169 = vector.broadcast %168 : i1 to vector<64x1xi1>
    %170 = vector.broadcast %169 : vector<64x1xi1> to vector<64x1xi1>
    %171 = arith.xori %167, %170 : vector<64x1xi1>
    %172 = arith.andi %171, %165 : vector<64x1xi1>
    %173 = vector.broadcast %161 : i32 to vector<64x1xi32>
    %174 = arith.addi %163, %173 : vector<64x1xi32>
    %175 = arith.select %172, %174, %163 : vector<64x1xi1>, vector<64x1xi32>
    %c1_i32_126 = arith.constant 1 : i32
    %176 = vector.broadcast %c1_i32_126 : i32 to vector<64x1xi32>
    %177 = arith.cmpi sge, %175, %176 : vector<64x1xi32>
    %c1_i32_127 = arith.constant 1 : i32
    %178 = tpu.dynamic_rotate %158 by %c1_i32_127 dim 0 : vector<64x64xf32>, i32 -> vector<64x64xf32>
    %cst_128 = arith.constant 0.000000e+00 : f32
    %179 = vector.shape_cast %177 : vector<64x1xi1> to vector<64x1xi1>
    %180 = vector.broadcast %179 : vector<64x1xi1> to vector<64x64xi1>
    %181 = vector.broadcast %cst_128 : f32 to vector<64x64xf32>
    %182 = arith.select %180, %178, %181 : vector<64x64xi1>, vector<64x64xf32>
    %c6_i32_129 = arith.constant 6 : i32
    %183 = vector.broadcast %c6_i32_129 : i32 to vector<64x1xi32>
    %184 = arith.cmpi sle, %175, %183 : vector<64x1xi32>
    %c63_i32_130 = arith.constant 63 : i32
    %185 = tpu.dynamic_rotate %158 by %c63_i32_130 dim 0 : vector<64x64xf32>, i32 -> vector<64x64xf32>
    %cst_131 = arith.constant 0.000000e+00 : f32
    %186 = vector.shape_cast %184 : vector<64x1xi1> to vector<64x1xi1>
    %187 = vector.broadcast %186 : vector<64x1xi1> to vector<64x64xi1>
    %188 = vector.broadcast %cst_131 : f32 to vector<64x64xf32>
    %189 = arith.select %187, %185, %188 : vector<64x64xi1>, vector<64x64xf32>
    %cst_132 = arith.constant 0.000000e+00 : bf16
    %190 = vector.broadcast %cst_132 : bf16 to vector<8x192xbf16>
    %c0_133 = arith.constant 0 : index
    %c0_134 = arith.constant 0 : index
    %191 = vector.load %arg17[%c0_133, %c0_134] : memref<80x192xbf16, #tpu.memory_space<vmem>>, vector<8x192xbf16>
    tpu.vector_store %arg17[%c0_133, %c0_134], %190 {strides = array<i32>} : memref<80x192xbf16, #tpu.memory_space<vmem>>, vector<8x192xbf16>,
    %c72_135 = arith.constant 72 : index
    %c0_136 = arith.constant 0 : index
    %192 = vector.load %arg17[%c72_135, %c0_136] : memref<80x192xbf16, #tpu.memory_space<vmem>>, vector<8x192xbf16>
    tpu.vector_store %arg17[%c72_135, %c0_136], %190 {strides = array<i32>} : memref<80x192xbf16, #tpu.memory_space<vmem>>, vector<8x192xbf16>,
    %193 = arith.truncf %182 : vector<64x64xf32> to vector<64x64xbf16>
    %c8_137 = arith.constant 8 : index
    %c0_138 = arith.constant 0 : index
    %194 = vector.load %arg17[%c8_137, %c0_138] : memref<80x192xbf16, #tpu.memory_space<vmem>>, vector<64x64xbf16>
    tpu.vector_store %arg17[%c8_137, %c0_138], %193 {strides = array<i32>} : memref<80x192xbf16, #tpu.memory_space<vmem>>, vector<64x64xbf16>,
    %195 = arith.truncf %158 : vector<64x64xf32> to vector<64x64xbf16>
    %c8_139 = arith.constant 8 : index
    %c64_140 = arith.constant 64 : index
    %196 = vector.load %arg17[%c8_139, %c64_140] : memref<80x192xbf16, #tpu.memory_space<vmem>>, vector<64x64xbf16>
    tpu.vector_store %arg17[%c8_139, %c64_140], %195 {strides = array<i32>} : memref<80x192xbf16, #tpu.memory_space<vmem>>, vector<64x64xbf16>,
    %197 = arith.truncf %189 : vector<64x64xf32> to vector<64x64xbf16>
    %c8_141 = arith.constant 8 : index
    %c128 = arith.constant 128 : index
    %198 = vector.load %arg17[%c8_141, %c128] : memref<80x192xbf16, #tpu.memory_space<vmem>>, vector<64x64xbf16>
    tpu.vector_store %arg17[%c8_141, %c128], %197 {strides = array<i32>} : memref<80x192xbf16, #tpu.memory_space<vmem>>, vector<64x64xbf16>,
    %cst_142 = arith.constant 0.000000e+00 : f32
    %199 = vector.broadcast %cst_142 : f32 to vector<64x64xf32>
    %c0_143 = arith.constant 0 : index
    %c0_144 = arith.constant 0 : index
    %200 = vector.load %arg17[%c0_143, %c0_144] : memref<80x192xbf16, #tpu.memory_space<vmem>>, vector<64x192xbf16>
    %c0_145 = arith.constant 0 : index
    %c0_146 = arith.constant 0 : index
    %201 = vector.load %arg8[%c0_145, %c0_146] : memref<576x64xbf16, #tpu.memory_space<vmem>>, vector<192x64xbf16>
    %cst_147 = arith.constant dense<0.000000e+00> : vector<64x64xf32>
    %202 = tpu.matmul %200, %201, %cst_147 {dimension_numbers = #tpu.dot_dimension_numbers<[1], [0], [0], [1], [0, 0, 1, 1], [], []>} : vector<64x192xbf16>, vector<192x64xbf16>, vector<64x64xf32> -> vector<64x64xf32>
    %203 = arith.addf %199, %202 : vector<64x64xf32>
    %c8_148 = arith.constant 8 : index
    %c0_149 = arith.constant 0 : index
    %204 = vector.load %arg17[%c8_148, %c0_149] : memref<80x192xbf16, #tpu.memory_space<vmem>>, vector<64x192xbf16>
    %c192_150 = arith.constant 192 : index
    %c0_151 = arith.constant 0 : index
    %205 = vector.load %arg8[%c192_150, %c0_151] : memref<576x64xbf16, #tpu.memory_space<vmem>>, vector<192x64xbf16>
    %cst_152 = arith.constant dense<0.000000e+00> : vector<64x64xf32>
    %206 = tpu.matmul %204, %205, %cst_152 {dimension_numbers = #tpu.dot_dimension_numbers<[1], [0], [0], [1], [0, 0, 1, 1], [], []>} : vector<64x192xbf16>, vector<192x64xbf16>, vector<64x64xf32> -> vector<64x64xf32>
    %207 = arith.addf %203, %206 : vector<64x64xf32>
    %c16_153 = arith.constant 16 : index
    %c0_154 = arith.constant 0 : index
    %208 = vector.load %arg17[%c16_153, %c0_154] : memref<80x192xbf16, #tpu.memory_space<vmem>>, vector<64x192xbf16>
    %c384 = arith.constant 384 : index
    %c0_155 = arith.constant 0 : index
    %209 = vector.load %arg8[%c384, %c0_155] : memref<576x64xbf16, #tpu.memory_space<vmem>>, vector<192x64xbf16>
    %cst_156 = arith.constant dense<0.000000e+00> : vector<64x64xf32>
    %210 = tpu.matmul %208, %209, %cst_156 {dimension_numbers = #tpu.dot_dimension_numbers<[1], [0], [0], [1], [0, 0, 1, 1], [], []>} : vector<64x192xbf16>, vector<192x64xbf16>, vector<64x64xf32> -> vector<64x64xf32>
    %211 = arith.addf %207, %210 : vector<64x64xf32>
    %c0_157 = arith.constant 0 : index
    %c0_158 = arith.constant 0 : index
    %212 = vector.load %arg9[%c0_157, %c0_158] : memref<1x64xf32, #tpu.memory_space<vmem>>, vector<1x64xf32>
    %213 = vector.broadcast %212 : vector<1x64xf32> to vector<64x64xf32>
    %214 = arith.addf %211, %213 : vector<64x64xf32>
    %cst_159 = arith.constant 0.000000e+00 : f32
    %215 = vector.broadcast %cst_159 : f32 to vector<64x64xf32>
    %216 = arith.maximumf %214, %215 : vector<64x64xf32>
    %cst_160 = arith.constant dense<0.000000e+00> : vector<64xf32>
    %217 = vector.multi_reduction <add>, %216, %cst_160 [0] : vector<64x64xf32> to vector<64xf32>
    %218 = vector.shape_cast %217 : vector<64xf32> to vector<1x64xf32>
    %cst_161 = arith.constant 1.562500e-02 : f32
    %219 = vector.broadcast %cst_161 : f32 to vector<1x64xf32>
    %220 = arith.mulf %218, %219 : vector<1x64xf32>
    %c0_162 = arith.constant 0 : index
    %c0_163 = arith.constant 0 : index
    %221 = vector.load %arg10[%c0_162, %c0_163] : memref<64x200xf32, #tpu.memory_space<vmem>>, vector<64x200xf32>
    %cst_164 = arith.constant dense<0.000000e+00> : vector<1x200xf32>
    %222 = tpu.matmul %220, %221, %cst_164 {dimension_numbers = #tpu.dot_dimension_numbers<[1], [0], [0], [1], [0, 0, 1, 1], [], []>} : vector<1x64xf32>, vector<64x200xf32>, vector<1x200xf32> -> vector<1x200xf32>
    %c0_165 = arith.constant 0 : index
    %c0_166 = arith.constant 0 : index
    %223 = vector.load %arg11[%c0_165, %c0_166] : memref<1x200xf32, #tpu.memory_space<vmem>>, vector<1x200xf32>
    %224 = arith.addf %222, %223 : vector<1x200xf32>
    %cst_167 = arith.constant 0.000000e+00 : f32
    %225 = vector.broadcast %cst_167 : f32 to vector<1x200xf32>
    %226 = arith.maximumf %224, %225 : vector<1x200xf32>
    %c0_168 = arith.constant 0 : index
    %c0_169 = arith.constant 0 : index
    %227 = vector.load %arg12[%c0_168, %c0_169] : memref<200x10xf32, #tpu.memory_space<vmem>>, vector<200x10xf32>
    %cst_170 = arith.constant dense<0.000000e+00> : vector<1x10xf32>
    %228 = tpu.matmul %226, %227, %cst_170 {dimension_numbers = #tpu.dot_dimension_numbers<[1], [0], [0], [1], [0, 0, 1, 1], [], []>} : vector<1x200xf32>, vector<200x10xf32>, vector<1x10xf32> -> vector<1x10xf32>
    %c0_171 = arith.constant 0 : index
    %c0_172 = arith.constant 0 : index
    %229 = vector.load %arg13[%c0_171, %c0_172] : memref<1x10xf32, #tpu.memory_space<vmem>>, vector<1x10xf32>
    %230 = arith.addf %228, %229 : vector<1x10xf32>
    %231 = vector.shape_cast %230 : vector<1x10xf32> to vector<1x1x10xf32>
    %c0_173 = arith.constant 0 : index
    %c0_174 = arith.constant 0 : index
    %c0_175 = arith.constant 0 : index
    %232 = vector.load %arg14[%c0_173, %c0_174, %c0_175] : memref<1x1x10xf32, #tpu.memory_space<vmem>>, vector<1x1x10xf32>
    tpu.vector_store %arg14[%c0_173, %c0_174, %c0_175], %231 {strides = array<i32>} : memref<1x1x10xf32, #tpu.memory_space<vmem>>, vector<1x1x10xf32>,
    return
  }
  func.func @transform_0(%arg0: i32) -> (i32, i32) {
    %c0_i32 = arith.constant 0 : i32
    %c0_i32_0 = arith.constant 0 : i32
    return %arg0, %c0_i32 : i32, i32
  }
  func.func @transform_1(%arg0: i32) -> (i32, i32) {
    %c0_i32 = arith.constant 0 : i32
    %c0_i32_0 = arith.constant 0 : i32
    %c0_i32_1 = arith.constant 0 : i32
    return %c0_i32, %c0_i32_0 : i32, i32
  }
  func.func @transform_2(%arg0: i32) -> (i32, i32) {
    %c0_i32 = arith.constant 0 : i32
    %c0_i32_0 = arith.constant 0 : i32
    %c0_i32_1 = arith.constant 0 : i32
    return %c0_i32, %c0_i32_0 : i32, i32
  }
  func.func @transform_3(%arg0: i32) -> (i32, i32) {
    %c0_i32 = arith.constant 0 : i32
    %c0_i32_0 = arith.constant 0 : i32
    %c0_i32_1 = arith.constant 0 : i32
    return %c0_i32, %c0_i32_0 : i32, i32
  }
  func.func @transform_4(%arg0: i32) -> (i32, i32) {
    %c0_i32 = arith.constant 0 : i32
    %c0_i32_0 = arith.constant 0 : i32
    %c0_i32_1 = arith.constant 0 : i32
    return %c0_i32, %c0_i32_0 : i32, i32
  }
  func.func @transform_5(%arg0: i32) -> (i32, i32) {
    %c0_i32 = arith.constant 0 : i32
    %c0_i32_0 = arith.constant 0 : i32
    %c0_i32_1 = arith.constant 0 : i32
    return %c0_i32, %c0_i32_0 : i32, i32
  }
  func.func @transform_6(%arg0: i32) -> (i32, i32) {
    %c0_i32 = arith.constant 0 : i32
    %c0_i32_0 = arith.constant 0 : i32
    %c0_i32_1 = arith.constant 0 : i32
    return %c0_i32, %c0_i32_0 : i32, i32
  }
  func.func @transform_7(%arg0: i32) -> (i32, i32) {
    %c0_i32 = arith.constant 0 : i32
    %c0_i32_0 = arith.constant 0 : i32
    %c0_i32_1 = arith.constant 0 : i32
    return %c0_i32, %c0_i32_0 : i32, i32
  }
  func.func @transform_8(%arg0: i32) -> (i32, i32) {
    %c0_i32 = arith.constant 0 : i32
    %c0_i32_0 = arith.constant 0 : i32
    %c0_i32_1 = arith.constant 0 : i32
    return %c0_i32, %c0_i32_0 : i32, i32
  }
  func.func @transform_9(%arg0: i32) -> (i32, i32) {
    %c0_i32 = arith.constant 0 : i32
    %c0_i32_0 = arith.constant 0 : i32
    %c0_i32_1 = arith.constant 0 : i32
    return %c0_i32, %c0_i32_0 : i32, i32
  }
  func.func @transform_10(%arg0: i32) -> (i32, i32) {
    %c0_i32 = arith.constant 0 : i32
    %c0_i32_0 = arith.constant 0 : i32
    %c0_i32_1 = arith.constant 0 : i32
    return %c0_i32, %c0_i32_0 : i32, i32
  }
  func.func @transform_11(%arg0: i32) -> (i32, i32) {
    %c0_i32 = arith.constant 0 : i32
    %c0_i32_0 = arith.constant 0 : i32
    %c0_i32_1 = arith.constant 0 : i32
    return %c0_i32, %c0_i32_0 : i32, i32
  }
  func.func @transform_12(%arg0: i32) -> (i32, i32) {
    %c0_i32 = arith.constant 0 : i32
    %c0_i32_0 = arith.constant 0 : i32
    %c0_i32_1 = arith.constant 0 : i32
    return %c0_i32, %c0_i32_0 : i32, i32
  }
  func.func @transform_13(%arg0: i32) -> (i32, i32, i32) {
    %c0_i32 = arith.constant 0 : i32
    %c0_i32_0 = arith.constant 0 : i32
    %c0_i32_1 = arith.constant 0 : i32
    return %arg0, %c0_i32, %c0_i32_0 : i32, i32, i32
  }
}

</mosaic_0001>

<llo_original>
// kernel: small_cnn_forward.1
$region0: #{small_cnn_forward.1}
  #allocation0 [shape = 'u32[]', space=smem, size = 0x4, offset = 0x4, fixed_abs, tag = 'smem constant byte address 0x4 - core index']
  #allocation1 [shape = 'u32[72,128]{1,0:T(1,128)}', space=vmem, size = 0x9000, scoped, tag = 'internal scratch']
  #allocation2 [shape = 'bf16[288,96]{1,0:T(8,128)(2,1)}', space=vmem, size = 0x12000, scoped, tag = 'scratch operand']
  #allocation3 [shape = 'bf16[80,96]{1,0:T(8,128)(2,1)}', space=vmem, size = 0x5000, scoped, tag = 'scratch operand']
  #allocation4 [shape = 'bf16[80,192]{1,0:T(8,128)(2,1)}', space=vmem, size = 0xa000, scoped, tag = 'scratch operand']
  #allocation5 [shape = 'f32[8,16,32]{2,1,0:T(8,128)}', space=vmem, size = 0x10000, scoped, tag = 'scratch operand']
  #allocation6 [shape = 'f32[8,8,32]{2,1,0:T(8,128)}', space=vmem, size = 0x8000, scoped, tag = 'scratch operand']
  %s0 = inlined_call_operand.vmem [shape: f32[512,9], index: 0, kind: input, shape index: {}]
  %s1 = inlined_call_operand.vmem [shape: f32[9,32], index: 1, kind: input, shape index: {}]
  %s2 = inlined_call_operand.vmem [shape: f32[1,32], index: 2, kind: input, shape index: {}]
  %s3 = inlined_call_operand.vmem [shape: bf16[288,32], index: 3, kind: input, shape index: {}]
  %s4 = inlined_call_operand.vmem [shape: f32[1,32], index: 4, kind: input, shape index: {}]
  %s5 = inlined_call_operand.vmem [shape: bf16[288,64], index: 5, kind: input, shape index: {}]
  %s6 = inlined_call_operand.vmem [shape: f32[1,64], index: 6, kind: input, shape index: {}]
  %s7 = inlined_call_operand.vmem [shape: bf16[576,64], index: 7, kind: input, shape index: {}]
  %s8 = inlined_call_operand.vmem [shape: f32[1,64], index: 8, kind: input, shape index: {}]
  %s9 = inlined_call_operand.vmem [shape: f32[64,200], index: 9, kind: input, shape index: {}]
  %s10 = inlined_call_operand.vmem [shape: f32[1,200], index: 10, kind: input, shape index: {}]
  %s11 = inlined_call_operand.vmem [shape: f32[200,10], index: 11, kind: input, shape index: {}]
  %s12 = inlined_call_operand.vmem [shape: f32[1,10], index: 12, kind: input, shape index: {}]
  %s13 = inlined_call_operand.hbm [shape: f32[2,1,10], index: 13, kind: output, shape index: {}]
  %s14 = sld [smem:[#allocation0]]
  $region85: #{small_cnn_forward.1} parent=0
    _
  %s16 = ssub.s32 1, %s14
  %s17 = scalar_select 0, %s16, %s14
  $region1: #{small_cnn_forward.1} parent=0
    #allocation7 [shape = 'u8[1024]{0}', space=vmem, size = 0x400, scoped, tag = 'output window, operand 0']
    #allocation8 [shape = 's32[2]{0}', space=sflag, size = 0x8, scoped, tag = 'scoped memory for small_cnn_forward.1']
    %18 = vsyncpa [#allocation8], 0
    %s19 = scalar_lea.sflag [#allocation8], 1
    %20 = vsyncpa %s19, 0
    loop: start=0, step=1, limit=4
    $region2: #{small_cnn_forward.1} parent=1 // loop_pre_header
      _
    $region3: #{small_cnn_forward.1} parent=1 // loop_header
      %s22 = sphi 0, %s26
      %p23 = scmp.ge.s32.totalorder %s22, 4
      %s32 = sphi 0, %s34
      %s35 = sphi 0, %s32
      %s36 = sphi 0, %s35
      %s52 = sphi 0, %s36
      %s56 = sphi 0, %s56
      %s58 = sphi 0, %s56
      %s59 = sphi 0, %s58
      %s73 = sphi 0, %s59
      %s77 = sphi 0, %s77
      %s79 = sphi 0, %s77
      %s80 = sphi 0, %s79
      %s94 = sphi 0, %s80
      %s98 = sphi 0, %s98
      %s100 = sphi 0, %s98
      %s101 = sphi 0, %s100
      %s115 = sphi 0, %s101
      %s119 = sphi 0, %s119
      %s121 = sphi 0, %s119
      %s122 = sphi 0, %s121
      %s136 = sphi 0, %s122
      %s140 = sphi 0, %s140
      %s142 = sphi 0, %s140
      %s143 = sphi 0, %s142
      %s157 = sphi 0, %s143
      %s161 = sphi 0, %s161
      %s163 = sphi 0, %s161
      %s164 = sphi 0, %s163
      %s178 = sphi 0, %s164
      %s182 = sphi 0, %s182
      %s184 = sphi 0, %s182
      %s185 = sphi 0, %s184
      %s199 = sphi 0, %s185
      %s203 = sphi 0, %s203
      %s205 = sphi 0, %s203
      %s206 = sphi 0, %s205
      %s220 = sphi 0, %s206
      %s224 = sphi 0, %s224
      %s226 = sphi 0, %s224
      %s227 = sphi 0, %s226
      %s241 = sphi 0, %s227
      %s245 = sphi 0, %s245
      %s247 = sphi 0, %s245
      %s248 = sphi 0, %s247
      %s262 = sphi 0, %s248
      %s266 = sphi 0, %s266
      %s268 = sphi 0, %s266
      %s269 = sphi 0, %s268
      %s283 = sphi 0, %s269
      %s287 = sphi 0, %s287
      %s289 = sphi 0, %s287
      %s290 = sphi 0, %s289
      %s304 = sphi 0, %s290
      %s310 = sphi 0, %s312
      %s313 = sphi 0, %s310
      %s314 = sphi 0, %s313
      %s330 = sphi 0, %s314
    $region4: #{small_cnn_forward.1} parent=1 // loop_header_branch
      %25 = sbr.rel (%p23) target = $region8
    $region5: #{small_cnn_forward.1} parent=1 // loop_body
      %s27 = ssub.s32 %s22, 1
      %s28 = ssub.s32 %s22, 2
      %s29 = sadd.s32 %s22, 1
      %s30 = ssub.s32 %s22, %s29
      %p31 = scmp.eq.s32.totalorder %s30, 0
      %s33 = sadd.s32 %s32, 1
      %s34 = scalar_select %p31, %s32, %s33
      %p37 = pneg %p31
      %p38 = scmp.eq.s32.totalorder %s22, 1
      %p39 = por %p37, %p38
      %p40 = scmp.ne.s32.totalorder %s32, %s35
      %p41 = scmp.eq.s32.totalorder %s22, 0
      %p42 = por %p40, %p41
      %p43 = scmp.ne.s32.totalorder %s32, %s35
      %p44 = scmp.eq.s32.totalorder %s27, 1
      %p45 = por %p43, %p44
      %p46 = scmp.ne.s32.totalorder %s35, %s36
      %p47 = scmp.eq.s32.totalorder %s27, 0
      %p48 = por %p46, %p47
      %p49 = scmp.ne.s32.totalorder %s35, %s36
      %p50 = scmp.eq.s32.totalorder %s28, 1
      %p51 = por %p49, %p50
      %p53 = scmp.ne.s32.totalorder %s36, %s52
      %p54 = scmp.eq.s32.totalorder %s28, 0
      %p55 = por %p53, %p54
      %s57 = sadd.s32 %s56, 1
      %p60 = scmp.eq.s32.totalorder %s22, 1
      %p61 = scmp.ne.s32.totalorder %s56, %s58
      %p62 = scmp.eq.s32.totalorder %s22, 0
      %p63 = por %p61, %p62
      %p64 = scmp.ne.s32.totalorder %s56, %s58
      %p65 = scmp.eq.s32.totalorder %s27, 1
      %p66 = por %p64, %p65
      %p67 = scmp.ne.s32.totalorder %s58, %s59
      %p68 = scmp.eq.s32.totalorder %s27, 0
      %p69 = por %p67, %p68
      %p70 = scmp.ne.s32.totalorder %s58, %s59
      %p71 = scmp.eq.s32.totalorder %s28, 1
      %p72 = por %p70, %p71
      %p74 = scmp.ne.s32.totalorder %s59, %s73
      %p75 = scmp.eq.s32.totalorder %s28, 0
      %p76 = por %p74, %p75
      %s78 = sadd.s32 %s77, 1
      %p81 = scmp.eq.s32.totalorder %s22, 1
      %p82 = scmp.ne.s32.totalorder %s77, %s79
      %p83 = scmp.eq.s32.totalorder %s22, 0
      %p84 = por %p82, %p83
      %p85 = scmp.ne.s32.totalorder %s77, %s79
      %p86 = scmp.eq.s32.totalorder %s27, 1
      %p87 = por %p85, %p86
      %p88 = scmp.ne.s32.totalorder %s79, %s80
      %p89 = scmp.eq.s32.totalorder %s27, 0
      %p90 = por %p88, %p89
      %p91 = scmp.ne.s32.totalorder %s79, %s80
      %p92 = scmp.eq.s32.totalorder %s28, 1
      %p93 = por %p91, %p92
      %p95 = scmp.ne.s32.totalorder %s80, %s94
      %p96 = scmp.eq.s32.totalorder %s28, 0
      %p97 = por %p95, %p96
      %s99 = sadd.s32 %s98, 1
      %p102 = scmp.eq.s32.totalorder %s22, 1
      %p103 = scmp.ne.s32.totalorder %s98, %s100
      %p104 = scmp.eq.s32.totalorder %s22, 0
      %p105 = por %p103, %p104
      %p106 = scmp.ne.s32.totalorder %s98, %s100
      %p107 = scmp.eq.s32.totalorder %s27, 1
      %p108 = por %p106, %p107
      %p109 = scmp.ne.s32.totalorder %s100, %s101
      %p110 = scmp.eq.s32.totalorder %s27, 0
      %p111 = por %p109, %p110
      %p112 = scmp.ne.s32.totalorder %s100, %s101
      %p113 = scmp.eq.s32.totalorder %s28, 1
      %p114 = por %p112, %p113
      %p116 = scmp.ne.s32.totalorder %s101, %s115
      %p117 = scmp.eq.s32.totalorder %s28, 0
      %p118 = por %p116, %p117
      %s120 = sadd.s32 %s119, 1
      %p123 = scmp.eq.s32.totalorder %s22, 1
      %p124 = scmp.ne.s32.totalorder %s119, %s121
      %p125 = scmp.eq.s32.totalorder %s22, 0
      %p126 = por %p124, %p125
      %p127 = scmp.ne.s32.totalorder %s119, %s121
      %p128 = scmp.eq.s32.totalorder %s27, 1
      %p129 = por %p127, %p128
      %p130 = scmp.ne.s32.totalorder %s121, %s122
      %p131 = scmp.eq.s32.totalorder %s27, 0
      %p132 = por %p130, %p131
      %p133 = scmp.ne.s32.totalorder %s121, %s122
      %p134 = scmp.eq.s32.totalorder %s28, 1
      %p135 = por %p133, %p134
      %p137 = scmp.ne.s32.totalorder %s122, %s136
      %p138 = scmp.eq.s32.totalorder %s28, 0
      %p139 = por %p137, %p138
      %s141 = sadd.s32 %s140, 1
      %p144 = scmp.eq.s32.totalorder %s22, 1
      %p145 = scmp.ne.s32.totalorder %s140, %s142
      %p146 = scmp.eq.s32.totalorder %s22, 0
      %p147 = por %p145, %p146
      %p148 = scmp.ne.s32.totalorder %s140, %s142
      %p149 = scmp.eq.s32.totalorder %s27, 1
      %p150 = por %p148, %p149
      %p151 = scmp.ne.s32.totalorder %s142, %s143
      %p152 = scmp.eq.s32.totalorder %s27, 0
      %p153 = por %p151, %p152
      %p154 = scmp.ne.s32.totalorder %s142, %s143
      %p155 = scmp.eq.s32.totalorder %s28, 1
      %p156 = por %p154, %p155
      %p158 = scmp.ne.s32.totalorder %s143, %s157
      %p159 = scmp.eq.s32.totalorder %s28, 0
      %p160 = por %p158, %p159
      %s162 = sadd.s32 %s161, 1
      %p165 = scmp.eq.s32.totalorder %s22, 1
      %p166 = scmp.ne.s32.totalorder %s161, %s163
      %p167 = scmp.eq.s32.totalorder %s22, 0
      %p168 = por %p166, %p167
      %p169 = scmp.ne.s32.totalorder %s161, %s163
      %p170 = scmp.eq.s32.totalorder %s27, 1
      %p171 = por %p169, %p170
      %p172 = scmp.ne.s32.totalorder %s163, %s164
      %p173 = scmp.eq.s32.totalorder %s27, 0
      %p174 = por %p172, %p173
      %p175 = scmp.ne.s32.totalorder %s163, %s164
      %p176 = scmp.eq.s32.totalorder %s28, 1
      %p177 = por %p175, %p176
      %p179 = scmp.ne.s32.totalorder %s164, %s178
      %p180 = scmp.eq.s32.totalorder %s28, 0
      %p181 = por %p179, %p180
      %s183 = sadd.s32 %s182, 1
      %p186 = scmp.eq.s32.totalorder %s22, 1
      %p187 = scmp.ne.s32.totalorder %s182, %s184
      %p188 = scmp.eq.s32.totalorder %s22, 0
      %p189 = por %p187, %p188
      %p190 = scmp.ne.s32.totalorder %s182, %s184
      %p191 = scmp.eq.s32.totalorder %s27, 1
      %p192 = por %p190, %p191
      %p193 = scmp.ne.s32.totalorder %s184, %s185
      %p194 = scmp.eq.s32.totalorder %s27, 0
      %p195 = por %p193, %p194
      %p196 = scmp.ne.s32.totalorder %s184, %s185
      %p197 = scmp.eq.s32.totalorder %s28, 1
      %p198 = por %p196, %p197
      %p200 = scmp.ne.s32.totalorder %s185, %s199
      %p201 = scmp.eq.s32.totalorder %s28, 0
      %p202 = por %p200, %p201
      %s204 = sadd.s32 %s203, 1
      %p207 = scmp.eq.s32.totalorder %s22, 1
      %p208 = scmp.ne.s32.totalorder %s203, %s205
      %p209 = scmp.eq.s32.totalorder %s22, 0
      %p210 = por %p208, %p209
      %p211 = scmp.ne.s32.totalorder %s203, %s205
      %p212 = scmp.eq.s32.totalorder %s27, 1
      %p213 = por %p211, %p212
      %p214 = scmp.ne.s32.totalorder %s205, %s206
      %p215 = scmp.eq.s32.totalorder %s27, 0
      %p216 = por %p214, %p215
      %p217 = scmp.ne.s32.totalorder %s205, %s206
      %p218 = scmp.eq.s32.totalorder %s28, 1
      %p219 = por %p217, %p218
      %p221 = scmp.ne.s32.totalorder %s206, %s220
      %p222 = scmp.eq.s32.totalorder %s28, 0
      %p223 = por %p221, %p222
      %s225 = sadd.s32 %s224, 1
      %p228 = scmp.eq.s32.totalorder %s22, 1
      %p229 = scmp.ne.s32.totalorder %s224, %s226
      %p230 = scmp.eq.s32.totalorder %s22, 0
      %p231 = por %p229, %p230
      %p232 = scmp.ne.s32.totalorder %s224, %s226
      %p233 = scmp.eq.s32.totalorder %s27, 1
      %p234 = por %p232, %p233
      %p235 = scmp.ne.s32.totalorder %s226, %s227
      %p236 = scmp.eq.s32.totalorder %s27, 0
      %p237 = por %p235, %p236
      %p238 = scmp.ne.s32.totalorder %s226, %s227
      %p239 = scmp.eq.s32.totalorder %s28, 1
      %p240 = por %p238, %p239
      %p242 = scmp.ne.s32.totalorder %s227, %s241
      %p243 = scmp.eq.s32.totalorder %s28, 0
      %p244 = por %p242, %p243
      %s246 = sadd.s32 %s245, 1
      %p249 = scmp.eq.s32.totalorder %s22, 1
      %p250 = scmp.ne.s32.totalorder %s245, %s247
      %p251 = scmp.eq.s32.totalorder %s22, 0
      %p252 = por %p250, %p251
      %p253 = scmp.ne.s32.totalorder %s245, %s247
      %p254 = scmp.eq.s32.totalorder %s27, 1
      %p255 = por %p253, %p254
      %p256 = scmp.ne.s32.totalorder %s247, %s248
      %p257 = scmp.eq.s32.totalorder %s27, 0
      %p258 = por %p256, %p257
      %p259 = scmp.ne.s32.totalorder %s247, %s248
      %p260 = scmp.eq.s32.totalorder %s28, 1
      %p261 = por %p259, %p260
      %p263 = scmp.ne.s32.totalorder %s248, %s262
      %p264 = scmp.eq.s32.totalorder %s28, 0
      %p265 = por %p263, %p264
      %s267 = sadd.s32 %s266, 1
      %p270 = scmp.eq.s32.totalorder %s22, 1
      %p271 = scmp.ne.s32.totalorder %s266, %s268
      %p272 = scmp.eq.s32.totalorder %s22, 0
      %p273 = por %p271, %p272
      %p274 = scmp.ne.s32.totalorder %s266, %s268
      %p275 = scmp.eq.s32.totalorder %s27, 1
      %p276 = por %p274, %p275
      %p277 = scmp.ne.s32.totalorder %s268, %s269
      %p278 = scmp.eq.s32.totalorder %s27, 0
      %p279 = por %p277, %p278
      %p280 = scmp.ne.s32.totalorder %s268, %s269
      %p281 = scmp.eq.s32.totalorder %s28, 1
      %p282 = por %p280, %p281
      %p284 = scmp.ne.s32.totalorder %s269, %s283
      %p285 = scmp.eq.s32.totalorder %s28, 0
      %p286 = por %p284, %p285
      %s288 = sadd.s32 %s287, 1
      %p291 = scmp.eq.s32.totalorder %s22, 1
      %p292 = scmp.ne.s32.totalorder %s287, %s289
      %p293 = scmp.eq.s32.totalorder %s22, 0
      %p294 = por %p292, %p293
      %p295 = scmp.ne.s32.totalorder %s287, %s289
      %p296 = scmp.eq.s32.totalorder %s27, 1
      %p297 = por %p295, %p296
      %p298 = scmp.ne.s32.totalorder %s289, %s290
      %p299 = scmp.eq.s32.totalorder %s27, 0
      %p300 = por %p298, %p299
      %p301 = scmp.ne.s32.totalorder %s289, %s290
      %p302 = scmp.eq.s32.totalorder %s28, 1
      %p303 = por %p301, %p302
      %p305 = scmp.ne.s32.totalorder %s290, %s304
      %p306 = scmp.eq.s32.totalorder %s28, 0
      %p307 = por %p305, %p306
      %s308 = ssub.s32 %s22, %s29
      %p309 = scmp.eq.s32.totalorder %s308, 0
      %s311 = sadd.s32 %s310, 1
      %s312 = scalar_select %p309, %s310, %s311
      %p315 = pneg %p309
      %p316 = scmp.eq.s32.totalorder %s22, 1
      %p317 = por %p315, %p316
      %p318 = scmp.ne.s32.totalorder %s310, %s313
      %p319 = scmp.eq.s32.totalorder %s22, 0
      %p320 = por %p318, %p319
      %p321 = scmp.ne.s32.totalorder %s310, %s313
      %p322 = scmp.eq.s32.totalorder %s27, 1
      %p323 = por %p321, %p322
      %p324 = scmp.ne.s32.totalorder %s313, %s314
      %p325 = scmp.eq.s32.totalorder %s27, 0
      %p326 = por %p324, %p325
      %p327 = scmp.ne.s32.totalorder %s313, %s314
      %p328 = scmp.eq.s32.totalorder %s28, 1
      %p329 = por %p327, %p328
      %p331 = scmp.ne.s32.totalorder %s314, %s330
      %p332 = scmp.eq.s32.totalorder %s28, 0
      %p333 = por %p331, %p332
      %p334 = scmp.le.s32.totalorder 1, %s22
      %p335 = scmp.lt.s32.totalorder %s22, 3
      %p336 = pnand %p334, %p335
      %p337 = pneg %p336
      // Predicated region
      $region9: #{small_cnn_forward.1} parent=5 // pred_check
        _
      $region10: #{small_cnn_forward.1} parent=5 // pred_check_branch
        %339 = sbr.rel (%p336) target = $region12
      $region11: #{small_cnn_forward.1} parent=5 // pred_region
        %s340 = ssub.s32 %s22, 1
        // Predicated region
        $region13: #{small_cnn_forward.1} parent=11 // pred_check
          %p341 = pneg %p69
        $region14: #{small_cnn_forward.1} parent=11 // pred_check_branch
          %343 = sbr.rel (%p341) target = $region16
        $region15: #{small_cnn_forward.1} parent=11 // pred_region
          _
        $region16: #{small_cnn_forward.1} parent=11 // pred_fallthru
          _
        // Predicated region
        $region17: #{small_cnn_forward.1} parent=11 // pred_check
          %p344 = pneg %p90
        $region18: #{small_cnn_forward.1} parent=11 // pred_check_branch
          %346 = sbr.rel (%p344) target = $region20
        $region19: #{small_cnn_forward.1} parent=11 // pred_region
          _
        $region20: #{small_cnn_forward.1} parent=11 // pred_fallthru
          _
        // Predicated region
        $region21: #{small_cnn_forward.1} parent=11 // pred_check
          %p347 = pneg %p111
        $region22: #{small_cnn_forward.1} parent=11 // pred_check_branch
          %349 = sbr.rel (%p347) target = $region24
        $region23: #{small_cnn_forward.1} parent=11 // pred_region
          _
        $region24: #{small_cnn_forward.1} parent=11 // pred_fallthru
          _
        // Predicated region
        $region25: #{small_cnn_forward.1} parent=11 // pred_check
          %p350 = pneg %p132
        $region26: #{small_cnn_forward.1} parent=11 // pred_check_branch
          %352 = sbr.rel (%p350) target = $region28
        $region27: #{small_cnn_forward.1} parent=11 // pred_region
          _
        $region28: #{small_cnn_forward.1} parent=11 // pred_fallthru
          _
        // Predicated region
        $region29: #{small_cnn_forward.1} parent=11 // pred_check
          %p353 = pneg %p153
        $region30: #{small_cnn_forward.1} parent=11 // pred_check_branch
          %355 = sbr.rel (%p353) target = $region32
        $region31: #{small_cnn_forward.1} parent=11 // pred_region
          _
        $region32: #{small_cnn_forward.1} parent=11 // pred_fallthru
          _
        // Predicated region
        $region33: #{small_cnn_forward.1} parent=11 // pred_check
          %p356 = pneg %p174
        $region34: #{small_cnn_forward.1} parent=11 // pred_check_branch
          %358 = sbr.rel (%p356) target = $region36
        $region35: #{small_cnn_forward.1} parent=11 // pred_region
          _
        $region36: #{small_cnn_forward.1} parent=11 // pred_fallthru
          _
        // Predicated region
        $region37: #{small_cnn_forward.1} parent=11 // pred_check
          %p359 = pneg %p195
        $region38: #{small_cnn_forward.1} parent=11 // pred_check_branch
          %361 = sbr.rel (%p359) target = $region40
        $region39: #{small_cnn_forward.1} parent=11 // pred_region
          _
        $region40: #{small_cnn_forward.1} parent=11 // pred_fallthru
          _
        // Predicated region
        $region41: #{small_cnn_forward.1} parent=11 // pred_check
          %p362 = pneg %p216
        $region42: #{small_cnn_forward.1} parent=11 // pred_check_branch
          %364 = sbr.rel (%p362) target = $region44
        $region43: #{small_cnn_forward.1} parent=11 // pred_region
          _
        $region44: #{small_cnn_forward.1} parent=11 // pred_fallthru
          _
        // Predicated region
        $region45: #{small_cnn_forward.1} parent=11 // pred_check
          %p365 = pneg %p237
        $region46: #{small_cnn_forward.1} parent=11 // pred_check_branch
          %367 = sbr.rel (%p365) target = $region48
        $region47: #{small_cnn_forward.1} parent=11 // pred_region
          _
        $region48: #{small_cnn_forward.1} parent=11 // pred_fallthru
          _
        // Predicated region
        $region49: #{small_cnn_forward.1} parent=11 // pred_check
          %p368 = pneg %p258
        $region50: #{small_cnn_forward.1} parent=11 // pred_check_branch
          %370 = sbr.rel (%p368) target = $region52
        $region51: #{small_cnn_forward.1} parent=11 // pred_region
          _
        $region52: #{small_cnn_forward.1} parent=11 // pred_fallthru
          _
        // Predicated region
        $region53: #{small_cnn_forward.1} parent=11 // pred_check
          %p371 = pneg %p279
        $region54: #{small_cnn_forward.1} parent=11 // pred_check_branch
          %373 = sbr.rel (%p371) target = $region56
        $region55: #{small_cnn_forward.1} parent=11 // pred_region
          _
        $region56: #{small_cnn_forward.1} parent=11 // pred_fallthru
          _
        // Predicated region
        $region57: #{small_cnn_forward.1} parent=11 // pred_check
          %p374 = pneg %p300
        $region58: #{small_cnn_forward.1} parent=11 // pred_check_branch
          %376 = sbr.rel (%p374) target = $region60
        $region59: #{small_cnn_forward.1} parent=11 // pred_region
          _
        $region60: #{small_cnn_forward.1} parent=11 // pred_fallthru
          _
      $region12: #{small_cnn_forward.1} parent=5 // pred_fallthru
        _
      %p377 = scmp.lt.s32.totalorder %s22, 2
      // Predicated region
      $region61: #{small_cnn_forward.1} parent=5 // pred_check
        %p378 = pneg %p377
      $region62: #{small_cnn_forward.1} parent=5 // pred_check_branch
        %380 = sbr.rel (%p378) target = $region64
      $region63: #{small_cnn_forward.1} parent=5 // pred_region
        // Predicated region
        $region65: #{small_cnn_forward.1} parent=63 // pred_check
          %p381 = pneg %p42
        $region66: #{small_cnn_forward.1} parent=63 // pred_check_branch
          %383 = sbr.rel (%p381) target = $region68
        $region67: #{small_cnn_forward.1} parent=63 // pred_region
          %s384 = smul.u32 32, %s22
          %p385 = scmp.lt.s32.totalorder %s384, 63
          %s386 = scalar_select %p385, %s384, 63
          %s387 = smul.addr %s386, 8
          %s388 = scalar_lea.vmem %s0, %s387
          %s389 = smul.u32 32, %s22
        $region68: #{small_cnn_forward.1} parent=63 // pred_fallthru
          _
      $region64: #{small_cnn_forward.1} parent=5 // pred_fallthru
        _
      %p390 = scmp.le.s32.totalorder 1, %s22
      %p391 = scmp.lt.s32.totalorder %s22, 3
      %p392 = pnand %p390, %p391
      %p393 = pneg %p392
      // Predicated region
      $region69: #{small_cnn_forward.1} parent=5 // pred_check
        _
      $region70: #{small_cnn_forward.1} parent=5 // pred_check_branch
        %395 = sbr.rel (%p392) target = $region72
      $region71: #{small_cnn_forward.1} parent=5 // pred_region
        %s396 = ssub.s32 %s22, 1
        %s397 = smul.u32 32, %s27
        %p398 = scmp.lt.s32.totalorder %s397, 63
        %s399 = scalar_select %p398, %s397, 63
        %s400 = smul.addr %s399, 8
        %s401 = scalar_lea.vmem %s0, %s400
        %p402 = pneg %p48
        %p403 = pneg %p45
        %p404 = pneg %p69
        %p405 = pneg %p66
        %p406 = pneg %p90
        %p407 = pneg %p87
        %p408 = pneg %p111
        %p409 = pneg %p108
        %p410 = pneg %p132
        %p411 = pneg %p129
        %p412 = pneg %p153
        %p413 = pneg %p150
        %p414 = pneg %p174
        %p415 = pneg %p171
        %p416 = pneg %p195
        %p417 = pneg %p192
        %p418 = pneg %p216
        %p419 = pneg %p213
        %p420 = pneg %p237
        %p421 = pneg %p234
        %p422 = pneg %p258
        %p423 = pneg %p255
        %p424 = pneg %p279
        %p425 = pneg %p276
        %p426 = pneg %p300
        %p427 = pneg %p297
        %p428 = pneg %p326
        %p429 = pneg %p323
        %s430 = sand.u32 %s313, 1
        %s431 = scalar_lea.sflag [#allocation8], %s430
        %s432 = sand.u32 %s313, 1
        %s433 = scalar_lea.vmem [#allocation7], %s432
        %s434 = smul.u32 32, %s27
        %p435 = scmp.lt.s32.totalorder %s434, 63
        %s436 = scalar_select %p435, %s434, 63
        %s437 = smul.addr %s436, 8
        %s438 = scalar_lea.vmem %s0, %s437
        %s439 = smul.u32 32, %s27
        %v441 = vld [vmem:[%s438] sm:$0xff]
        %v442 = vld [vmem:[%s438 + $0x8] sm:$0xff]
        %v443 = vld [vmem:[%s438 + $0x10] sm:$0xff]
        %v444 = vld [vmem:[%s438 + $0x18] sm:$0xff]
        %v445 = vld [vmem:[%s438 + $0x20] sm:$0xff]
        %v446 = vld [vmem:[%s438 + $0x28] sm:$0xff]
        %v447 = vld [vmem:[%s438 + $0x30] sm:$0xff]
        %v448 = vld [vmem:[%s438 + $0x38] sm:$0xff]
        %v449 = vld [vmem:[%s438 + $0x40] sm:$0xff]
        %v450 = vld [vmem:[%s438 + $0x48] sm:$0xff]
        %v451 = vld [vmem:[%s438 + $0x50] sm:$0xff]
        %v452 = vld [vmem:[%s438 + $0x58] sm:$0xff]
        %v453 = vld [vmem:[%s438 + $0x60] sm:$0xff]
        %v454 = vld [vmem:[%s438 + $0x68] sm:$0xff]
        %v455 = vld [vmem:[%s438 + $0x70] sm:$0xff]
        %v456 = vld [vmem:[%s438 + $0x78] sm:$0xff]
        %v457 = vld [vmem:[%s438 + $0x80] sm:$0xff]
        %v458 = vld [vmem:[%s438 + $0x88] sm:$0xff]
        %v459 = vld [vmem:[%s438 + $0x90] sm:$0xff]
        %v460 = vld [vmem:[%s438 + $0x98] sm:$0xff]
        %v461 = vld [vmem:[%s438 + $0xa0] sm:$0xff]
        %v462 = vld [vmem:[%s438 + $0xa8] sm:$0xff]
        %v463 = vld [vmem:[%s438 + $0xb0] sm:$0xff]
        %v464 = vld [vmem:[%s438 + $0xb8] sm:$0xff]
        %v465 = vld [vmem:[%s438 + $0xc0] sm:$0xff]
        %v466 = vld [vmem:[%s438 + $0xc8] sm:$0xff]
        %v467 = vld [vmem:[%s438 + $0xd0] sm:$0xff]
        %v468 = vld [vmem:[%s438 + $0xd8] sm:$0xff]
        %v469 = vld [vmem:[%s438 + $0xe0] sm:$0xff]
        %v470 = vld [vmem:[%s438 + $0xe8] sm:$0xff]
        %v471 = vld [vmem:[%s438 + $0xf0] sm:$0xff]
        %v472 = vld [vmem:[%s438 + $0xf8] sm:$0xff]
        %v473 = vld [vmem:[%s1] sm:$0xff]
        %v474 = vld [vmem:[%s1 + $0x8] sm:$0x1]
        %v475 = vld [vmem:[%s2] sm:$0x1]
        %v477 = vperm.slane %v475, 0
        %vm479 = vcmask 72704
        %v481 = vsel %vm479, %v441, 0
        %v484 = vsel %vm479, %v442, 0
        %v487 = vsel %vm479, %v443, 0
        %v490 = vsel %vm479, %v444, 0
        %v493 = vsel %vm479, %v445, 0
        %v496 = vsel %vm479, %v446, 0
        %v499 = vsel %vm479, %v447, 0
        %v502 = vsel %vm479, %v448, 0
        %v505 = vsel %vm479, %v449, 0
        %v508 = vsel %vm479, %v450, 0
        %v511 = vsel %vm479, %v451, 0
        %v514 = vsel %vm479, %v452, 0
        %v517 = vsel %vm479, %v453, 0
        %v520 = vsel %vm479, %v454, 0
        %v523 = vsel %vm479, %v455, 0
        %v526 = vsel %vm479, %v456, 0
        %v529 = vsel %vm479, %v457, 0
        %v532 = vsel %vm479, %v458, 0
        %v535 = vsel %vm479, %v459, 0
        %v538 = vsel %vm479, %v460, 0
        %v541 = vsel %vm479, %v461, 0
        %v544 = vsel %vm479, %v462, 0
        %v547 = vsel %vm479, %v463, 0
        %v550 = vsel %vm479, %v464, 0
        %v553 = vsel %vm479, %v465, 0
        %v556 = vsel %vm479, %v466, 0
        %v559 = vsel %vm479, %v467, 0
        %v562 = vsel %vm479, %v468, 0
        %v565 = vsel %vm479, %v469, 0
        %v568 = vsel %vm479, %v470, 0
        %v571 = vsel %vm479, %v471, 0
        %v574 = vsel %vm479, %v472, 0
        %vm576 = vcmask 1040384
        %v578 = vsel %vm576, %v474, 0
        %580 = vmatpush.msra.mxu0 0.0
        %581 = vmatpush.msra.mxu0 0.0
        %582 = vmatpush.msra.mxu0 0.0
        %583 = vmatpush.msra.mxu0 0.0
        %584 = vmatpush.msra.mxu0 0.0
        %585 = vmatpush.msra.mxu0 0.0
        %586 = vmatpush.msra.mxu0 0.0
        %587 = vmatpush.msra.mxu0 0.0
        %588 = vmatpush.msra.mxu0 0.0
        %589 = vmatpush.msra.mxu0 0.0
        %590 = vmatpush.msra.mxu0 0.0
        %591 = vmatpush.msra.mxu0 0.0
        %592 = vmatpush.msra.mxu0 0.0
        %593 = vmatpush.msra.mxu0 0.0
        %594 = vmatpush.msra.mxu0 %v578
        %595 = vmatpush.msra.mxu0 %v473
        %596 = vmatmul.f32.gmra.mxu0 %v481
        %v597 = vpop.f32.mrf.mxu0
        %v598 = vadd.f32 %v477, %v597
        %599 = vmatmul.f32.gmra.mxu0 %v484
        %v600 = vpop.f32.mrf.mxu0
        %v601 = vadd.f32 %v477, %v600
        %602 = vmatmul.f32.gmra.mxu0 %v487
        %v603 = vpop.f32.mrf.mxu0
        %v604 = vadd.f32 %v477, %v603
        %605 = vmatmul.f32.gmra.mxu0 %v490
        %v606 = vpop.f32.mrf.mxu0
        %v607 = vadd.f32 %v477, %v606
        %608 = vmatmul.f32.gmra.mxu0 %v493
        %v609 = vpop.f32.mrf.mxu0
        %v610 = vadd.f32 %v477, %v609
        %611 = vmatmul.f32.gmra.mxu0 %v496
        %v612 = vpop.f32.mrf.mxu0
        %v613 = vadd.f32 %v477, %v612
        %614 = vmatmul.f32.gmra.mxu0 %v499
        %v615 = vpop.f32.mrf.mxu0
        %v616 = vadd.f32 %v477, %v615
        %617 = vmatmul.f32.gmra.mxu0 %v502
        %v618 = vpop.f32.mrf.mxu0
        %v619 = vadd.f32 %v477, %v618
        %620 = vmatmul.f32.gmra.mxu0 %v505
        %v621 = vpop.f32.mrf.mxu0
        %v622 = vadd.f32 %v477, %v621
        %623 = vmatmul.f32.gmra.mxu0 %v508
        %v624 = vpop.f32.mrf.mxu0
        %v625 = vadd.f32 %v477, %v624
        %626 = vmatmul.f32.gmra.mxu0 %v511
        %v627 = vpop.f32.mrf.mxu0
        %v628 = vadd.f32 %v477, %v627
        %629 = vmatmul.f32.gmra.mxu0 %v514
        %v630 = vpop.f32.mrf.mxu0
        %v631 = vadd.f32 %v477, %v630
        %632 = vmatmul.f32.gmra.mxu0 %v517
        %v633 = vpop.f32.mrf.mxu0
        %v634 = vadd.f32 %v477, %v633
        %635 = vmatmul.f32.gmra.mxu0 %v520
        %v636 = vpop.f32.mrf.mxu0
        %v637 = vadd.f32 %v477, %v636
        %638 = vmatmul.f32.gmra.mxu0 %v523
        %v639 = vpop.f32.mrf.mxu0
        %v640 = vadd.f32 %v477, %v639
        %641 = vmatmul.f32.gmra.mxu0 %v526
        %v642 = vpop.f32.mrf.mxu0
        %v643 = vadd.f32 %v477, %v642
        %644 = vmatmul.f32.gmra.mxu0 %v529
        %v645 = vpop.f32.mrf.mxu0
        %v646 = vadd.f32 %v477, %v645
        %647 = vmatmul.f32.gmra.mxu0 %v532
        %v648 = vpop.f32.mrf.mxu0
        %v649 = vadd.f32 %v477, %v648
        %650 = vmatmul.f32.gmra.mxu0 %v535
        %v651 = vpop.f32.mrf.mxu0
        %v652 = vadd.f32 %v477, %v651
        %653 = vmatmul.f32.gmra.mxu0 %v538
        %v654 = vpop.f32.mrf.mxu0
        %v655 = vadd.f32 %v477, %v654
        %656 = vmatmul.f32.gmra.mxu0 %v541
        %v657 = vpop.f32.mrf.mxu0
        %v658 = vadd.f32 %v477, %v657
        %659 = vmatmul.f32.gmra.mxu0 %v544
        %v660 = vpop.f32.mrf.mxu0
        %v661 = vadd.f32 %v477, %v660
        %662 = vmatmul.f32.gmra.mxu0 %v547
        %v663 = vpop.f32.mrf.mxu0
        %v664 = vadd.f32 %v477, %v663
        %665 = vmatmul.f32.gmra.mxu0 %v550
        %v666 = vpop.f32.mrf.mxu0
        %v667 = vadd.f32 %v477, %v666
        %668 = vmatmul.f32.gmra.mxu0 %v553
        %v669 = vpop.f32.mrf.mxu0
        %v670 = vadd.f32 %v477, %v669
        %671 = vmatmul.f32.gmra.mxu0 %v556
        %v672 = vpop.f32.mrf.mxu0
        %v673 = vadd.f32 %v477, %v672
        %674 = vmatmul.f32.gmra.mxu0 %v559
        %v675 = vpop.f32.mrf.mxu0
        %v676 = vadd.f32 %v477, %v675
        %677 = vmatmul.f32.gmra.mxu0 %v562
        %v678 = vpop.f32.mrf.mxu0
        %v679 = vadd.f32 %v477, %v678
        %680 = vmatmul.f32.gmra.mxu0 %v565
        %v681 = vpop.f32.mrf.mxu0
        %v682 = vadd.f32 %v477, %v681
        %683 = vmatmul.f32.gmra.mxu0 %v568
        %v684 = vpop.f32.mrf.mxu0
        %v685 = vadd.f32 %v477, %v684
        %686 = vmatmul.f32.gmra.mxu0 %v571
        %v687 = vpop.f32.mrf.mxu0
        %v688 = vadd.f32 %v477, %v687
        %689 = vmatmul.f32.gmra.mxu0 %v574
        %v690 = vpop.f32.mrf.mxu0
        %v691 = vadd.f32 %v477, %v690
        %692 = vdwg.mxu0
        %v693 = vmax.f32 %v598, 0.0
        %v694 = vmax.f32 %v601, 0.0
        %v695 = vmax.f32 %v604, 0.0
        %v696 = vmax.f32 %v607, 0.0
        %v697 = vmax.f32 %v610, 0.0
        %v698 = vmax.f32 %v613, 0.0
        %v699 = vmax.f32 %v616, 0.0
        %v700 = vmax.f32 %v619, 0.0
        %v701 = vmax.f32 %v622, 0.0
        %v702 = vmax.f32 %v625, 0.0
        %v703 = vmax.f32 %v628, 0.0
        %v704 = vmax.f32 %v631, 0.0
        %v705 = vmax.f32 %v634, 0.0
        %v706 = vmax.f32 %v637, 0.0
        %v707 = vmax.f32 %v640, 0.0
        %v708 = vmax.f32 %v643, 0.0
        %v709 = vmax.f32 %v646, 0.0
        %v710 = vmax.f32 %v649, 0.0
        %v711 = vmax.f32 %v652, 0.0
        %v712 = vmax.f32 %v655, 0.0
        %v713 = vmax.f32 %v658, 0.0
        %v714 = vmax.f32 %v661, 0.0
        %v715 = vmax.f32 %v664, 0.0
        %v716 = vmax.f32 %v667, 0.0
        %v717 = vmax.f32 %v670, 0.0
        %v718 = vmax.f32 %v673, 0.0
        %v719 = vmax.f32 %v676, 0.0
        %v720 = vmax.f32 %v679, 0.0
        %v721 = vmax.f32 %v682, 0.0
        %v722 = vmax.f32 %v685, 0.0
        %v723 = vmax.f32 %v688, 0.0
        %v724 = vmax.f32 %v691, 0.0
        %v725 = vlaneseq
        %v726 = vshrl.u32 %v725, 7
        %v727 = vadd.s32 %v726, 8
        %v728 = vadd.s32 %v726, 16
        %v729 = vadd.s32 %v726, 24
        %v730 = vadd.s32 %v726, 32
        %v731 = vadd.s32 %v726, 40
        %v732 = vadd.s32 %v726, 48
        %v733 = vadd.s32 %v726, 56
        %v734 = vadd.s32 %v726, 64
        %v735 = vadd.s32 %v726, 72
        %v736 = vadd.s32 %v726, 80
        %v737 = vadd.s32 %v726, 88
        %v738 = vadd.s32 %v726, 96
        %v739 = vadd.s32 %v726, 104
        %v740 = vadd.s32 %v726, 112
        %v741 = vadd.s32 %v726, 120
        %v742 = vadd.s32 %v726, 128
        %v743 = vadd.s32 %v726, 136
        %v744 = vadd.s32 %v726, 144
        %v745 = vadd.s32 %v726, 152
        %v746 = vadd.s32 %v726, 160
        %v747 = vadd.s32 %v726, 168
        %v748 = vadd.s32 %v726, 176
        %v749 = vadd.s32 %v726, 184
        %v750 = vadd.s32 %v726, 192
        %v751 = vadd.s32 %v726, 200
        %v752 = vadd.s32 %v726, 208
        %v753 = vadd.s32 %v726, 216
        %v754 = vadd.s32 %v726, 224
        %v755 = vadd.s32 %v726, 232
        %v756 = vadd.s32 %v726, 240
        %v757 = vadd.s32 %v726, 248
        %vm758 = vcmp.lt.s32.totalorder %v726, 0
        %v759 = vsub.s32 0, %v726
        %v760 = vsel %vm758, %v759, %v726
        %v761 = vshrl.u32 %v760, 4
        %v762 = vand.u32 %v760, 15
        %v763 = vsub.s32 0, %v762
        %v764 = vsel %vm758, %v763, %v762
        %vm765 = vcmp.lt.s32.totalorder %v727, 0
        %v766 = vsub.s32 0, %v727
        %v767 = vsel %vm765, %v766, %v727
        %v768 = vshrl.u32 %v767, 4
        %v769 = vand.u32 %v767, 15
        %v770 = vsub.s32 0, %v769
        %v771 = vsel %vm765, %v770, %v769
        %vm772 = vcmp.lt.s32.totalorder %v728, 0
        %v773 = vsub.s32 0, %v728
        %v774 = vsel %vm772, %v773, %v728
        %v775 = vshrl.u32 %v774, 4
        %v776 = vand.u32 %v774, 15
        %v777 = vsub.s32 0, %v776
        %v778 = vsel %vm772, %v777, %v776
        %vm779 = vcmp.lt.s32.totalorder %v729, 0
        %v780 = vsub.s32 0, %v729
        %v781 = vsel %vm779, %v780, %v729
        %v782 = vshrl.u32 %v781, 4
        %v783 = vand.u32 %v781, 15
        %v784 = vsub.s32 0, %v783
        %v785 = vsel %vm779, %v784, %v783
        %vm786 = vcmp.lt.s32.totalorder %v730, 0
        %v787 = vsub.s32 0, %v730
        %v788 = vsel %vm786, %v787, %v730
        %v789 = vshrl.u32 %v788, 4
        %v790 = vand.u32 %v788, 15
        %v791 = vsub.s32 0, %v790
        %v792 = vsel %vm786, %v791, %v790
        %vm793 = vcmp.lt.s32.totalorder %v731, 0
        %v794 = vsub.s32 0, %v731
        %v795 = vsel %vm793, %v794, %v731
        %v796 = vshrl.u32 %v795, 4
        %v797 = vand.u32 %v795, 15
        %v798 = vsub.s32 0, %v797
        %v799 = vsel %vm793, %v798, %v797
        %vm800 = vcmp.lt.s32.totalorder %v732, 0
        %v801 = vsub.s32 0, %v732
        %v802 = vsel %vm800, %v801, %v732
        %v803 = vshrl.u32 %v802, 4
        %v804 = vand.u32 %v802, 15
        %v805 = vsub.s32 0, %v804
        %v806 = vsel %vm800, %v805, %v804
        %vm807 = vcmp.lt.s32.totalorder %v733, 0
        %v808 = vsub.s32 0, %v733
        %v809 = vsel %vm807, %v808, %v733
        %v810 = vshrl.u32 %v809, 4
        %v811 = vand.u32 %v809, 15
        %v812 = vsub.s32 0, %v811
        %v813 = vsel %vm807, %v812, %v811
        %vm814 = vcmp.lt.s32.totalorder %v734, 0
        %v815 = vsub.s32 0, %v734
        %v816 = vsel %vm814, %v815, %v734
        %v817 = vshrl.u32 %v816, 4
        %v818 = vand.u32 %v816, 15
        %v819 = vsub.s32 0, %v818
        %v820 = vsel %vm814, %v819, %v818
        %vm821 = vcmp.lt.s32.totalorder %v735, 0
        %v822 = vsub.s32 0, %v735
        %v823 = vsel %vm821, %v822, %v735
        %v824 = vshrl.u32 %v823, 4
        %v825 = vand.u32 %v823, 15
        %v826 = vsub.s32 0, %v825
        %v827 = vsel %vm821, %v826, %v825
        %vm828 = vcmp.lt.s32.totalorder %v736, 0
        %v829 = vsub.s32 0, %v736
        %v830 = vsel %vm828, %v829, %v736
        %v831 = vshrl.u32 %v830, 4
        %v832 = vand.u32 %v830, 15
        %v833 = vsub.s32 0, %v832
        %v834 = vsel %vm828, %v833, %v832
        %vm835 = vcmp.lt.s32.totalorder %v737, 0
        %v836 = vsub.s32 0, %v737
        %v837 = vsel %vm835, %v836, %v737
        %v838 = vshrl.u32 %v837, 4
        %v839 = vand.u32 %v837, 15
        %v840 = vsub.s32 0, %v839
        %v841 = vsel %vm835, %v840, %v839
        %vm842 = vcmp.lt.s32.totalorder %v738, 0
        %v843 = vsub.s32 0, %v738
        %v844 = vsel %vm842, %v843, %v738
        %v845 = vshrl.u32 %v844, 4
        %v846 = vand.u32 %v844, 15
        %v847 = vsub.s32 0, %v846
        %v848 = vsel %vm842, %v847, %v846
        %vm849 = vcmp.lt.s32.totalorder %v739, 0
        %v850 = vsub.s32 0, %v739
        %v851 = vsel %vm849, %v850, %v739
        %v852 = vshrl.u32 %v851, 4
        %v853 = vand.u32 %v851, 15
        %v854 = vsub.s32 0, %v853
        %v855 = vsel %vm849, %v854, %v853
        %vm856 = vcmp.lt.s32.totalorder %v740, 0
        %v857 = vsub.s32 0, %v740
        %v858 = vsel %vm856, %v857, %v740
        %v859 = vshrl.u32 %v858, 4
        %v860 = vand.u32 %v858, 15
        %v861 = vsub.s32 0, %v860
        %v862 = vsel %vm856, %v861, %v860
        %vm863 = vcmp.lt.s32.totalorder %v741, 0
        %v864 = vsub.s32 0, %v741
        %v865 = vsel %vm863, %v864, %v741
        %v866 = vshrl.u32 %v865, 4
        %v867 = vand.u32 %v865, 15
        %v868 = vsub.s32 0, %v867
        %v869 = vsel %vm863, %v868, %v867
        %vm870 = vcmp.lt.s32.totalorder %v742, 0
        %v871 = vsub.s32 0, %v742
        %v872 = vsel %vm870, %v871, %v742
        %v873 = vshrl.u32 %v872, 4
        %v874 = vand.u32 %v872, 15
        %v875 = vsub.s32 0, %v874
        %v876 = vsel %vm870, %v875, %v874
        %vm877 = vcmp.lt.s32.totalorder %v743, 0
        %v878 = vsub.s32 0, %v743
        %v879 = vsel %vm877, %v878, %v743
        %v880 = vshrl.u32 %v879, 4
        %v881 = vand.u32 %v879, 15
        %v882 = vsub.s32 0, %v881
        %v883 = vsel %vm877, %v882, %v881
        %vm884 = vcmp.lt.s32.totalorder %v744, 0
        %v885 = vsub.s32 0, %v744
        %v886 = vsel %vm884, %v885, %v744
        %v887 = vshrl.u32 %v886, 4
        %v888 = vand.u32 %v886, 15
        %v889 = vsub.s32 0, %v888
        %v890 = vsel %vm884, %v889, %v888
        %vm891 = vcmp.lt.s32.totalorder %v745, 0
        %v892 = vsub.s32 0, %v745
        %v893 = vsel %vm891, %v892, %v745
        %v894 = vshrl.u32 %v893, 4
        %v895 = vand.u32 %v893, 15
        %v896 = vsub.s32 0, %v895
        %v897 = vsel %vm891, %v896, %v895
        %vm898 = vcmp.lt.s32.totalorder %v746, 0
        %v899 = vsub.s32 0, %v746
        %v900 = vsel %vm898, %v899, %v746
        %v901 = vshrl.u32 %v900, 4
        %v902 = vand.u32 %v900, 15
        %v903 = vsub.s32 0, %v902
        %v904 = vsel %vm898, %v903, %v902
        %vm905 = vcmp.lt.s32.totalorder %v747, 0
        %v906 = vsub.s32 0, %v747
        %v907 = vsel %vm905, %v906, %v747
        %v908 = vshrl.u32 %v907, 4
        %v909 = vand.u32 %v907, 15
        %v910 = vsub.s32 0, %v909
        %v911 = vsel %vm905, %v910, %v909
        %vm912 = vcmp.lt.s32.totalorder %v748, 0
        %v913 = vsub.s32 0, %v748
        %v914 = vsel %vm912, %v913, %v748
        %v915 = vshrl.u32 %v914, 4
        %v916 = vand.u32 %v914, 15
        %v917 = vsub.s32 0, %v916
        %v918 = vsel %vm912, %v917, %v916
        %vm919 = vcmp.lt.s32.totalorder %v749, 0
        %v920 = vsub.s32 0, %v749
        %v921 = vsel %vm919, %v920, %v749
        %v922 = vshrl.u32 %v921, 4
        %v923 = vand.u32 %v921, 15
        %v924 = vsub.s32 0, %v923
        %v925 = vsel %vm919, %v924, %v923
        %vm926 = vcmp.lt.s32.totalorder %v750, 0
        %v927 = vsub.s32 0, %v750
        %v928 = vsel %vm926, %v927, %v750
        %v929 = vshrl.u32 %v928, 4
        %v930 = vand.u32 %v928, 15
        %v931 = vsub.s32 0, %v930
        %v932 = vsel %vm926, %v931, %v930
        %vm933 = vcmp.lt.s32.totalorder %v751, 0
        %v934 = vsub.s32 0, %v751
        %v935 = vsel %vm933, %v934, %v751
        %v936 = vshrl.u32 %v935, 4
        %v937 = vand.u32 %v935, 15
        %v938 = vsub.s32 0, %v937
        %v939 = vsel %vm933, %v938, %v937
        %vm940 = vcmp.lt.s32.totalorder %v752, 0
        %v941 = vsub.s32 0, %v752
        %v942 = vsel %vm940, %v941, %v752
        %v943 = vshrl.u32 %v942, 4
        %v944 = vand.u32 %v942, 15
        %v945 = vsub.s32 0, %v944
        %v946 = vsel %vm940, %v945, %v944
        %vm947 = vcmp.lt.s32.totalorder %v753, 0
        %v948 = vsub.s32 0, %v753
        %v949 = vsel %vm947, %v948, %v753
        %v950 = vshrl.u32 %v949, 4
        %v951 = vand.u32 %v949, 15
        %v952 = vsub.s32 0, %v951
        %v953 = vsel %vm947, %v952, %v951
        %vm954 = vcmp.lt.s32.totalorder %v754, 0
        %v955 = vsub.s32 0, %v754
        %v956 = vsel %vm954, %v955, %v754
        %v957 = vshrl.u32 %v956, 4
        %v958 = vand.u32 %v956, 15
        %v959 = vsub.s32 0, %v958
        %v960 = vsel %vm954, %v959, %v958
        %vm961 = vcmp.lt.s32.totalorder %v755, 0
        %v962 = vsub.s32 0, %v755
        %v963 = vsel %vm961, %v962, %v755
        %v964 = vshrl.u32 %v963, 4
        %v965 = vand.u32 %v963, 15
        %v966 = vsub.s32 0, %v965
        %v967 = vsel %vm961, %v966, %v965
        %vm968 = vcmp.lt.s32.totalorder %v756, 0
        %v969 = vsub.s32 0, %v756
        %v970 = vsel %vm968, %v969, %v756
        %v971 = vshrl.u32 %v970, 4
        %v972 = vand.u32 %v970, 15
        %v973 = vsub.s32 0, %v972
        %v974 = vsel %vm968, %v973, %v972
        %vm975 = vcmp.lt.s32.totalorder %v757, 0
        %v976 = vsub.s32 0, %v757
        %v977 = vsel %vm975, %v976, %v757
        %v978 = vshrl.u32 %v977, 4
        %v979 = vand.u32 %v977, 15
        %v980 = vsub.s32 0, %v979
        %v981 = vsel %vm975, %v980, %v979
        %vm982 = vcmp.ne.s32.totalorder %v764, 0
        %vm983 = vcmp.ne.s32.totalorder %v771, 0
        %vm984 = vcmp.ne.s32.totalorder %v778, 0
        %vm985 = vcmp.ne.s32.totalorder %v785, 0
        %vm986 = vcmp.ne.s32.totalorder %v792, 0
        %vm987 = vcmp.ne.s32.totalorder %v799, 0
        %vm988 = vcmp.ne.s32.totalorder %v806, 0
        %vm989 = vcmp.ne.s32.totalorder %v813, 0
        %vm990 = vcmp.ne.s32.totalorder %v820, 0
        %vm991 = vcmp.ne.s32.totalorder %v827, 0
        %vm992 = vcmp.ne.s32.totalorder %v834, 0
        %vm993 = vcmp.ne.s32.totalorder %v841, 0
        %vm994 = vcmp.ne.s32.totalorder %v848, 0
        %vm995 = vcmp.ne.s32.totalorder %v855, 0
        %vm996 = vcmp.ne.s32.totalorder %v862, 0
        %vm997 = vcmp.ne.s32.totalorder %v869, 0
        %vm998 = vcmp.ne.s32.totalorder %v876, 0
        %vm999 = vcmp.ne.s32.totalorder %v883, 0
        %vm1000 = vcmp.ne.s32.totalorder %v890, 0
        %vm1001 = vcmp.ne.s32.totalorder %v897, 0
        %vm1002 = vcmp.ne.s32.totalorder %v904, 0
        %vm1003 = vcmp.ne.s32.totalorder %v911, 0
        %vm1004 = vcmp.ne.s32.totalorder %v918, 0
        %vm1005 = vcmp.ne.s32.totalorder %v925, 0
        %vm1006 = vcmp.ne.s32.totalorder %v932, 0
        %vm1007 = vcmp.ne.s32.totalorder %v939, 0
        %vm1008 = vcmp.ne.s32.totalorder %v946, 0
        %vm1009 = vcmp.ne.s32.totalorder %v953, 0
        %vm1010 = vcmp.ne.s32.totalorder %v960, 0
        %vm1011 = vcmp.ne.s32.totalorder %v967, 0
        %vm1012 = vcmp.ne.s32.totalorder %v974, 0
        %vm1013 = vcmp.ne.s32.totalorder %v981, 0
        %vm1014 = vcmp.lt.s32.totalorder %v764, 0
        %vm1015 = vcmp.lt.s32.totalorder %v771, 0
        %vm1016 = vcmp.lt.s32.totalorder %v778, 0
        %vm1017 = vcmp.lt.s32.totalorder %v785, 0
        %vm1018 = vcmp.lt.s32.totalorder %v792, 0
        %vm1019 = vcmp.lt.s32.totalorder %v799, 0
        %vm1020 = vcmp.lt.s32.totalorder %v806, 0
        %vm1021 = vcmp.lt.s32.totalorder %v813, 0
        %vm1022 = vcmp.lt.s32.totalorder %v820, 0
        %vm1023 = vcmp.lt.s32.totalorder %v827, 0
        %vm1024 = vcmp.lt.s32.totalorder %v834, 0
        %vm1025 = vcmp.lt.s32.totalorder %v841, 0
        %vm1026 = vcmp.lt.s32.totalorder %v848, 0
        %vm1027 = vcmp.lt.s32.totalorder %v855, 0
        %vm1028 = vcmp.lt.s32.totalorder %v862, 0
        %vm1029 = vcmp.lt.s32.totalorder %v869, 0
        %vm1030 = vcmp.lt.s32.totalorder %v876, 0
        %vm1031 = vcmp.lt.s32.totalorder %v883, 0
        %vm1032 = vcmp.lt.s32.totalorder %v890, 0
        %vm1033 = vcmp.lt.s32.totalorder %v897, 0
        %vm1034 = vcmp.lt.s32.totalorder %v904, 0
        %vm1035 = vcmp.lt.s32.totalorder %v911, 0
        %vm1036 = vcmp.lt.s32.totalorder %v918, 0
        %vm1037 = vcmp.lt.s32.totalorder %v925, 0
        %vm1038 = vcmp.lt.s32.totalorder %v932, 0
        %vm1039 = vcmp.lt.s32.totalorder %v939, 0
        %vm1040 = vcmp.lt.s32.totalorder %v946, 0
        %vm1041 = vcmp.lt.s32.totalorder %v953, 0
        %vm1042 = vcmp.lt.s32.totalorder %v960, 0
        %vm1043 = vcmp.lt.s32.totalorder %v967, 0
        %vm1044 = vcmp.lt.s32.totalorder %v974, 0
        %vm1045 = vcmp.lt.s32.totalorder %v981, 0
        %vm1046 = vmand %vm1014, %vm982
        %vm1047 = vmand %vm1015, %vm983
        %vm1048 = vmand %vm1016, %vm984
        %vm1049 = vmand %vm1017, %vm985
        %vm1050 = vmand %vm1018, %vm986
        %vm1051 = vmand %vm1019, %vm987
        %vm1052 = vmand %vm1020, %vm988
        %vm1053 = vmand %vm1021, %vm989
        %vm1054 = vmand %vm1022, %vm990
        %vm1055 = vmand %vm1023, %vm991
        %vm1056 = vmand %vm1024, %vm992
        %vm1057 = vmand %vm1025, %vm993
        %vm1058 = vmand %vm1026, %vm994
        %vm1059 = vmand %vm1027, %vm995
        %vm1060 = vmand %vm1028, %vm996
        %vm1061 = vmand %vm1029, %vm997
        %vm1062 = vmand %vm1030, %vm998
        %vm1063 = vmand %vm1031, %vm999
        %vm1064 = vmand %vm1032, %vm1000
        %vm1065 = vmand %vm1033, %vm1001
        %vm1066 = vmand %vm1034, %vm1002
        %vm1067 = vmand %vm1035, %vm1003
        %vm1068 = vmand %vm1036, %vm1004
        %vm1069 = vmand %vm1037, %vm1005
        %vm1070 = vmand %vm1038, %vm1006
        %vm1071 = vmand %vm1039, %vm1007
        %vm1072 = vmand %vm1040, %vm1008
        %vm1073 = vmand %vm1041, %vm1009
        %vm1074 = vmand %vm1042, %vm1010
        %vm1075 = vmand %vm1043, %vm1011
        %vm1076 = vmand %vm1044, %vm1012
        %vm1077 = vmand %vm1045, %vm1013
        %v1078 = vadd.s32 %v764, 16
        %v1079 = vadd.s32 %v771, 16
        %v1080 = vadd.s32 %v778, 16
        %v1081 = vadd.s32 %v785, 16
        %v1082 = vadd.s32 %v792, 16
        %v1083 = vadd.s32 %v799, 16
        %v1084 = vadd.s32 %v806, 16
        %v1085 = vadd.s32 %v813, 16
        %v1086 = vadd.s32 %v820, 16
        %v1087 = vadd.s32 %v827, 16
        %v1088 = vadd.s32 %v834, 16
        %v1089 = vadd.s32 %v841, 16
        %v1090 = vadd.s32 %v848, 16
        %v1091 = vadd.s32 %v855, 16
        %v1092 = vadd.s32 %v862, 16
        %v1093 = vadd.s32 %v869, 16
        %v1094 = vadd.s32 %v876, 16
        %v1095 = vadd.s32 %v883, 16
        %v1096 = vadd.s32 %v890, 16
        %v1097 = vadd.s32 %v897, 16
        %v1098 = vadd.s32 %v904, 16
        %v1099 = vadd.s32 %v911, 16
        %v1100 = vadd.s32 %v918, 16
        %v1101 = vadd.s32 %v925, 16
        %v1102 = vadd.s32 %v932, 16
        %v1103 = vadd.s32 %v939, 16
        %v1104 = vadd.s32 %v946, 16
        %v1105 = vadd.s32 %v953, 16
        %v1106 = vadd.s32 %v960, 16
        %v1107 = vadd.s32 %v967, 16
        %v1108 = vadd.s32 %v974, 16
        %v1109 = vadd.s32 %v981, 16
        %v1110 = vsel %vm1046, %v1078, %v764
        %v1111 = vsel %vm1047, %v1079, %v771
        %v1112 = vsel %vm1048, %v1080, %v778
        %v1113 = vsel %vm1049, %v1081, %v785
        %v1114 = vsel %vm1050, %v1082, %v792
        %v1115 = vsel %vm1051, %v1083, %v799
        %v1116 = vsel %vm1052, %v1084, %v806
        %v1117 = vsel %vm1053, %v1085, %v813
        %v1118 = vsel %vm1054, %v1086, %v820
        %v1119 = vsel %vm1055, %v1087, %v827
        %v1120 = vsel %vm1056, %v1088, %v834
        %v1121 = vsel %vm1057, %v1089, %v841
        %v1122 = vsel %vm1058, %v1090, %v848
        %v1123 = vsel %vm1059, %v1091, %v855
        %v1124 = vsel %vm1060, %v1092, %v862
        %v1125 = vsel %vm1061, %v1093, %v869
        %v1126 = vsel %vm1062, %v1094, %v876
        %v1127 = vsel %vm1063, %v1095, %v883
        %v1128 = vsel %vm1064, %v1096, %v890
        %v1129 = vsel %vm1065, %v1097, %v897
        %v1130 = vsel %vm1066, %v1098, %v904
        %v1131 = vsel %vm1067, %v1099, %v911
        %v1132 = vsel %vm1068, %v1100, %v918
        %v1133 = vsel %vm1069, %v1101, %v925
        %v1134 = vsel %vm1070, %v1102, %v932
        %v1135 = vsel %vm1071, %v1103, %v939
        %v1136 = vsel %vm1072, %v1104, %v946
        %v1137 = vsel %vm1073, %v1105, %v953
        %v1138 = vsel %vm1074, %v1106, %v960
        %v1139 = vsel %vm1075, %v1107, %v967
        %v1140 = vsel %vm1076, %v1108, %v974
        %v1141 = vsel %vm1077, %v1109, %v981
        %vm1142 = vcmp.ge.s32.totalorder %v1110, 1
        %vm1143 = vcmp.ge.s32.totalorder %v1111, 1
        %vm1144 = vcmp.ge.s32.totalorder %v1112, 1
        %vm1145 = vcmp.ge.s32.totalorder %v1113, 1
        %vm1146 = vcmp.ge.s32.totalorder %v1114, 1
        %vm1147 = vcmp.ge.s32.totalorder %v1115, 1
        %vm1148 = vcmp.ge.s32.totalorder %v1116, 1
        %vm1149 = vcmp.ge.s32.totalorder %v1117, 1
        %vm1150 = vcmp.ge.s32.totalorder %v1118, 1
        %vm1151 = vcmp.ge.s32.totalorder %v1119, 1
        %vm1152 = vcmp.ge.s32.totalorder %v1120, 1
        %vm1153 = vcmp.ge.s32.totalorder %v1121, 1
        %vm1154 = vcmp.ge.s32.totalorder %v1122, 1
        %vm1155 = vcmp.ge.s32.totalorder %v1123, 1
        %vm1156 = vcmp.ge.s32.totalorder %v1124, 1
        %vm1157 = vcmp.ge.s32.totalorder %v1125, 1
        %vm1158 = vcmp.ge.s32.totalorder %v1126, 1
        %vm1159 = vcmp.ge.s32.totalorder %v1127, 1
        %vm1160 = vcmp.ge.s32.totalorder %v1128, 1
        %vm1161 = vcmp.ge.s32.totalorder %v1129, 1
        %vm1162 = vcmp.ge.s32.totalorder %v1130, 1
        %vm1163 = vcmp.ge.s32.totalorder %v1131, 1
        %vm1164 = vcmp.ge.s32.totalorder %v1132, 1
        %vm1165 = vcmp.ge.s32.totalorder %v1133, 1
        %vm1166 = vcmp.ge.s32.totalorder %v1134, 1
        %vm1167 = vcmp.ge.s32.totalorder %v1135, 1
        %vm1168 = vcmp.ge.s32.totalorder %v1136, 1
        %vm1169 = vcmp.ge.s32.totalorder %v1137, 1
        %vm1170 = vcmp.ge.s32.totalorder %v1138, 1
        %vm1171 = vcmp.ge.s32.totalorder %v1139, 1
        %vm1172 = vcmp.ge.s32.totalorder %v1140, 1
        %vm1173 = vcmp.ge.s32.totalorder %v1141, 1
        %v1174 = vrot.slane %v693, 7
        %v1175 = vrot.slane %v694, 7
        %v1176 = vrot.slane %v695, 7
        %v1177 = vrot.slane %v696, 7
        %v1178 = vrot.slane %v697, 7
        %v1179 = vrot.slane %v698, 7
        %v1180 = vrot.slane %v699, 7
        %v1181 = vrot.slane %v700, 7
        %v1182 = vrot.slane %v701, 7
        %v1183 = vrot.slane %v702, 7
        %v1184 = vrot.slane %v703, 7
        %v1185 = vrot.slane %v704, 7
        %v1186 = vrot.slane %v705, 7
        %v1187 = vrot.slane %v706, 7
        %v1188 = vrot.slane %v707, 7
        %v1189 = vrot.slane %v708, 7
        %v1190 = vrot.slane %v709, 7
        %v1191 = vrot.slane %v710, 7
        %v1192 = vrot.slane %v711, 7
        %v1193 = vrot.slane %v712, 7
        %v1194 = vrot.slane %v713, 7
        %v1195 = vrot.slane %v714, 7
        %v1196 = vrot.slane %v715, 7
        %v1197 = vrot.slane %v716, 7
        %v1198 = vrot.slane %v717, 7
        %v1199 = vrot.slane %v718, 7
        %v1200 = vrot.slane %v719, 7
        %v1201 = vrot.slane %v720, 7
        %v1202 = vrot.slane %v721, 7
        %v1203 = vrot.slane %v722, 7
        %v1204 = vrot.slane %v723, 7
        %v1205 = vrot.slane %v724, 7
        %vm1206 = vcmp.lt.s32.totalorder %v726, 1
        %v1207 = vsel %vm1206, %v1204, %v1205
        %v1208 = vsel %vm1206, %v1203, %v1204
        %v1209 = vsel %vm1206, %v1202, %v1203
        %v1210 = vsel %vm1206, %v1201, %v1202
        %v1211 = vsel %vm1206, %v1200, %v1201
        %v1212 = vsel %vm1206, %v1199, %v1200
        %v1213 = vsel %vm1206, %v1198, %v1199
        %v1214 = vsel %vm1206, %v1197, %v1198
        %v1215 = vsel %vm1206, %v1196, %v1197
        %v1216 = vsel %vm1206, %v1195, %v1196
        %v1217 = vsel %vm1206, %v1194, %v1195
        %v1218 = vsel %vm1206, %v1193, %v1194
        %v1219 = vsel %vm1206, %v1192, %v1193
        %v1220 = vsel %vm1206, %v1191, %v1192
        %v1221 = vsel %vm1206, %v1190, %v1191
        %v1222 = vsel %vm1206, %v1189, %v1190
        %v1223 = vsel %vm1206, %v1188, %v1189
        %v1224 = vsel %vm1206, %v1187, %v1188
        %v1225 = vsel %vm1206, %v1186, %v1187
        %v1226 = vsel %vm1206, %v1185, %v1186
        %v1227 = vsel %vm1206, %v1184, %v1185
        %v1228 = vsel %vm1206, %v1183, %v1184
        %v1229 = vsel %vm1206, %v1182, %v1183
        %v1230 = vsel %vm1206, %v1181, %v1182
        %v1231 = vsel %vm1206, %v1180, %v1181
        %v1232 = vsel %vm1206, %v1179, %v1180
        %v1233 = vsel %vm1206, %v1178, %v1179
        %v1234 = vsel %vm1206, %v1177, %v1178
        %v1235 = vsel %vm1206, %v1176, %v1177
        %v1236 = vsel %vm1206, %v1175, %v1176
        %v1237 = vsel %vm1206, %v1174, %v1175
        %v1238 = vsel %vm1206, %v1205, %v1174
        %v1239 = vsel %vm1142, 1, 0
        %v1240 = vsel %vm1143, 1, 0
        %v1241 = vsel %vm1144, 1, 0
        %v1242 = vsel %vm1145, 1, 0
        %v1243 = vsel %vm1146, 1, 0
        %v1244 = vsel %vm1147, 1, 0
        %v1245 = vsel %vm1148, 1, 0
        %v1246 = vsel %vm1149, 1, 0
        %v1247 = vsel %vm1150, 1, 0
        %v1248 = vsel %vm1151, 1, 0
        %v1249 = vsel %vm1152, 1, 0
        %v1250 = vsel %vm1153, 1, 0
        %v1251 = vsel %vm1154, 1, 0
        %v1252 = vsel %vm1155, 1, 0
        %v1253 = vsel %vm1156, 1, 0
        %v1254 = vsel %vm1157, 1, 0
        %v1255 = vsel %vm1158, 1, 0
        %v1256 = vsel %vm1159, 1, 0
        %v1257 = vsel %vm1160, 1, 0
        %v1258 = vsel %vm1161, 1, 0
        %v1259 = vsel %vm1162, 1, 0
        %v1260 = vsel %vm1163, 1, 0
        %v1261 = vsel %vm1164, 1, 0
        %v1262 = vsel %vm1165, 1, 0
        %v1263 = vsel %vm1166, 1, 0
        %v1264 = vsel %vm1167, 1, 0
        %v1265 = vsel %vm1168, 1, 0
        %v1266 = vsel %vm1169, 1, 0
        %v1267 = vsel %vm1170, 1, 0
        %v1268 = vsel %vm1171, 1, 0
        %v1269 = vsel %vm1172, 1, 0
        %v1270 = vsel %vm1173, 1, 0
        %vm1271 = vcmp.eq.s32.totalorder %v1239, 1
        %vm1272 = vcmp.eq.s32.totalorder %v1240, 1
        %vm1273 = vcmp.eq.s32.totalorder %v1241, 1
        %vm1274 = vcmp.eq.s32.totalorder %v1242, 1
        %vm1275 = vcmp.eq.s32.totalorder %v1243, 1
        %vm1276 = vcmp.eq.s32.totalorder %v1244, 1
        %vm1277 = vcmp.eq.s32.totalorder %v1245, 1
        %vm1278 = vcmp.eq.s32.totalorder %v1246, 1
        %vm1279 = vcmp.eq.s32.totalorder %v1247, 1
        %vm1280 = vcmp.eq.s32.totalorder %v1248, 1
        %vm1281 = vcmp.eq.s32.totalorder %v1249, 1
        %vm1282 = vcmp.eq.s32.totalorder %v1250, 1
        %vm1283 = vcmp.eq.s32.totalorder %v1251, 1
        %vm1284 = vcmp.eq.s32.totalorder %v1252, 1
        %vm1285 = vcmp.eq.s32.totalorder %v1253, 1
        %vm1286 = vcmp.eq.s32.totalorder %v1254, 1
        %vm1287 = vcmp.eq.s32.totalorder %v1255, 1
        %vm1288 = vcmp.eq.s32.totalorder %v1256, 1
        %vm1289 = vcmp.eq.s32.totalorder %v1257, 1
        %vm1290 = vcmp.eq.s32.totalorder %v1258, 1
        %vm1291 = vcmp.eq.s32.totalorder %v1259, 1
        %vm1292 = vcmp.eq.s32.totalorder %v1260, 1
        %vm1293 = vcmp.eq.s32.totalorder %v1261, 1
        %vm1294 = vcmp.eq.s32.totalorder %v1262, 1
        %vm1295 = vcmp.eq.s32.totalorder %v1263, 1
        %vm1296 = vcmp.eq.s32.totalorder %v1264, 1
        %vm1297 = vcmp.eq.s32.totalorder %v1265, 1
        %vm1298 = vcmp.eq.s32.totalorder %v1266, 1
        %vm1299 = vcmp.eq.s32.totalorder %v1267, 1
        %vm1300 = vcmp.eq.s32.totalorder %v1268, 1
        %vm1301 = vcmp.eq.s32.totalorder %v1269, 1
        %vm1302 = vcmp.eq.s32.totalorder %v1270, 1
        %v1303 = vsel %vm1271, %v1238, 0.0
        %v1304 = vsel %vm1272, %v1237, 0.0
        %v1305 = vsel %vm1273, %v1236, 0.0
        %v1306 = vsel %vm1274, %v1235, 0.0
        %v1307 = vsel %vm1275, %v1234, 0.0
        %v1308 = vsel %vm1276, %v1233, 0.0
        %v1309 = vsel %vm1277, %v1232, 0.0
        %v1310 = vsel %vm1278, %v1231, 0.0
        %v1311 = vsel %vm1279, %v1230, 0.0
        %v1312 = vsel %vm1280, %v1229, 0.0
        %v1313 = vsel %vm1281, %v1228, 0.0
        %v1314 = vsel %vm1282, %v1227, 0.0
        %v1315 = vsel %vm1283, %v1226, 0.0
        %v1316 = vsel %vm1284, %v1225, 0.0
        %v1317 = vsel %vm1285, %v1224, 0.0
        %v1318 = vsel %vm1286, %v1223, 0.0
        %v1319 = vsel %vm1287, %v1222, 0.0
        %v1320 = vsel %vm1288, %v1221, 0.0
        %v1321 = vsel %vm1289, %v1220, 0.0
        %v1322 = vsel %vm1290, %v1219, 0.0
        %v1323 = vsel %vm1291, %v1218, 0.0
        %v1324 = vsel %vm1292, %v1217, 0.0
        %v1325 = vsel %vm1293, %v1216, 0.0
        %v1326 = vsel %vm1294, %v1215, 0.0
        %v1327 = vsel %vm1295, %v1214, 0.0
        %v1328 = vsel %vm1296, %v1213, 0.0
        %v1329 = vsel %vm1297, %v1212, 0.0
        %v1330 = vsel %vm1298, %v1211, 0.0
        %v1331 = vsel %vm1299, %v1210, 0.0
        %v1332 = vsel %vm1300, %v1209, 0.0
        %v1333 = vsel %vm1301, %v1208, 0.0
        %v1334 = vsel %vm1302, %v1207, 0.0
        %vm1335 = vcmp.le.s32.totalorder %v1110, 14
        %vm1336 = vcmp.le.s32.totalorder %v1111, 14
        %vm1337 = vcmp.le.s32.totalorder %v1112, 14
        %vm1338 = vcmp.le.s32.totalorder %v1113, 14
        %vm1339 = vcmp.le.s32.totalorder %v1114, 14
        %vm1340 = vcmp.le.s32.totalorder %v1115, 14
        %vm1341 = vcmp.le.s32.totalorder %v1116, 14
        %vm1342 = vcmp.le.s32.totalorder %v1117, 14
        %vm1343 = vcmp.le.s32.totalorder %v1118, 14
        %vm1344 = vcmp.le.s32.totalorder %v1119, 14
        %vm1345 = vcmp.le.s32.totalorder %v1120, 14
        %vm1346 = vcmp.le.s32.totalorder %v1121, 14
        %vm1347 = vcmp.le.s32.totalorder %v1122, 14
        %vm1348 = vcmp.le.s32.totalorder %v1123, 14
        %vm1349 = vcmp.le.s32.totalorder %v1124, 14
        %vm1350 = vcmp.le.s32.totalorder %v1125, 14
        %vm1351 = vcmp.le.s32.totalorder %v1126, 14
        %vm1352 = vcmp.le.s32.totalorder %v1127, 14
        %vm1353 = vcmp.le.s32.totalorder %v1128, 14
        %vm1354 = vcmp.le.s32.totalorder %v1129, 14
        %vm1355 = vcmp.le.s32.totalorder %v1130, 14
        %vm1356 = vcmp.le.s32.totalorder %v1131, 14
        %vm1357 = vcmp.le.s32.totalorder %v1132, 14
        %vm1358 = vcmp.le.s32.totalorder %v1133, 14
        %vm1359 = vcmp.le.s32.totalorder %v1134, 14
        %vm1360 = vcmp.le.s32.totalorder %v1135, 14
        %vm1361 = vcmp.le.s32.totalorder %v1136, 14
        %vm1362 = vcmp.le.s32.totalorder %v1137, 14
        %vm1363 = vcmp.le.s32.totalorder %v1138, 14
        %vm1364 = vcmp.le.s32.totalorder %v1139, 14
        %vm1365 = vcmp.le.s32.totalorder %v1140, 14
        %vm1366 = vcmp.le.s32.totalorder %v1141, 14
        %v1367 = vrot.slane %v693, 1
        %v1368 = vrot.slane %v694, 1
        %v1369 = vrot.slane %v695, 1
        %v1370 = vrot.slane %v696, 1
        %v1371 = vrot.slane %v697, 1
        %v1372 = vrot.slane %v698, 1
        %v1373 = vrot.slane %v699, 1
        %v1374 = vrot.slane %v700, 1
        %v1375 = vrot.slane %v701, 1
        %v1376 = vrot.slane %v702, 1
        %v1377 = vrot.slane %v703, 1
        %v1378 = vrot.slane %v704, 1
        %v1379 = vrot.slane %v705, 1
        %v1380 = vrot.slane %v706, 1
        %v1381 = vrot.slane %v707, 1
        %v1382 = vrot.slane %v708, 1
        %v1383 = vrot.slane %v709, 1
        %v1384 = vrot.slane %v710, 1
        %v1385 = vrot.slane %v711, 1
        %v1386 = vrot.slane %v712, 1
        %v1387 = vrot.slane %v713, 1
        %v1388 = vrot.slane %v714, 1
        %v1389 = vrot.slane %v715, 1
        %v1390 = vrot.slane %v716, 1
        %v1391 = vrot.slane %v717, 1
        %v1392 = vrot.slane %v718, 1
        %v1393 = vrot.slane %v719, 1
        %v1394 = vrot.slane %v720, 1
        %v1395 = vrot.slane %v721, 1
        %v1396 = vrot.slane %v722, 1
        %v1397 = vrot.slane %v723, 1
        %v1398 = vrot.slane %v724, 1
        %vm1399 = vcmp.lt.s32.totalorder %v726, 7
        %v1400 = vsel %vm1399, %v1397, %v1398
        %v1401 = vsel %vm1399, %v1396, %v1397
        %v1402 = vsel %vm1399, %v1395, %v1396
        %v1403 = vsel %vm1399, %v1394, %v1395
        %v1404 = vsel %vm1399, %v1393, %v1394
        %v1405 = vsel %vm1399, %v1392, %v1393
        %v1406 = vsel %vm1399, %v1391, %v1392
        %v1407 = vsel %vm1399, %v1390, %v1391
        %v1408 = vsel %vm1399, %v1389, %v1390
        %v1409 = vsel %vm1399, %v1388, %v1389
        %v1410 = vsel %vm1399, %v1387, %v1388
        %v1411 = vsel %vm1399, %v1386, %v1387
        %v1412 = vsel %vm1399, %v1385, %v1386
        %v1413 = vsel %vm1399, %v1384, %v1385
        %v1414 = vsel %vm1399, %v1383, %v1384
        %v1415 = vsel %vm1399, %v1382, %v1383
        %v1416 = vsel %vm1399, %v1381, %v1382
        %v1417 = vsel %vm1399, %v1380, %v1381
        %v1418 = vsel %vm1399, %v1379, %v1380
        %v1419 = vsel %vm1399, %v1378, %v1379
        %v1420 = vsel %vm1399, %v1377, %v1378
        %v1421 = vsel %vm1399, %v1376, %v1377
        %v1422 = vsel %vm1399, %v1375, %v1376
        %v1423 = vsel %vm1399, %v1374, %v1375
        %v1424 = vsel %vm1399, %v1373, %v1374
        %v1425 = vsel %vm1399, %v1372, %v1373
        %v1426 = vsel %vm1399, %v1371, %v1372
        %v1427 = vsel %vm1399, %v1370, %v1371
        %v1428 = vsel %vm1399, %v1369, %v1370
        %v1429 = vsel %vm1399, %v1368, %v1369
        %v1430 = vsel %vm1399, %v1367, %v1368
        %v1431 = vsel %vm1399, %v1398, %v1367
        %v1432 = vsel %vm1335, 1, 0
        %v1433 = vsel %vm1336, 1, 0
        %v1434 = vsel %vm1337, 1, 0
        %v1435 = vsel %vm1338, 1, 0
        %v1436 = vsel %vm1339, 1, 0
        %v1437 = vsel %vm1340, 1, 0
        %v1438 = vsel %vm1341, 1, 0
        %v1439 = vsel %vm1342, 1, 0
        %v1440 = vsel %vm1343, 1, 0
        %v1441 = vsel %vm1344, 1, 0
        %v1442 = vsel %vm1345, 1, 0
        %v1443 = vsel %vm1346, 1, 0
        %v1444 = vsel %vm1347, 1, 0
        %v1445 = vsel %vm1348, 1, 0
        %v1446 = vsel %vm1349, 1, 0
        %v1447 = vsel %vm1350, 1, 0
        %v1448 = vsel %vm1351, 1, 0
        %v1449 = vsel %vm1352, 1, 0
        %v1450 = vsel %vm1353, 1, 0
        %v1451 = vsel %vm1354, 1, 0
        %v1452 = vsel %vm1355, 1, 0
        %v1453 = vsel %vm1356, 1, 0
        %v1454 = vsel %vm1357, 1, 0
        %v1455 = vsel %vm1358, 1, 0
        %v1456 = vsel %vm1359, 1, 0
        %v1457 = vsel %vm1360, 1, 0
        %v1458 = vsel %vm1361, 1, 0
        %v1459 = vsel %vm1362, 1, 0
        %v1460 = vsel %vm1363, 1, 0
        %v1461 = vsel %vm1364, 1, 0
        %v1462 = vsel %vm1365, 1, 0
        %v1463 = vsel %vm1366, 1, 0
        %vm1464 = vcmp.eq.s32.totalorder %v1432, 1
        %vm1465 = vcmp.eq.s32.totalorder %v1433, 1
        %vm1466 = vcmp.eq.s32.totalorder %v1434, 1
        %vm1467 = vcmp.eq.s32.totalorder %v1435, 1
        %vm1468 = vcmp.eq.s32.totalorder %v1436, 1
        %vm1469 = vcmp.eq.s32.totalorder %v1437, 1
        %vm1470 = vcmp.eq.s32.totalorder %v1438, 1
        %vm1471 = vcmp.eq.s32.totalorder %v1439, 1
        %vm1472 = vcmp.eq.s32.totalorder %v1440, 1
        %vm1473 = vcmp.eq.s32.totalorder %v1441, 1
        %vm1474 = vcmp.eq.s32.totalorder %v1442, 1
        %vm1475 = vcmp.eq.s32.totalorder %v1443, 1
        %vm1476 = vcmp.eq.s32.totalorder %v1444, 1
        %vm1477 = vcmp.eq.s32.totalorder %v1445, 1
        %vm1478 = vcmp.eq.s32.totalorder %v1446, 1
        %vm1479 = vcmp.eq.s32.totalorder %v1447, 1
        %vm1480 = vcmp.eq.s32.totalorder %v1448, 1
        %vm1481 = vcmp.eq.s32.totalorder %v1449, 1
        %vm1482 = vcmp.eq.s32.totalorder %v1450, 1
        %vm1483 = vcmp.eq.s32.totalorder %v1451, 1
        %vm1484 = vcmp.eq.s32.totalorder %v1452, 1
        %vm1485 = vcmp.eq.s32.totalorder %v1453, 1
        %vm1486 = vcmp.eq.s32.totalorder %v1454, 1
        %vm1487 = vcmp.eq.s32.totalorder %v1455, 1
        %vm1488 = vcmp.eq.s32.totalorder %v1456, 1
        %vm1489 = vcmp.eq.s32.totalorder %v1457, 1
        %vm1490 = vcmp.eq.s32.totalorder %v1458, 1
        %vm1491 = vcmp.eq.s32.totalorder %v1459, 1
        %vm1492 = vcmp.eq.s32.totalorder %v1460, 1
        %vm1493 = vcmp.eq.s32.totalorder %v1461, 1
        %vm1494 = vcmp.eq.s32.totalorder %v1462, 1
        %vm1495 = vcmp.eq.s32.totalorder %v1463, 1
        %v1496 = vsel %vm1464, %v1430, 0.0
        %v1497 = vsel %vm1465, %v1429, 0.0
        %v1498 = vsel %vm1466, %v1428, 0.0
        %v1499 = vsel %vm1467, %v1427, 0.0
        %v1500 = vsel %vm1468, %v1426, 0.0
        %v1501 = vsel %vm1469, %v1425, 0.0
        %v1502 = vsel %vm1470, %v1424, 0.0
        %v1503 = vsel %vm1471, %v1423, 0.0
        %v1504 = vsel %vm1472, %v1422, 0.0
        %v1505 = vsel %vm1473, %v1421, 0.0
        %v1506 = vsel %vm1474, %v1420, 0.0
        %v1507 = vsel %vm1475, %v1419, 0.0
        %v1508 = vsel %vm1476, %v1418, 0.0
        %v1509 = vsel %vm1477, %v1417, 0.0
        %v1510 = vsel %vm1478, %v1416, 0.0
        %v1511 = vsel %vm1479, %v1415, 0.0
        %v1512 = vsel %vm1480, %v1414, 0.0
        %v1513 = vsel %vm1481, %v1413, 0.0
        %v1514 = vsel %vm1482, %v1412, 0.0
        %v1515 = vsel %vm1483, %v1411, 0.0
        %v1516 = vsel %vm1484, %v1410, 0.0
        %v1517 = vsel %vm1485, %v1409, 0.0
        %v1518 = vsel %vm1486, %v1408, 0.0
        %v1519 = vsel %vm1487, %v1407, 0.0
        %v1520 = vsel %vm1488, %v1406, 0.0
        %v1521 = vsel %vm1489, %v1405, 0.0
        %v1522 = vsel %vm1490, %v1404, 0.0
        %v1523 = vsel %vm1491, %v1403, 0.0
        %v1524 = vsel %vm1492, %v1402, 0.0
        %v1525 = vsel %vm1493, %v1401, 0.0
        %v1526 = vsel %vm1494, %v1400, 0.0
        %v1527 = vsel %vm1495, %v1431, 0.0
        %vm1528 = vcmask 781312
        %1529 = vst.msk [vmem:[#allocation2] sm:$0xf] %vm1528, 0
        %1530 = vst.msk [vmem:[#allocation2 + $0x4] sm:$0xf] %vm1528, 0
        %1531 = vst.msk [vmem:[#allocation2 + $0x88] sm:$0xf] %vm1528, 0
        %1532 = vst.msk [vmem:[#allocation2 + $0x8c] sm:$0xf] %vm1528, 0
        %v1533 = vpack.c.bf16 %v1303, %v1303
        %v1534 = vpack.c.bf16 %v1304, %v1304
        %v1535 = vpack.c.bf16 %v1305, %v1305
        %v1536 = vpack.c.bf16 %v1306, %v1306
        %v1537 = vpack.c.bf16 %v1307, %v1307
        %v1538 = vpack.c.bf16 %v1308, %v1308
        %v1539 = vpack.c.bf16 %v1309, %v1309
        %v1540 = vpack.c.bf16 %v1310, %v1310
        %v1541 = vpack.c.bf16 %v1311, %v1311
        %v1542 = vpack.c.bf16 %v1312, %v1312
        %v1543 = vpack.c.bf16 %v1313, %v1313
        %v1544 = vpack.c.bf16 %v1314, %v1314
        %v1545 = vpack.c.bf16 %v1315, %v1315
        %v1546 = vpack.c.bf16 %v1316, %v1316
        %v1547 = vpack.c.bf16 %v1317, %v1317
        %v1548 = vpack.c.bf16 %v1318, %v1318
        %v1549 = vpack.c.bf16 %v1319, %v1319
        %v1550 = vpack.c.bf16 %v1320, %v1320
        %v1551 = vpack.c.bf16 %v1321, %v1321
        %v1552 = vpack.c.bf16 %v1322, %v1322
        %v1553 = vpack.c.bf16 %v1323, %v1323
        %v1554 = vpack.c.bf16 %v1324, %v1324
        %v1555 = vpack.c.bf16 %v1325, %v1325
        %v1556 = vpack.c.bf16 %v1326, %v1326
        %v1557 = vpack.c.bf16 %v1327, %v1327
        %v1558 = vpack.c.bf16 %v1328, %v1328
        %v1559 = vpack.c.bf16 %v1329, %v1329
        %v1560 = vpack.c.bf16 %v1330, %v1330
        %v1561 = vpack.c.bf16 %v1331, %v1331
        %v1562 = vpack.c.bf16 %v1332, %v1332
        %v1563 = vpack.c.bf16 %v1333, %v1333
        %v1564 = vpack.c.bf16 %v1334, %v1334
        %vm1565 = vcmask 257024
        %1566 = vst.msk [vmem:[#allocation2 + $0x8] sm:$0xf] %vm1565, %v1533
        %1567 = vst.msk [vmem:[#allocation2 + $0xc] sm:$0xf] %vm1565, %v1534
        %1568 = vst.msk [vmem:[#allocation2 + $0x10] sm:$0xf] %vm1565, %v1535
        %1569 = vst.msk [vmem:[#allocation2 + $0x14] sm:$0xf] %vm1565, %v1536
        %1570 = vst.msk [vmem:[#allocation2 + $0x18] sm:$0xf] %vm1565, %v1537
        %1571 = vst.msk [vmem:[#allocation2 + $0x1c] sm:$0xf] %vm1565, %v1538
        %1572 = vst.msk [vmem:[#allocation2 + $0x20] sm:$0xf] %vm1565, %v1539
        %1573 = vst.msk [vmem:[#allocation2 + $0x24] sm:$0xf] %vm1565, %v1540
        %1574 = vst.msk [vmem:[#allocation2 + $0x28] sm:$0xf] %vm1565, %v1541
        %1575 = vst.msk [vmem:[#allocation2 + $0x2c] sm:$0xf] %vm1565, %v1542
        %1576 = vst.msk [vmem:[#allocation2 + $0x30] sm:$0xf] %vm1565, %v1543
        %1577 = vst.msk [vmem:[#allocation2 + $0x34] sm:$0xf] %vm1565, %v1544
        %1578 = vst.msk [vmem:[#allocation2 + $0x38] sm:$0xf] %vm1565, %v1545
        %1579 = vst.msk [vmem:[#allocation2 + $0x3c] sm:$0xf] %vm1565, %v1546
        %1580 = vst.msk [vmem:[#allocation2 + $0x40] sm:$0xf] %vm1565, %v1547
        %1581 = vst.msk [vmem:[#allocation2 + $0x44] sm:$0xf] %vm1565, %v1548
        %1582 = vst.msk [vmem:[#allocation2 + $0x48] sm:$0xf] %vm1565, %v1549
        %1583 = vst.msk [vmem:[#allocation2 + $0x4c] sm:$0xf] %vm1565, %v1550
        %1584 = vst.msk [vmem:[#allocation2 + $0x50] sm:$0xf] %vm1565, %v1551
        %1585 = vst.msk [vmem:[#allocation2 + $0x54] sm:$0xf] %vm1565, %v1552
        %1586 = vst.msk [vmem:[#allocation2 + $0x58] sm:$0xf] %vm1565, %v1553
        %1587 = vst.msk [vmem:[#allocation2 + $0x5c] sm:$0xf] %vm1565, %v1554
        %1588 = vst.msk [vmem:[#allocation2 + $0x60] sm:$0xf] %vm1565, %v1555
        %1589 = vst.msk [vmem:[#allocation2 + $0x64] sm:$0xf] %vm1565, %v1556
        %1590 = vst.msk [vmem:[#allocation2 + $0x68] sm:$0xf] %vm1565, %v1557
        %1591 = vst.msk [vmem:[#allocation2 + $0x6c] sm:$0xf] %vm1565, %v1558
        %1592 = vst.msk [vmem:[#allocation2 + $0x70] sm:$0xf] %vm1565, %v1559
        %1593 = vst.msk [vmem:[#allocation2 + $0x74] sm:$0xf] %vm1565, %v1560
        %1594 = vst.msk [vmem:[#allocation2 + $0x78] sm:$0xf] %vm1565, %v1561
        %1595 = vst.msk [vmem:[#allocation2 + $0x7c] sm:$0xf] %vm1565, %v1562
        %1596 = vst.msk [vmem:[#allocation2 + $0x80] sm:$0xf] %vm1565, %v1563
        %1597 = vst.msk [vmem:[#allocation2 + $0x84] sm:$0xf] %vm1565, %v1564
        %v1598 = vpack.c.bf16 %v693, %v693
        %v1599 = vpack.c.bf16 %v694, %v694
        %v1600 = vpack.c.bf16 %v695, %v695
        %v1601 = vpack.c.bf16 %v696, %v696
        %v1602 = vpack.c.bf16 %v697, %v697
        %v1603 = vpack.c.bf16 %v698, %v698
        %v1604 = vpack.c.bf16 %v699, %v699
        %v1605 = vpack.c.bf16 %v700, %v700
        %v1606 = vpack.c.bf16 %v701, %v701
        %v1607 = vpack.c.bf16 %v702, %v702
        %v1608 = vpack.c.bf16 %v703, %v703
        %v1609 = vpack.c.bf16 %v704, %v704
        %v1610 = vpack.c.bf16 %v705, %v705
        %v1611 = vpack.c.bf16 %v706, %v706
        %v1612 = vpack.c.bf16 %v707, %v707
        %v1613 = vpack.c.bf16 %v708, %v708
        %v1614 = vpack.c.bf16 %v709, %v709
        %v1615 = vpack.c.bf16 %v710, %v710
        %v1616 = vpack.c.bf16 %v711, %v711
        %v1617 = vpack.c.bf16 %v712, %v712
        %v1618 = vpack.c.bf16 %v713, %v713
        %v1619 = vpack.c.bf16 %v714, %v714
        %v1620 = vpack.c.bf16 %v715, %v715
        %v1621 = vpack.c.bf16 %v716, %v716
        %v1622 = vpack.c.bf16 %v717, %v717
        %v1623 = vpack.c.bf16 %v718, %v718
        %v1624 = vpack.c.bf16 %v719, %v719
        %v1625 = vpack.c.bf16 %v720, %v720
        %v1626 = vpack.c.bf16 %v721, %v721
        %v1627 = vpack.c.bf16 %v722, %v722
        %v1628 = vpack.c.bf16 %v723, %v723
        %v1629 = vpack.c.bf16 %v724, %v724
        %1662 = vrot.lane.b32.xlu0 %v1598, 32
        %v1663 = vpop.permute.xlu0 %1662
        %1664 = vrot.lane.b32.xlu0 %v1599, 32
        %v1665 = vpop.permute.xlu0 %1664
        %1666 = vrot.lane.b32.xlu0 %v1600, 32
        %v1667 = vpop.permute.xlu0 %1666
        %1668 = vrot.lane.b32.xlu0 %v1601, 32
        %v1669 = vpop.permute.xlu0 %1668
        %1670 = vrot.lane.b32.xlu0 %v1602, 32
        %v1671 = vpop.permute.xlu0 %1670
        %1672 = vrot.lane.b32.xlu0 %v1603, 32
        %v1673 = vpop.permute.xlu0 %1672
        %1674 = vrot.lane.b32.xlu0 %v1604, 32
        %v1675 = vpop.permute.xlu0 %1674
        %1676 = vrot.lane.b32.xlu0 %v1605, 32
        %v1677 = vpop.permute.xlu0 %1676
        %1678 = vrot.lane.b32.xlu0 %v1606, 32
        %v1679 = vpop.permute.xlu0 %1678
        %1680 = vrot.lane.b32.xlu0 %v1607, 32
        %v1681 = vpop.permute.xlu0 %1680
        %1682 = vrot.lane.b32.xlu0 %v1608, 32
        %v1683 = vpop.permute.xlu0 %1682
        %1684 = vrot.lane.b32.xlu0 %v1609, 32
        %v1685 = vpop.permute.xlu0 %1684
        %1686 = vrot.lane.b32.xlu0 %v1610, 32
        %v1687 = vpop.permute.xlu0 %1686
        %1688 = vrot.lane.b32.xlu0 %v1611, 32
        %v1689 = vpop.permute.xlu0 %1688
        %1690 = vrot.lane.b32.xlu0 %v1612, 32
        %v1691 = vpop.permute.xlu0 %1690
        %1692 = vrot.lane.b32.xlu0 %v1613, 32
        %v1693 = vpop.permute.xlu0 %1692
        %1694 = vrot.lane.b32.xlu0 %v1614, 32
        %v1695 = vpop.permute.xlu0 %1694
        %1696 = vrot.lane.b32.xlu0 %v1615, 32
        %v1697 = vpop.permute.xlu0 %1696
        %1698 = vrot.lane.b32.xlu0 %v1616, 32
        %v1699 = vpop.permute.xlu0 %1698
        %1700 = vrot.lane.b32.xlu0 %v1617, 32
        %v1701 = vpop.permute.xlu0 %1700
        %1702 = vrot.lane.b32.xlu0 %v1618, 32
        %v1703 = vpop.permute.xlu0 %1702
        %1704 = vrot.lane.b32.xlu0 %v1619, 32
        %v1705 = vpop.permute.xlu0 %1704
        %1706 = vrot.lane.b32.xlu0 %v1620, 32
        %v1707 = vpop.permute.xlu0 %1706
        %1708 = vrot.lane.b32.xlu0 %v1621, 32
        %v1709 = vpop.permute.xlu0 %1708
        %1710 = vrot.lane.b32.xlu0 %v1622, 32
        %v1711 = vpop.permute.xlu0 %1710
        %1712 = vrot.lane.b32.xlu0 %v1623, 32
        %v1713 = vpop.permute.xlu0 %1712
        %1714 = vrot.lane.b32.xlu0 %v1624, 32
        %v1715 = vpop.permute.xlu0 %1714
        %1716 = vrot.lane.b32.xlu0 %v1625, 32
        %v1717 = vpop.permute.xlu0 %1716
        %1718 = vrot.lane.b32.xlu0 %v1626, 32
        %v1719 = vpop.permute.xlu0 %1718
        %1720 = vrot.lane.b32.xlu0 %v1627, 32
        %v1721 = vpop.permute.xlu0 %1720
        %1722 = vrot.lane.b32.xlu0 %v1628, 32
        %v1723 = vpop.permute.xlu0 %1722
        %1724 = vrot.lane.b32.xlu0 %v1629, 32
        %v1725 = vpop.permute.xlu0 %1724
        %vm1758 = vcmask 519424
        %1759 = vst.msk [vmem:[#allocation2 + $0x8] sm:$0xf] %vm1758, %v1663
        %1760 = vst.msk [vmem:[#allocation2 + $0xc] sm:$0xf] %vm1758, %v1665
        %1761 = vst.msk [vmem:[#allocation2 + $0x10] sm:$0xf] %vm1758, %v1667
        %1762 = vst.msk [vmem:[#allocation2 + $0x14] sm:$0xf] %vm1758, %v1669
        %1763 = vst.msk [vmem:[#allocation2 + $0x18] sm:$0xf] %vm1758, %v1671
        %1764 = vst.msk [vmem:[#allocation2 + $0x1c] sm:$0xf] %vm1758, %v1673
        %1765 = vst.msk [vmem:[#allocation2 + $0x20] sm:$0xf] %vm1758, %v1675
        %1766 = vst.msk [vmem:[#allocation2 + $0x24] sm:$0xf] %vm1758, %v1677
        %1767 = vst.msk [vmem:[#allocation2 + $0x28] sm:$0xf] %vm1758, %v1679
        %1768 = vst.msk [vmem:[#allocation2 + $0x2c] sm:$0xf] %vm1758, %v1681
        %1769 = vst.msk [vmem:[#allocation2 + $0x30] sm:$0xf] %vm1758, %v1683
        %1770 = vst.msk [vmem:[#allocation2 + $0x34] sm:$0xf] %vm1758, %v1685
        %1771 = vst.msk [vmem:[#allocation2 + $0x38] sm:$0xf] %vm1758, %v1687
        %1772 = vst.msk [vmem:[#allocation2 + $0x3c] sm:$0xf] %vm1758, %v1689
        %1773 = vst.msk [vmem:[#allocation2 + $0x40] sm:$0xf] %vm1758, %v1691
        %1774 = vst.msk [vmem:[#allocation2 + $0x44] sm:$0xf] %vm1758, %v1693
        %1775 = vst.msk [vmem:[#allocation2 + $0x48] sm:$0xf] %vm1758, %v1695
        %1776 = vst.msk [vmem:[#allocation2 + $0x4c] sm:$0xf] %vm1758, %v1697
        %1777 = vst.msk [vmem:[#allocation2 + $0x50] sm:$0xf] %vm1758, %v1699
        %1778 = vst.msk [vmem:[#allocation2 + $0x54] sm:$0xf] %vm1758, %v1701
        %1779 = vst.msk [vmem:[#allocation2 + $0x58] sm:$0xf] %vm1758, %v1703
        %1780 = vst.msk [vmem:[#allocation2 + $0x5c] sm:$0xf] %vm1758, %v1705
        %1781 = vst.msk [vmem:[#allocation2 + $0x60] sm:$0xf] %vm1758, %v1707
        %1782 = vst.msk [vmem:[#allocation2 + $0x64] sm:$0xf] %vm1758, %v1709
        %1783 = vst.msk [vmem:[#allocation2 + $0x68] sm:$0xf] %vm1758, %v1711
        %1784 = vst.msk [vmem:[#allocation2 + $0x6c] sm:$0xf] %vm1758, %v1713
        %1785 = vst.msk [vmem:[#allocation2 + $0x70] sm:$0xf] %vm1758, %v1715
        %1786 = vst.msk [vmem:[#allocation2 + $0x74] sm:$0xf] %vm1758, %v1717
        %1787 = vst.msk [vmem:[#allocation2 + $0x78] sm:$0xf] %vm1758, %v1719
        %1788 = vst.msk [vmem:[#allocation2 + $0x7c] sm:$0xf] %vm1758, %v1721
        %1789 = vst.msk [vmem:[#allocation2 + $0x80] sm:$0xf] %vm1758, %v1723
        %1790 = vst.msk [vmem:[#allocation2 + $0x84] sm:$0xf] %vm1758, %v1725
        %v1791 = vpack.c.bf16 %v1496, %v1496
        %v1792 = vpack.c.bf16 %v1497, %v1497
        %v1793 = vpack.c.bf16 %v1498, %v1498
        %v1794 = vpack.c.bf16 %v1499, %v1499
        %v1795 = vpack.c.bf16 %v1500, %v1500
        %v1796 = vpack.c.bf16 %v1501, %v1501
        %v1797 = vpack.c.bf16 %v1502, %v1502
        %v1798 = vpack.c.bf16 %v1503, %v1503
        %v1799 = vpack.c.bf16 %v1504, %v1504
        %v1800 = vpack.c.bf16 %v1505, %v1505
        %v1801 = vpack.c.bf16 %v1506, %v1506
        %v1802 = vpack.c.bf16 %v1507, %v1507
        %v1803 = vpack.c.bf16 %v1508, %v1508
        %v1804 = vpack.c.bf16 %v1509, %v1509
        %v1805 = vpack.c.bf16 %v1510, %v1510
        %v1806 = vpack.c.bf16 %v1511, %v1511
        %v1807 = vpack.c.bf16 %v1512, %v1512
        %v1808 = vpack.c.bf16 %v1513, %v1513
        %v1809 = vpack.c.bf16 %v1514, %v1514
        %v1810 = vpack.c.bf16 %v1515, %v1515
        %v1811 = vpack.c.bf16 %v1516, %v1516
        %v1812 = vpack.c.bf16 %v1517, %v1517
        %v1813 = vpack.c.bf16 %v1518, %v1518
        %v1814 = vpack.c.bf16 %v1519, %v1519
        %v1815 = vpack.c.bf16 %v1520, %v1520
        %v1816 = vpack.c.bf16 %v1521, %v1521
        %v1817 = vpack.c.bf16 %v1522, %v1522
        %v1818 = vpack.c.bf16 %v1523, %v1523
        %v1819 = vpack.c.bf16 %v1524, %v1524
        %v1820 = vpack.c.bf16 %v1525, %v1525
        %v1821 = vpack.c.bf16 %v1526, %v1526
        %v1822 = vpack.c.bf16 %v1527, %v1527
        %1855 = vrot.lane.b32.xlu0 %v1791, 64
        %v1856 = vpop.permute.xlu0 %1855
        %1857 = vrot.lane.b32.xlu0 %v1792, 64
        %v1858 = vpop.permute.xlu0 %1857
        %1859 = vrot.lane.b32.xlu0 %v1793, 64
        %v1860 = vpop.permute.xlu0 %1859
        %1861 = vrot.lane.b32.xlu0 %v1794, 64
        %v1862 = vpop.permute.xlu0 %1861
        %1863 = vrot.lane.b32.xlu0 %v1795, 64
        %v1864 = vpop.permute.xlu0 %1863
        %1865 = vrot.lane.b32.xlu0 %v1796, 64
        %v1866 = vpop.permute.xlu0 %1865
        %1867 = vrot.lane.b32.xlu0 %v1797, 64
        %v1868 = vpop.permute.xlu0 %1867
        %1869 = vrot.lane.b32.xlu0 %v1798, 64
        %v1870 = vpop.permute.xlu0 %1869
        %1871 = vrot.lane.b32.xlu0 %v1799, 64
        %v1872 = vpop.permute.xlu0 %1871
        %1873 = vrot.lane.b32.xlu0 %v1800, 64
        %v1874 = vpop.permute.xlu0 %1873
        %1875 = vrot.lane.b32.xlu0 %v1801, 64
        %v1876 = vpop.permute.xlu0 %1875
        %1877 = vrot.lane.b32.xlu0 %v1802, 64
        %v1878 = vpop.permute.xlu0 %1877
        %1879 = vrot.lane.b32.xlu0 %v1803, 64
        %v1880 = vpop.permute.xlu0 %1879
        %1881 = vrot.lane.b32.xlu0 %v1804, 64
        %v1882 = vpop.permute.xlu0 %1881
        %1883 = vrot.lane.b32.xlu0 %v1805, 64
        %v1884 = vpop.permute.xlu0 %1883
        %1885 = vrot.lane.b32.xlu0 %v1806, 64
        %v1886 = vpop.permute.xlu0 %1885
        %1887 = vrot.lane.b32.xlu0 %v1807, 64
        %v1888 = vpop.permute.xlu0 %1887
        %1889 = vrot.lane.b32.xlu0 %v1808, 64
        %v1890 = vpop.permute.xlu0 %1889
        %1891 = vrot.lane.b32.xlu0 %v1809, 64
        %v1892 = vpop.permute.xlu0 %1891
        %1893 = vrot.lane.b32.xlu0 %v1810, 64
        %v1894 = vpop.permute.xlu0 %1893
        %1895 = vrot.lane.b32.xlu0 %v1811, 64
        %v1896 = vpop.permute.xlu0 %1895
        %1897 = vrot.lane.b32.xlu0 %v1812, 64
        %v1898 = vpop.permute.xlu0 %1897
        %1899 = vrot.lane.b32.xlu0 %v1813, 64
        %v1900 = vpop.permute.xlu0 %1899
        %1901 = vrot.lane.b32.xlu0 %v1814, 64
        %v1902 = vpop.permute.xlu0 %1901
        %1903 = vrot.lane.b32.xlu0 %v1815, 64
        %v1904 = vpop.permute.xlu0 %1903
        %1905 = vrot.lane.b32.xlu0 %v1816, 64
        %v1906 = vpop.permute.xlu0 %1905
        %1907 = vrot.lane.b32.xlu0 %v1817, 64
        %v1908 = vpop.permute.xlu0 %1907
        %1909 = vrot.lane.b32.xlu0 %v1818, 64
        %v1910 = vpop.permute.xlu0 %1909
        %1911 = vrot.lane.b32.xlu0 %v1819, 64
        %v1912 = vpop.permute.xlu0 %1911
        %1913 = vrot.lane.b32.xlu0 %v1820, 64
        %v1914 = vpop.permute.xlu0 %1913
        %1915 = vrot.lane.b32.xlu0 %v1821, 64
        %v1916 = vpop.permute.xlu0 %1915
        %1917 = vrot.lane.b32.xlu0 %v1822, 64
        %v1918 = vpop.permute.xlu0 %1917
        %vm1951 = vcmask 781824
        %1952 = vst.msk [vmem:[#allocation2 + $0x8] sm:$0xf] %vm1951, %v1856
        %1953 = vst.msk [vmem:[#allocation2 + $0xc] sm:$0xf] %vm1951, %v1858
        %1954 = vst.msk [vmem:[#allocation2 + $0x10] sm:$0xf] %vm1951, %v1860
        %1955 = vst.msk [vmem:[#allocation2 + $0x14] sm:$0xf] %vm1951, %v1862
        %1956 = vst.msk [vmem:[#allocation2 + $0x18] sm:$0xf] %vm1951, %v1864
        %1957 = vst.msk [vmem:[#allocation2 + $0x1c] sm:$0xf] %vm1951, %v1866
        %1958 = vst.msk [vmem:[#allocation2 + $0x20] sm:$0xf] %vm1951, %v1868
        %1959 = vst.msk [vmem:[#allocation2 + $0x24] sm:$0xf] %vm1951, %v1870
        %1960 = vst.msk [vmem:[#allocation2 + $0x28] sm:$0xf] %vm1951, %v1872
        %1961 = vst.msk [vmem:[#allocation2 + $0x2c] sm:$0xf] %vm1951, %v1874
        %1962 = vst.msk [vmem:[#allocation2 + $0x30] sm:$0xf] %vm1951, %v1876
        %1963 = vst.msk [vmem:[#allocation2 + $0x34] sm:$0xf] %vm1951, %v1878
        %1964 = vst.msk [vmem:[#allocation2 + $0x38] sm:$0xf] %vm1951, %v1880
        %1965 = vst.msk [vmem:[#allocation2 + $0x3c] sm:$0xf] %vm1951, %v1882
        %1966 = vst.msk [vmem:[#allocation2 + $0x40] sm:$0xf] %vm1951, %v1884
        %1967 = vst.msk [vmem:[#allocation2 + $0x44] sm:$0xf] %vm1951, %v1886
        %1968 = vst.msk [vmem:[#allocation2 + $0x48] sm:$0xf] %vm1951, %v1888
        %1969 = vst.msk [vmem:[#allocation2 + $0x4c] sm:$0xf] %vm1951, %v1890
        %1970 = vst.msk [vmem:[#allocation2 + $0x50] sm:$0xf] %vm1951, %v1892
        %1971 = vst.msk [vmem:[#allocation2 + $0x54] sm:$0xf] %vm1951, %v1894
        %1972 = vst.msk [vmem:[#allocation2 + $0x58] sm:$0xf] %vm1951, %v1896
        %1973 = vst.msk [vmem:[#allocation2 + $0x5c] sm:$0xf] %vm1951, %v1898
        %1974 = vst.msk [vmem:[#allocation2 + $0x60] sm:$0xf] %vm1951, %v1900
        %1975 = vst.msk [vmem:[#allocation2 + $0x64] sm:$0xf] %vm1951, %v1902
        %1976 = vst.msk [vmem:[#allocation2 + $0x68] sm:$0xf] %vm1951, %v1904
        %1977 = vst.msk [vmem:[#allocation2 + $0x6c] sm:$0xf] %vm1951, %v1906
        %1978 = vst.msk [vmem:[#allocation2 + $0x70] sm:$0xf] %vm1951, %v1908
        %1979 = vst.msk [vmem:[#allocation2 + $0x74] sm:$0xf] %vm1951, %v1910
        %1980 = vst.msk [vmem:[#allocation2 + $0x78] sm:$0xf] %vm1951, %v1912
        %1981 = vst.msk [vmem:[#allocation2 + $0x7c] sm:$0xf] %vm1951, %v1914
        %1982 = vst.msk [vmem:[#allocation2 + $0x80] sm:$0xf] %vm1951, %v1916
        %1983 = vst.msk [vmem:[#allocation2 + $0x84] sm:$0xf] %vm1951, %v1918
        %v1984 = vld [vmem:[#allocation2] sm:$0xf]
        %v1985 = vld [vmem:[#allocation2 + $0x4] sm:$0xf]
        %v1986 = vld [vmem:[#allocation2 + $0x8] sm:$0xf]
        %v1987 = vld [vmem:[#allocation2 + $0xc] sm:$0xf]
        %v1988 = vld [vmem:[#allocation2 + $0x10] sm:$0xf]
        %v1989 = vld [vmem:[#allocation2 + $0x14] sm:$0xf]
        %v1990 = vld [vmem:[#allocation2 + $0x18] sm:$0xf]
        %v1991 = vld [vmem:[#allocation2 + $0x1c] sm:$0xf]
        %v1992 = vld [vmem:[#allocation2 + $0x20] sm:$0xf]
        %v1993 = vld [vmem:[#allocation2 + $0x24] sm:$0xf]
        %v1994 = vld [vmem:[#allocation2 + $0x28] sm:$0xf]
        %v1995 = vld [vmem:[#allocation2 + $0x2c] sm:$0xf]
        %v1996 = vld [vmem:[#allocation2 + $0x30] sm:$0xf]
        %v1997 = vld [vmem:[#allocation2 + $0x34] sm:$0xf]
        %v1998 = vld [vmem:[#allocation2 + $0x38] sm:$0xf]
        %v1999 = vld [vmem:[#allocation2 + $0x3c] sm:$0xf]
        %v2000 = vld [vmem:[#allocation2 + $0x40] sm:$0xf]
        %v2001 = vld [vmem:[#allocation2 + $0x44] sm:$0xf]
        %v2002 = vld [vmem:[#allocation2 + $0x48] sm:$0xf]
        %v2003 = vld [vmem:[#allocation2 + $0x4c] sm:$0xf]
        %v2004 = vld [vmem:[#allocation2 + $0x50] sm:$0xf]
        %v2005 = vld [vmem:[#allocation2 + $0x54] sm:$0xf]
        %v2006 = vld [vmem:[#allocation2 + $0x58] sm:$0xf]
        %v2007 = vld [vmem:[#allocation2 + $0x5c] sm:$0xf]
        %v2008 = vld [vmem:[#allocation2 + $0x60] sm:$0xf]
        %v2009 = vld [vmem:[#allocation2 + $0x64] sm:$0xf]
        %v2010 = vld [vmem:[#allocation2 + $0x68] sm:$0xf]
        %v2011 = vld [vmem:[#allocation2 + $0x6c] sm:$0xf]
        %v2012 = vld [vmem:[#allocation2 + $0x70] sm:$0xf]
        %v2013 = vld [vmem:[#allocation2 + $0x74] sm:$0xf]
        %v2014 = vld [vmem:[#allocation2 + $0x78] sm:$0xf]
        %v2015 = vld [vmem:[#allocation2 + $0x7c] sm:$0xf]
        %v2016 = vld [vmem:[%s3] sm:$0xf]
        %v2017 = vld [vmem:[%s3 + $0x4] sm:$0xf]
        %v2018 = vld [vmem:[%s3 + $0x8] sm:$0xf]
        %v2019 = vld [vmem:[%s3 + $0xc] sm:$0xf]
        %v2020 = vld [vmem:[%s3 + $0x10] sm:$0xf]
        %v2021 = vld [vmem:[%s3 + $0x14] sm:$0xf]
        %v2022 = vld [vmem:[%s3 + $0x18] sm:$0xf]
        %v2023 = vld [vmem:[%s3 + $0x1c] sm:$0xf]
        %v2024 = vld [vmem:[%s3 + $0x20] sm:$0xf]
        %v2025 = vld [vmem:[%s3 + $0x24] sm:$0xf]
        %v2026 = vld [vmem:[%s3 + $0x28] sm:$0xf]
        %v2027 = vld [vmem:[%s3 + $0x2c] sm:$0xf]
        %v2028 = vld [vmem:[#allocation2 + $0x80] sm:$0xf]
        %v2029 = vld [vmem:[#allocation2 + $0x84] sm:$0xf]
        %v2030 = vld [vmem:[%s3 + $0x30] sm:$0xf]
        %v2031 = vld [vmem:[%s3 + $0x34] sm:$0xf]
        %v2032 = vld [vmem:[%s3 + $0x38] sm:$0xf]
        %v2033 = vld [vmem:[%s3 + $0x3c] sm:$0xf]
        %v2034 = vld [vmem:[%s3 + $0x40] sm:$0xf]
        %v2035 = vld [vmem:[%s3 + $0x44] sm:$0xf]
        %v2036 = vld [vmem:[%s3 + $0x48] sm:$0xf]
        %v2037 = vld [vmem:[%s3 + $0x4c] sm:$0xf]
        %v2038 = vld [vmem:[%s3 + $0x50] sm:$0xf]
        %v2039 = vld [vmem:[%s3 + $0x54] sm:$0xf]
        %v2040 = vld [vmem:[%s3 + $0x58] sm:$0xf]
        %v2041 = vld [vmem:[%s3 + $0x5c] sm:$0xf]
        %v2074 = vunpack.c.l.b16 %v1986
        %v2075 = vunpack.c.l.b16 %v1987
        %v2076 = vunpack.c.l.b16 %v1988
        %v2077 = vunpack.c.l.b16 %v1989
        %v2078 = vunpack.c.l.b16 %v1990
        %v2079 = vunpack.c.l.b16 %v1991
        %v2080 = vunpack.c.l.b16 %v1992
        %v2081 = vunpack.c.l.b16 %v1993
        %v2082 = vunpack.c.l.b16 %v1994
        %v2083 = vunpack.c.l.b16 %v1995
        %v2084 = vunpack.c.l.b16 %v1996
        %v2085 = vunpack.c.l.b16 %v1997
        %v2086 = vunpack.c.l.b16 %v1998
        %v2087 = vunpack.c.l.b16 %v1999
        %v2088 = vunpack.c.l.b16 %v2000
        %v2089 = vunpack.c.l.b16 %v2001
        %v2090 = vunpack.c.l.b16 %v2002
        %v2091 = vunpack.c.l.b16 %v2003
        %v2092 = vunpack.c.l.b16 %v2004
        %v2093 = vunpack.c.l.b16 %v2005
        %v2094 = vunpack.c.l.b16 %v2006
        %v2095 = vunpack.c.l.b16 %v2007
        %v2096 = vunpack.c.l.b16 %v2008
        %v2097 = vunpack.c.l.b16 %v2009
        %v2098 = vunpack.c.l.b16 %v2010
        %v2099 = vunpack.c.l.b16 %v2011
        %v2100 = vunpack.c.l.b16 %v2012
        %v2101 = vunpack.c.l.b16 %v2013
        %v2102 = vunpack.c.l.b16 %v2014
        %v2103 = vunpack.c.l.b16 %v2015
        %v2104 = vunpack.c.l.b16 %v2028
        %v2105 = vunpack.c.l.b16 %v2029
        %v2106 = vpack.c.b16 %v2075, %v2074
        %v2107 = vpack.c.b16 %v2077, %v2076
        %v2108 = vpack.c.b16 %v2079, %v2078
        %v2109 = vpack.c.b16 %v2081, %v2080
        %v2110 = vpack.c.b16 %v2083, %v2082
        %v2111 = vpack.c.b16 %v2085, %v2084
        %v2112 = vpack.c.b16 %v2087, %v2086
        %v2113 = vpack.c.b16 %v2089, %v2088
        %v2114 = vpack.c.b16 %v2091, %v2090
        %v2115 = vpack.c.b16 %v2093, %v2092
        %v2116 = vpack.c.b16 %v2095, %v2094
        %v2117 = vpack.c.b16 %v2097, %v2096
        %v2118 = vpack.c.b16 %v2099, %v2098
        %v2119 = vpack.c.b16 %v2101, %v2100
        %v2120 = vpack.c.b16 %v2103, %v2102
        %v2121 = vpack.c.b16 %v2105, %v2104
        %v2134 = vunpack.c.l.b16 %v2030
        %v2135 = vunpack.c.l.b16 %v2031
        %v2136 = vunpack.c.l.b16 %v2032
        %v2137 = vunpack.c.l.b16 %v2033
        %v2138 = vunpack.c.l.b16 %v2034
        %v2139 = vunpack.c.l.b16 %v2035
        %v2140 = vunpack.c.l.b16 %v2036
        %v2141 = vunpack.c.l.b16 %v2037
        %v2142 = vunpack.c.l.b16 %v2038
        %v2143 = vunpack.c.l.b16 %v2039
        %v2144 = vunpack.c.l.b16 %v2040
        %v2145 = vunpack.c.l.b16 %v2041
        %v2146 = vpack.c.b16 %v2135, %v2134
        %v2147 = vpack.c.b16 %v2137, %v2136
        %v2148 = vpack.c.b16 %v2139, %v2138
        %v2149 = vpack.c.b16 %v2141, %v2140
        %v2150 = vpack.c.b16 %v2143, %v2142
        %v2151 = vpack.c.b16 %v2145, %v2144
        %vm2158 = vcmask 785408
        %v2160 = vsel %vm2158, %v2106, 0
        %v2163 = vsel %vm2158, %v2107, 0
        %v2166 = vsel %vm2158, %v2108, 0
        %v2169 = vsel %vm2158, %v2109, 0
        %v2172 = vsel %vm2158, %v2110, 0
        %v2175 = vsel %vm2158, %v2111, 0
        %v2178 = vsel %vm2158, %v2112, 0
        %v2181 = vsel %vm2158, %v2113, 0
        %v2184 = vsel %vm2158, %v2114, 0
        %v2187 = vsel %vm2158, %v2115, 0
        %v2190 = vsel %vm2158, %v2116, 0
        %v2193 = vsel %vm2158, %v2117, 0
        %v2196 = vsel %vm2158, %v2118, 0
        %v2199 = vsel %vm2158, %v2119, 0
        %v2202 = vsel %vm2158, %v2120, 0
        %v2205 = vsel %vm2158, %v2121, 0
        %2207 = vmatpush.bf16.msra.mxu0 0
        %2208 = vmatpush.bf16.msra.mxu0 0
        %2209 = vmatpush.bf16.msra.mxu0 %v2151
        %2210 = vmatpush.bf16.msra.mxu0 %v2150
        %2211 = vmatpush.bf16.msra.mxu0 %v2149
        %2212 = vmatpush.bf16.msra.mxu0 %v2148
        %2213 = vmatpush.bf16.msra.mxu0 %v2147
        %2214 = vmatpush.bf16.msra.mxu0 %v2146
        %2215 = vmatmul.bf16.gmra.mxu0 %v2160
        %v2216 = vpop.f32.mrf.mxu0
        %v2217 = vadd.f32 0.0, %v2216
        %v2218 = vpop.f32.mrf.mxu0
        %v2219 = vadd.f32 0.0, %v2218
        %2220 = vmatmul.bf16.gmra.mxu0 %v2163
        %v2221 = vpop.f32.mrf.mxu0
        %v2222 = vadd.f32 0.0, %v2221
        %v2223 = vpop.f32.mrf.mxu0
        %v2224 = vadd.f32 0.0, %v2223
        %2225 = vmatmul.bf16.gmra.mxu0 %v2166
        %v2226 = vpop.f32.mrf.mxu0
        %v2227 = vadd.f32 0.0, %v2226
        %v2228 = vpop.f32.mrf.mxu0
        %v2229 = vadd.f32 0.0, %v2228
        %2230 = vmatmul.bf16.gmra.mxu0 %v2169
        %v2231 = vpop.f32.mrf.mxu0
        %v2232 = vadd.f32 0.0, %v2231
        %v2233 = vpop.f32.mrf.mxu0
        %v2234 = vadd.f32 0.0, %v2233
        %2235 = vmatmul.bf16.gmra.mxu0 %v2172
        %v2236 = vpop.f32.mrf.mxu0
        %v2237 = vadd.f32 0.0, %v2236
        %v2238 = vpop.f32.mrf.mxu0
        %v2239 = vadd.f32 0.0, %v2238
        %2240 = vmatmul.bf16.gmra.mxu0 %v2175
        %v2241 = vpop.f32.mrf.mxu0
        %v2242 = vadd.f32 0.0, %v2241
        %v2243 = vpop.f32.mrf.mxu0
        %v2244 = vadd.f32 0.0, %v2243
        %2245 = vmatmul.bf16.gmra.mxu0 %v2178
        %v2246 = vpop.f32.mrf.mxu0
        %v2247 = vadd.f32 0.0, %v2246
        %v2248 = vpop.f32.mrf.mxu0
        %v2249 = vadd.f32 0.0, %v2248
        %2250 = vmatmul.bf16.gmra.mxu0 %v2181
        %v2251 = vpop.f32.mrf.mxu0
        %v2252 = vadd.f32 0.0, %v2251
        %v2253 = vpop.f32.mrf.mxu0
        %v2254 = vadd.f32 0.0, %v2253
        %2255 = vmatmul.bf16.gmra.mxu0 %v2184
        %v2256 = vpop.f32.mrf.mxu0
        %v2257 = vadd.f32 0.0, %v2256
        %v2258 = vpop.f32.mrf.mxu0
        %v2259 = vadd.f32 0.0, %v2258
        %2260 = vmatmul.bf16.gmra.mxu0 %v2187
        %v2261 = vpop.f32.mrf.mxu0
        %v2262 = vadd.f32 0.0, %v2261
        %v2263 = vpop.f32.mrf.mxu0
        %v2264 = vadd.f32 0.0, %v2263
        %2265 = vmatmul.bf16.gmra.mxu0 %v2190
        %v2266 = vpop.f32.mrf.mxu0
        %v2267 = vadd.f32 0.0, %v2266
        %v2268 = vpop.f32.mrf.mxu0
        %v2269 = vadd.f32 0.0, %v2268
        %2270 = vmatmul.bf16.gmra.mxu0 %v2193
        %v2271 = vpop.f32.mrf.mxu0
        %v2272 = vadd.f32 0.0, %v2271
        %v2273 = vpop.f32.mrf.mxu0
        %v2274 = vadd.f32 0.0, %v2273
        %2275 = vmatmul.bf16.gmra.mxu0 %v2196
        %v2276 = vpop.f32.mrf.mxu0
        %v2277 = vadd.f32 0.0, %v2276
        %v2278 = vpop.f32.mrf.mxu0
        %v2279 = vadd.f32 0.0, %v2278
        %2280 = vmatmul.bf16.gmra.mxu0 %v2199
        %v2281 = vpop.f32.mrf.mxu0
        %v2282 = vadd.f32 0.0, %v2281
        %v2283 = vpop.f32.mrf.mxu0
        %v2284 = vadd.f32 0.0, %v2283
        %2285 = vmatmul.bf16.gmra.mxu0 %v2202
        %v2286 = vpop.f32.mrf.mxu0
        %v2287 = vadd.f32 0.0, %v2286
        %v2288 = vpop.f32.mrf.mxu0
        %v2289 = vadd.f32 0.0, %v2288
        %2290 = vmatmul.bf16.gmra.mxu0 %v2205
        %v2291 = vpop.f32.mrf.mxu0
        %v2292 = vadd.f32 0.0, %v2291
        %v2293 = vpop.f32.mrf.mxu0
        %v2294 = vadd.f32 0.0, %v2293
        %2295 = vdwg.mxu0
        %v2298 = vunpack.c.l.b16 %v1984
        %v2299 = vunpack.c.l.b16 %v1985
        %v2300 = vpack.c.b16 %v2299, %v2298
        %v2313 = vunpack.c.l.b16 %v2016
        %v2314 = vunpack.c.l.b16 %v2017
        %v2315 = vunpack.c.l.b16 %v2018
        %v2316 = vunpack.c.l.b16 %v2019
        %v2317 = vunpack.c.l.b16 %v2020
        %v2318 = vunpack.c.l.b16 %v2021
        %v2319 = vunpack.c.l.b16 %v2022
        %v2320 = vunpack.c.l.b16 %v2023
        %v2321 = vunpack.c.l.b16 %v2024
        %v2322 = vunpack.c.l.b16 %v2025
        %v2323 = vunpack.c.l.b16 %v2026
        %v2324 = vunpack.c.l.b16 %v2027
        %v2325 = vpack.c.b16 %v2314, %v2313
        %v2326 = vpack.c.b16 %v2316, %v2315
        %v2327 = vpack.c.b16 %v2318, %v2317
        %v2328 = vpack.c.b16 %v2320, %v2319
        %v2329 = vpack.c.b16 %v2322, %v2321
        %v2330 = vpack.c.b16 %v2324, %v2323
        %v2338 = vsel %vm2158, %v2300, 0
        %2340 = vmatpush.bf16.msra.mxu0 0
        %2341 = vmatpush.bf16.msra.mxu0 0
        %2342 = vmatpush.bf16.msra.mxu0 %v2330
        %2343 = vmatpush.bf16.msra.mxu0 %v2329
        %2344 = vmatpush.bf16.msra.mxu0 %v2328
        %2345 = vmatpush.bf16.msra.mxu0 %v2327
        %2346 = vmatpush.bf16.msra.mxu0 %v2326
        %2347 = vmatpush.bf16.msra.mxu0 %v2325
        %2348 = vmatmul.bf16.gmra.mxu0 %v2338
        %v2349 = vpop.f32.mrf.mxu0
        %v2350 = vadd.f32 %v2217, %v2349
        %v2351 = vpop.f32.mrf.mxu0
        %v2352 = vadd.f32 %v2219, %v2351
        %2353 = vmatmul.bf16.gmra.mxu0 %v2160
        %v2354 = vpop.f32.mrf.mxu0
        %v2355 = vadd.f32 %v2222, %v2354
        %v2356 = vpop.f32.mrf.mxu0
        %v2357 = vadd.f32 %v2224, %v2356
        %2358 = vmatmul.bf16.gmra.mxu0 %v2163
        %v2359 = vpop.f32.mrf.mxu0
        %v2360 = vadd.f32 %v2227, %v2359
        %v2361 = vpop.f32.mrf.mxu0
        %v2362 = vadd.f32 %v2229, %v2361
        %2363 = vmatmul.bf16.gmra.mxu0 %v2166
        %v2364 = vpop.f32.mrf.mxu0
        %v2365 = vadd.f32 %v2232, %v2364
        %v2366 = vpop.f32.mrf.mxu0
        %v2367 = vadd.f32 %v2234, %v2366
        %2368 = vmatmul.bf16.gmra.mxu0 %v2169
        %v2369 = vpop.f32.mrf.mxu0
        %v2370 = vadd.f32 %v2237, %v2369
        %v2371 = vpop.f32.mrf.mxu0
        %v2372 = vadd.f32 %v2239, %v2371
        %2373 = vmatmul.bf16.gmra.mxu0 %v2172
        %v2374 = vpop.f32.mrf.mxu0
        %v2375 = vadd.f32 %v2242, %v2374
        %v2376 = vpop.f32.mrf.mxu0
        %v2377 = vadd.f32 %v2244, %v2376
        %2378 = vmatmul.bf16.gmra.mxu0 %v2175
        %v2379 = vpop.f32.mrf.mxu0
        %v2380 = vadd.f32 %v2247, %v2379
        %v2381 = vpop.f32.mrf.mxu0
        %v2382 = vadd.f32 %v2249, %v2381
        %2383 = vmatmul.bf16.gmra.mxu0 %v2178
        %v2384 = vpop.f32.mrf.mxu0
        %v2385 = vadd.f32 %v2252, %v2384
        %v2386 = vpop.f32.mrf.mxu0
        %v2387 = vadd.f32 %v2254, %v2386
        %2388 = vmatmul.bf16.gmra.mxu0 %v2181
        %v2389 = vpop.f32.mrf.mxu0
        %v2390 = vadd.f32 %v2257, %v2389
        %v2391 = vpop.f32.mrf.mxu0
        %v2392 = vadd.f32 %v2259, %v2391
        %2393 = vmatmul.bf16.gmra.mxu0 %v2184
        %v2394 = vpop.f32.mrf.mxu0
        %v2395 = vadd.f32 %v2262, %v2394
        %v2396 = vpop.f32.mrf.mxu0
        %v2397 = vadd.f32 %v2264, %v2396
        %2398 = vmatmul.bf16.gmra.mxu0 %v2187
        %v2399 = vpop.f32.mrf.mxu0
        %v2400 = vadd.f32 %v2267, %v2399
        %v2401 = vpop.f32.mrf.mxu0
        %v2402 = vadd.f32 %v2269, %v2401
        %2403 = vmatmul.bf16.gmra.mxu0 %v2190
        %v2404 = vpop.f32.mrf.mxu0
        %v2405 = vadd.f32 %v2272, %v2404
        %v2406 = vpop.f32.mrf.mxu0
        %v2407 = vadd.f32 %v2274, %v2406
        %2408 = vmatmul.bf16.gmra.mxu0 %v2193
        %v2409 = vpop.f32.mrf.mxu0
        %v2410 = vadd.f32 %v2277, %v2409
        %v2411 = vpop.f32.mrf.mxu0
        %v2412 = vadd.f32 %v2279, %v2411
        %2413 = vmatmul.bf16.gmra.mxu0 %v2196
        %v2414 = vpop.f32.mrf.mxu0
        %v2415 = vadd.f32 %v2282, %v2414
        %v2416 = vpop.f32.mrf.mxu0
        %v2417 = vadd.f32 %v2284, %v2416
        %2418 = vmatmul.bf16.gmra.mxu0 %v2199
        %v2419 = vpop.f32.mrf.mxu0
        %v2420 = vadd.f32 %v2287, %v2419
        %v2421 = vpop.f32.mrf.mxu0
        %v2422 = vadd.f32 %v2289, %v2421
        %2423 = vmatmul.bf16.gmra.mxu0 %v2202
        %v2424 = vpop.f32.mrf.mxu0
        %v2425 = vadd.f32 %v2292, %v2424
        %v2426 = vpop.f32.mrf.mxu0
        %v2427 = vadd.f32 %v2294, %v2426
        %2428 = vdwg.mxu0
        %v2429 = vld [vmem:[#allocation2 + $0x10] sm:$0xf]
        %v2430 = vld [vmem:[#allocation2 + $0x14] sm:$0xf]
        %v2431 = vld [vmem:[#allocation2 + $0x18] sm:$0xf]
        %v2432 = vld [vmem:[#allocation2 + $0x1c] sm:$0xf]
        %v2433 = vld [vmem:[#allocation2 + $0x20] sm:$0xf]
        %v2434 = vld [vmem:[#allocation2 + $0x24] sm:$0xf]
        %v2435 = vld [vmem:[#allocation2 + $0x28] sm:$0xf]
        %v2436 = vld [vmem:[#allocation2 + $0x2c] sm:$0xf]
        %v2437 = vld [vmem:[#allocation2 + $0x30] sm:$0xf]
        %v2438 = vld [vmem:[#allocation2 + $0x34] sm:$0xf]
        %v2439 = vld [vmem:[#allocation2 + $0x38] sm:$0xf]
        %v2440 = vld [vmem:[#allocation2 + $0x3c] sm:$0xf]
        %v2441 = vld [vmem:[#allocation2 + $0x40] sm:$0xf]
        %v2442 = vld [vmem:[#allocation2 + $0x44] sm:$0xf]
        %v2443 = vld [vmem:[#allocation2 + $0x48] sm:$0xf]
        %v2444 = vld [vmem:[#allocation2 + $0x4c] sm:$0xf]
        %v2445 = vld [vmem:[#allocation2 + $0x50] sm:$0xf]
        %v2446 = vld [vmem:[#allocation2 + $0x54] sm:$0xf]
        %v2447 = vld [vmem:[#allocation2 + $0x58] sm:$0xf]
        %v2448 = vld [vmem:[#allocation2 + $0x5c] sm:$0xf]
        %v2449 = vld [vmem:[#allocation2 + $0x60] sm:$0xf]
        %v2450 = vld [vmem:[#allocation2 + $0x64] sm:$0xf]
        %v2451 = vld [vmem:[#allocation2 + $0x68] sm:$0xf]
        %v2452 = vld [vmem:[#allocation2 + $0x6c] sm:$0xf]
        %v2453 = vld [vmem:[#allocation2 + $0x70] sm:$0xf]
        %v2454 = vld [vmem:[#allocation2 + $0x74] sm:$0xf]
        %v2455 = vld [vmem:[#allocation2 + $0x78] sm:$0xf]
        %v2456 = vld [vmem:[#allocation2 + $0x7c] sm:$0xf]
        %v2457 = vld [vmem:[#allocation2 + $0x80] sm:$0xf]
        %v2458 = vld [vmem:[#allocation2 + $0x84] sm:$0xf]
        %v2459 = vld [vmem:[#allocation2 + $0x88] sm:$0xf]
        %v2460 = vld [vmem:[#allocation2 + $0x8c] sm:$0xf]
        %v2461 = vld [vmem:[%s3 + $0x60] sm:$0xf]
        %v2462 = vld [vmem:[%s3 + $0x64] sm:$0xf]
        %v2463 = vld [vmem:[%s3 + $0x68] sm:$0xf]
        %v2464 = vld [vmem:[%s3 + $0x6c] sm:$0xf]
        %v2465 = vld [vmem:[%s3 + $0x70] sm:$0xf]
        %v2466 = vld [vmem:[%s3 + $0x74] sm:$0xf]
        %v2467 = vld [vmem:[%s3 + $0x78] sm:$0xf]
        %v2468 = vld [vmem:[%s3 + $0x7c] sm:$0xf]
        %v2469 = vld [vmem:[%s3 + $0x80] sm:$0xf]
        %v2470 = vld [vmem:[%s3 + $0x84] sm:$0xf]
        %v2471 = vld [vmem:[%s3 + $0x88] sm:$0xf]
        %v2472 = vld [vmem:[%s3 + $0x8c] sm:$0xf]
        %v2505 = vunpack.c.l.b16 %v2429
        %v2506 = vunpack.c.l.b16 %v2430
        %v2507 = vunpack.c.l.b16 %v2431
        %v2508 = vunpack.c.l.b16 %v2432
        %v2509 = vunpack.c.l.b16 %v2433
        %v2510 = vunpack.c.l.b16 %v2434
        %v2511 = vunpack.c.l.b16 %v2435
        %v2512 = vunpack.c.l.b16 %v2436
        %v2513 = vunpack.c.l.b16 %v2437
        %v2514 = vunpack.c.l.b16 %v2438
        %v2515 = vunpack.c.l.b16 %v2439
        %v2516 = vunpack.c.l.b16 %v2440
        %v2517 = vunpack.c.l.b16 %v2441
        %v2518 = vunpack.c.l.b16 %v2442
        %v2519 = vunpack.c.l.b16 %v2443
        %v2520 = vunpack.c.l.b16 %v2444
        %v2521 = vunpack.c.l.b16 %v2445
        %v2522 = vunpack.c.l.b16 %v2446
        %v2523 = vunpack.c.l.b16 %v2447
        %v2524 = vunpack.c.l.b16 %v2448
        %v2525 = vunpack.c.l.b16 %v2449
        %v2526 = vunpack.c.l.b16 %v2450
        %v2527 = vunpack.c.l.b16 %v2451
        %v2528 = vunpack.c.l.b16 %v2452
        %v2529 = vunpack.c.l.b16 %v2453
        %v2530 = vunpack.c.l.b16 %v2454
        %v2531 = vunpack.c.l.b16 %v2455
        %v2532 = vunpack.c.l.b16 %v2456
        %v2533 = vunpack.c.l.b16 %v2457
        %v2534 = vunpack.c.l.b16 %v2458
        %v2535 = vunpack.c.l.b16 %v2459
        %v2536 = vunpack.c.l.b16 %v2460
        %v2537 = vpack.c.b16 %v2506, %v2505
        %v2538 = vpack.c.b16 %v2508, %v2507
        %v2539 = vpack.c.b16 %v2510, %v2509
        %v2540 = vpack.c.b16 %v2512, %v2511
        %v2541 = vpack.c.b16 %v2514, %v2513
        %v2542 = vpack.c.b16 %v2516, %v2515
        %v2543 = vpack.c.b16 %v2518, %v2517
        %v2544 = vpack.c.b16 %v2520, %v2519
        %v2545 = vpack.c.b16 %v2522, %v2521
        %v2546 = vpack.c.b16 %v2524, %v2523
        %v2547 = vpack.c.b16 %v2526, %v2525
        %v2548 = vpack.c.b16 %v2528, %v2527
        %v2549 = vpack.c.b16 %v2530, %v2529
        %v2550 = vpack.c.b16 %v2532, %v2531
        %v2551 = vpack.c.b16 %v2534, %v2533
        %v2552 = vpack.c.b16 %v2536, %v2535
        %v2565 = vunpack.c.l.b16 %v2461
        %v2566 = vunpack.c.l.b16 %v2462
        %v2567 = vunpack.c.l.b16 %v2463
        %v2568 = vunpack.c.l.b16 %v2464
        %v2569 = vunpack.c.l.b16 %v2465
        %v2570 = vunpack.c.l.b16 %v2466
        %v2571 = vunpack.c.l.b16 %v2467
        %v2572 = vunpack.c.l.b16 %v2468
        %v2573 = vunpack.c.l.b16 %v2469
        %v2574 = vunpack.c.l.b16 %v2470
        %v2575 = vunpack.c.l.b16 %v2471
        %v2576 = vunpack.c.l.b16 %v2472
        %v2577 = vpack.c.b16 %v2566, %v2565
        %v2578 = vpack.c.b16 %v2568, %v2567
        %v2579 = vpack.c.b16 %v2570, %v2569
        %v2580 = vpack.c.b16 %v2572, %v2571
        %v2581 = vpack.c.b16 %v2574, %v2573
        %v2582 = vpack.c.b16 %v2576, %v2575
        %v2590 = vsel %vm2158, %v2537, 0
        %v2593 = vsel %vm2158, %v2538, 0
        %v2596 = vsel %vm2158, %v2539, 0
        %v2599 = vsel %vm2158, %v2540, 0
        %v2602 = vsel %vm2158, %v2541, 0
        %v2605 = vsel %vm2158, %v2542, 0
        %v2608 = vsel %vm2158, %v2543, 0
        %v2611 = vsel %vm2158, %v2544, 0
        %v2614 = vsel %vm2158, %v2545, 0
        %v2617 = vsel %vm2158, %v2546, 0
        %v2620 = vsel %vm2158, %v2547, 0
        %v2623 = vsel %vm2158, %v2548, 0
        %v2626 = vsel %vm2158, %v2549, 0
        %v2629 = vsel %vm2158, %v2550, 0
        %v2632 = vsel %vm2158, %v2551, 0
        %v2635 = vsel %vm2158, %v2552, 0
        %2637 = vmatpush.bf16.msra.mxu0 0
        %2638 = vmatpush.bf16.msra.mxu0 0
        %2639 = vmatpush.bf16.msra.mxu0 %v2582
        %2640 = vmatpush.bf16.msra.mxu0 %v2581
        %2641 = vmatpush.bf16.msra.mxu0 %v2580
        %2642 = vmatpush.bf16.msra.mxu0 %v2579
        %2643 = vmatpush.bf16.msra.mxu0 %v2578
        %2644 = vmatpush.bf16.msra.mxu0 %v2577
        %2645 = vmatmul.bf16.gmra.mxu0 %v2590
        %v2646 = vpop.f32.mrf.mxu0
        %v2647 = vadd.f32 0.0, %v2646
        %v2648 = vpop.f32.mrf.mxu0
        %v2649 = vadd.f32 0.0, %v2648
        %2650 = vmatmul.bf16.gmra.mxu0 %v2593
        %v2651 = vpop.f32.mrf.mxu0
        %v2652 = vadd.f32 0.0, %v2651
        %v2653 = vpop.f32.mrf.mxu0
        %v2654 = vadd.f32 0.0, %v2653
        %2655 = vmatmul.bf16.gmra.mxu0 %v2596
        %v2656 = vpop.f32.mrf.mxu0
        %v2657 = vadd.f32 0.0, %v2656
        %v2658 = vpop.f32.mrf.mxu0
        %v2659 = vadd.f32 0.0, %v2658
        %2660 = vmatmul.bf16.gmra.mxu0 %v2599
        %v2661 = vpop.f32.mrf.mxu0
        %v2662 = vadd.f32 0.0, %v2661
        %v2663 = vpop.f32.mrf.mxu0
        %v2664 = vadd.f32 0.0, %v2663
        %2665 = vmatmul.bf16.gmra.mxu0 %v2602
        %v2666 = vpop.f32.mrf.mxu0
        %v2667 = vadd.f32 0.0, %v2666
        %v2668 = vpop.f32.mrf.mxu0
        %v2669 = vadd.f32 0.0, %v2668
        %2670 = vmatmul.bf16.gmra.mxu0 %v2605
        %v2671 = vpop.f32.mrf.mxu0
        %v2672 = vadd.f32 0.0, %v2671
        %v2673 = vpop.f32.mrf.mxu0
        %v2674 = vadd.f32 0.0, %v2673
        %2675 = vmatmul.bf16.gmra.mxu0 %v2608
        %v2676 = vpop.f32.mrf.mxu0
        %v2677 = vadd.f32 0.0, %v2676
        %v2678 = vpop.f32.mrf.mxu0
        %v2679 = vadd.f32 0.0, %v2678
        %2680 = vmatmul.bf16.gmra.mxu0 %v2611
        %v2681 = vpop.f32.mrf.mxu0
        %v2682 = vadd.f32 0.0, %v2681
        %v2683 = vpop.f32.mrf.mxu0
        %v2684 = vadd.f32 0.0, %v2683
        %2685 = vmatmul.bf16.gmra.mxu0 %v2614
        %v2686 = vpop.f32.mrf.mxu0
        %v2687 = vadd.f32 0.0, %v2686
        %v2688 = vpop.f32.mrf.mxu0
        %v2689 = vadd.f32 0.0, %v2688
        %2690 = vmatmul.bf16.gmra.mxu0 %v2617
        %v2691 = vpop.f32.mrf.mxu0
        %v2692 = vadd.f32 0.0, %v2691
        %v2693 = vpop.f32.mrf.mxu0
        %v2694 = vadd.f32 0.0, %v2693
        %2695 = vmatmul.bf16.gmra.mxu0 %v2620
        %v2696 = vpop.f32.mrf.mxu0
        %v2697 = vadd.f32 0.0, %v2696
        %v2698 = vpop.f32.mrf.mxu0
        %v2699 = vadd.f32 0.0, %v2698
        %2700 = vmatmul.bf16.gmra.mxu0 %v2623
        %v2701 = vpop.f32.mrf.mxu0
        %v2702 = vadd.f32 0.0, %v2701
        %v2703 = vpop.f32.mrf.mxu0
        %v2704 = vadd.f32 0.0, %v2703
        %2705 = vmatmul.bf16.gmra.mxu0 %v2626
        %v2706 = vpop.f32.mrf.mxu0
        %v2707 = vadd.f32 0.0, %v2706
        %v2708 = vpop.f32.mrf.mxu0
        %v2709 = vadd.f32 0.0, %v2708
        %2710 = vmatmul.bf16.gmra.mxu0 %v2629
        %v2711 = vpop.f32.mrf.mxu0
        %v2712 = vadd.f32 0.0, %v2711
        %v2713 = vpop.f32.mrf.mxu0
        %v2714 = vadd.f32 0.0, %v2713
        %2715 = vmatmul.bf16.gmra.mxu0 %v2632
        %v2716 = vpop.f32.mrf.mxu0
        %v2717 = vadd.f32 0.0, %v2716
        %v2718 = vpop.f32.mrf.mxu0
        %v2719 = vadd.f32 0.0, %v2718
        %2720 = vmatmul.bf16.gmra.mxu0 %v2635
        %v2721 = vpop.f32.mrf.mxu0
        %v2722 = vadd.f32 0.0, %v2721
        %v2723 = vpop.f32.mrf.mxu0
        %v2724 = vadd.f32 0.0, %v2723
        %2725 = vdwg.mxu0
        %v2726 = vadd.f32 %v2350, %v2647
        %v2727 = vadd.f32 %v2352, %v2649
        %v2728 = vadd.f32 %v2355, %v2652
        %v2729 = vadd.f32 %v2357, %v2654
        %v2730 = vadd.f32 %v2360, %v2657
        %v2731 = vadd.f32 %v2362, %v2659
        %v2732 = vadd.f32 %v2365, %v2662
        %v2733 = vadd.f32 %v2367, %v2664
        %v2734 = vadd.f32 %v2370, %v2667
        %v2735 = vadd.f32 %v2372, %v2669
        %v2736 = vadd.f32 %v2375, %v2672
        %v2737 = vadd.f32 %v2377, %v2674
        %v2738 = vadd.f32 %v2380, %v2677
        %v2739 = vadd.f32 %v2382, %v2679
        %v2740 = vadd.f32 %v2385, %v2682
        %v2741 = vadd.f32 %v2387, %v2684
        %v2742 = vadd.f32 %v2390, %v2687
        %v2743 = vadd.f32 %v2392, %v2689
        %v2744 = vadd.f32 %v2395, %v2692
        %v2745 = vadd.f32 %v2397, %v2694
        %v2746 = vadd.f32 %v2400, %v2697
        %v2747 = vadd.f32 %v2402, %v2699
        %v2748 = vadd.f32 %v2405, %v2702
        %v2749 = vadd.f32 %v2407, %v2704
        %v2750 = vadd.f32 %v2410, %v2707
        %v2751 = vadd.f32 %v2412, %v2709
        %v2752 = vadd.f32 %v2415, %v2712
        %v2753 = vadd.f32 %v2417, %v2714
        %v2754 = vadd.f32 %v2420, %v2717
        %v2755 = vadd.f32 %v2422, %v2719
        %v2756 = vadd.f32 %v2425, %v2722
        %v2757 = vadd.f32 %v2427, %v2724
        %v2758 = vld [vmem:[%s4] sm:$0x1]
        %v2760 = vperm.slane %v2758, 0
        %v2762 = vadd.f32 %v2726, %v2760
        %v2763 = vadd.f32 %v2727, %v2760
        %v2764 = vadd.f32 %v2728, %v2760
        %v2765 = vadd.f32 %v2729, %v2760
        %v2766 = vadd.f32 %v2730, %v2760
        %v2767 = vadd.f32 %v2731, %v2760
        %v2768 = vadd.f32 %v2732, %v2760
        %v2769 = vadd.f32 %v2733, %v2760
        %v2770 = vadd.f32 %v2734, %v2760
        %v2771 = vadd.f32 %v2735, %v2760
        %v2772 = vadd.f32 %v2736, %v2760
        %v2773 = vadd.f32 %v2737, %v2760
        %v2774 = vadd.f32 %v2738, %v2760
        %v2775 = vadd.f32 %v2739, %v2760
        %v2776 = vadd.f32 %v2740, %v2760
        %v2777 = vadd.f32 %v2741, %v2760
        %v2778 = vadd.f32 %v2742, %v2760
        %v2779 = vadd.f32 %v2743, %v2760
        %v2780 = vadd.f32 %v2744, %v2760
        %v2781 = vadd.f32 %v2745, %v2760
        %v2782 = vadd.f32 %v2746, %v2760
        %v2783 = vadd.f32 %v2747, %v2760
        %v2784 = vadd.f32 %v2748, %v2760
        %v2785 = vadd.f32 %v2749, %v2760
        %v2786 = vadd.f32 %v2750, %v2760
        %v2787 = vadd.f32 %v2751, %v2760
        %v2788 = vadd.f32 %v2752, %v2760
        %v2789 = vadd.f32 %v2753, %v2760
        %v2790 = vadd.f32 %v2754, %v2760
        %v2791 = vadd.f32 %v2755, %v2760
        %v2792 = vadd.f32 %v2756, %v2760
        %v2793 = vadd.f32 %v2757, %v2760
        %v2794 = vmax.f32 %v2762, 0.0
        %v2795 = vmax.f32 %v2763, 0.0
        %v2796 = vmax.f32 %v2764, 0.0
        %v2797 = vmax.f32 %v2765, 0.0
        %v2798 = vmax.f32 %v2766, 0.0
        %v2799 = vmax.f32 %v2767, 0.0
        %v2800 = vmax.f32 %v2768, 0.0
        %v2801 = vmax.f32 %v2769, 0.0
        %v2802 = vmax.f32 %v2770, 0.0
        %v2803 = vmax.f32 %v2771, 0.0
        %v2804 = vmax.f32 %v2772, 0.0
        %v2805 = vmax.f32 %v2773, 0.0
        %v2806 = vmax.f32 %v2774, 0.0
        %v2807 = vmax.f32 %v2775, 0.0
        %v2808 = vmax.f32 %v2776, 0.0
        %v2809 = vmax.f32 %v2777, 0.0
        %v2810 = vmax.f32 %v2778, 0.0
        %v2811 = vmax.f32 %v2779, 0.0
        %v2812 = vmax.f32 %v2780, 0.0
        %v2813 = vmax.f32 %v2781, 0.0
        %v2814 = vmax.f32 %v2782, 0.0
        %v2815 = vmax.f32 %v2783, 0.0
        %v2816 = vmax.f32 %v2784, 0.0
        %v2817 = vmax.f32 %v2785, 0.0
        %v2818 = vmax.f32 %v2786, 0.0
        %v2819 = vmax.f32 %v2787, 0.0
        %v2820 = vmax.f32 %v2788, 0.0
        %v2821 = vmax.f32 %v2789, 0.0
        %v2822 = vmax.f32 %v2790, 0.0
        %v2823 = vmax.f32 %v2791, 0.0
        %v2824 = vmax.f32 %v2792, 0.0
        %v2825 = vmax.f32 %v2793, 0.0
        %v2826 = vrot.slane %v2794, 1
        %v2827 = vrot.slane %v2795, 1
        %v2828 = vrot.slane %v2796, 1
        %v2829 = vrot.slane %v2797, 1
        %v2830 = vrot.slane %v2798, 1
        %v2831 = vrot.slane %v2799, 1
        %v2832 = vrot.slane %v2800, 1
        %v2833 = vrot.slane %v2801, 1
        %v2834 = vrot.slane %v2802, 1
        %v2835 = vrot.slane %v2803, 1
        %v2836 = vrot.slane %v2804, 1
        %v2837 = vrot.slane %v2805, 1
        %v2838 = vrot.slane %v2806, 1
        %v2839 = vrot.slane %v2807, 1
        %v2840 = vrot.slane %v2808, 1
        %v2841 = vrot.slane %v2809, 1
        %v2842 = vrot.slane %v2810, 1
        %v2843 = vrot.slane %v2811, 1
        %v2844 = vrot.slane %v2812, 1
        %v2845 = vrot.slane %v2813, 1
        %v2846 = vrot.slane %v2814, 1
        %v2847 = vrot.slane %v2815, 1
        %v2848 = vrot.slane %v2816, 1
        %v2849 = vrot.slane %v2817, 1
        %v2850 = vrot.slane %v2818, 1
        %v2851 = vrot.slane %v2819, 1
        %v2852 = vrot.slane %v2820, 1
        %v2853 = vrot.slane %v2821, 1
        %v2854 = vrot.slane %v2822, 1
        %v2855 = vrot.slane %v2823, 1
        %v2856 = vrot.slane %v2824, 1
        %v2857 = vrot.slane %v2825, 1
        %v2858 = vsel %vm1399, %v2856, %v2857
        %v2859 = vsel %vm1399, %v2855, %v2856
        %v2860 = vsel %vm1399, %v2854, %v2855
        %v2861 = vsel %vm1399, %v2853, %v2854
        %v2862 = vsel %vm1399, %v2852, %v2853
        %v2863 = vsel %vm1399, %v2851, %v2852
        %v2864 = vsel %vm1399, %v2850, %v2851
        %v2865 = vsel %vm1399, %v2849, %v2850
        %v2866 = vsel %vm1399, %v2848, %v2849
        %v2867 = vsel %vm1399, %v2847, %v2848
        %v2868 = vsel %vm1399, %v2846, %v2847
        %v2869 = vsel %vm1399, %v2845, %v2846
        %v2870 = vsel %vm1399, %v2844, %v2845
        %v2871 = vsel %vm1399, %v2843, %v2844
        %v2872 = vsel %vm1399, %v2842, %v2843
        %v2873 = vsel %vm1399, %v2841, %v2842
        %v2874 = vsel %vm1399, %v2840, %v2841
        %v2875 = vsel %vm1399, %v2839, %v2840
        %v2876 = vsel %vm1399, %v2838, %v2839
        %v2877 = vsel %vm1399, %v2837, %v2838
        %v2878 = vsel %vm1399, %v2836, %v2837
        %v2879 = vsel %vm1399, %v2835, %v2836
        %v2880 = vsel %vm1399, %v2834, %v2835
        %v2881 = vsel %vm1399, %v2833, %v2834
        %v2882 = vsel %vm1399, %v2832, %v2833
        %v2883 = vsel %vm1399, %v2831, %v2832
        %v2884 = vsel %vm1399, %v2830, %v2831
        %v2885 = vsel %vm1399, %v2829, %v2830
        %v2886 = vsel %vm1399, %v2828, %v2829
        %v2887 = vsel %vm1399, %v2827, %v2828
        %v2888 = vsel %vm1399, %v2826, %v2827
        %v2889 = vsel %vm1399, %v2857, %v2826
        %v2890 = vadd.f32 %v2794, %v2888
        %v2891 = vadd.f32 %v2795, %v2887
        %v2892 = vadd.f32 %v2796, %v2886
        %v2893 = vadd.f32 %v2797, %v2885
        %v2894 = vadd.f32 %v2798, %v2884
        %v2895 = vadd.f32 %v2799, %v2883
        %v2896 = vadd.f32 %v2800, %v2882
        %v2897 = vadd.f32 %v2801, %v2881
        %v2898 = vadd.f32 %v2802, %v2880
        %v2899 = vadd.f32 %v2803, %v2879
        %v2900 = vadd.f32 %v2804, %v2878
        %v2901 = vadd.f32 %v2805, %v2877
        %v2902 = vadd.f32 %v2806, %v2876
        %v2903 = vadd.f32 %v2807, %v2875
        %v2904 = vadd.f32 %v2808, %v2874
        %v2905 = vadd.f32 %v2809, %v2873
        %v2906 = vadd.f32 %v2810, %v2872
        %v2907 = vadd.f32 %v2811, %v2871
        %v2908 = vadd.f32 %v2812, %v2870
        %v2909 = vadd.f32 %v2813, %v2869
        %v2910 = vadd.f32 %v2814, %v2868
        %v2911 = vadd.f32 %v2815, %v2867
        %v2912 = vadd.f32 %v2816, %v2866
        %v2913 = vadd.f32 %v2817, %v2865
        %v2914 = vadd.f32 %v2818, %v2864
        %v2915 = vadd.f32 %v2819, %v2863
        %v2916 = vadd.f32 %v2820, %v2862
        %v2917 = vadd.f32 %v2821, %v2861
        %v2918 = vadd.f32 %v2822, %v2860
        %v2919 = vadd.f32 %v2823, %v2859
        %v2920 = vadd.f32 %v2824, %v2858
        %v2921 = vadd.f32 %v2825, %v2889
        %v2922 = vadd.f32 %v2890, %v2892
        %v2923 = vadd.f32 %v2891, %v2893
        %v2924 = vadd.f32 %v2894, %v2896
        %v2925 = vadd.f32 %v2895, %v2897
        %v2926 = vadd.f32 %v2898, %v2900
        %v2927 = vadd.f32 %v2899, %v2901
        %v2928 = vadd.f32 %v2902, %v2904
        %v2929 = vadd.f32 %v2903, %v2905
        %v2930 = vadd.f32 %v2906, %v2908
        %v2931 = vadd.f32 %v2907, %v2909
        %v2932 = vadd.f32 %v2910, %v2912
        %v2933 = vadd.f32 %v2911, %v2913
        %v2934 = vadd.f32 %v2914, %v2916
        %v2935 = vadd.f32 %v2915, %v2917
        %v2936 = vadd.f32 %v2918, %v2920
        %v2937 = vadd.f32 %v2919, %v2921
        %vm2938 = vcmask 261120
        %2939 = vst.msk [vmem:[#allocation5] sm:$0xff] %vm2938, %v2922
        %2940 = vst.msk [vmem:[#allocation5 + $0x8] sm:$0xff] %vm2938, %v2923
        %2941 = vst.msk [vmem:[#allocation5 + $0x10] sm:$0xff] %vm2938, %v2924
        %2942 = vst.msk [vmem:[#allocation5 + $0x18] sm:$0xff] %vm2938, %v2925
        %2943 = vst.msk [vmem:[#allocation5 + $0x20] sm:$0xff] %vm2938, %v2926
        %2944 = vst.msk [vmem:[#allocation5 + $0x28] sm:$0xff] %vm2938, %v2927
        %2945 = vst.msk [vmem:[#allocation5 + $0x30] sm:$0xff] %vm2938, %v2928
        %2946 = vst.msk [vmem:[#allocation5 + $0x38] sm:$0xff] %vm2938, %v2929
        %2947 = vst.msk [vmem:[#allocation5 + $0x40] sm:$0xff] %vm2938, %v2930
        %2948 = vst.msk [vmem:[#allocation5 + $0x48] sm:$0xff] %vm2938, %v2931
        %2949 = vst.msk [vmem:[#allocation5 + $0x50] sm:$0xff] %vm2938, %v2932
        %2950 = vst.msk [vmem:[#allocation5 + $0x58] sm:$0xff] %vm2938, %v2933
        %2951 = vst.msk [vmem:[#allocation5 + $0x60] sm:$0xff] %vm2938, %v2934
        %2952 = vst.msk [vmem:[#allocation5 + $0x68] sm:$0xff] %vm2938, %v2935
        %2953 = vst.msk [vmem:[#allocation5 + $0x70] sm:$0xff] %vm2938, %v2936
        %2954 = vst.msk [vmem:[#allocation5 + $0x78] sm:$0xff] %vm2938, %v2937
        %v2955 = vld [vmem:[#allocation5] sm:$0x1]
        %v2956 = vld [vmem:[#allocation5 + $0x10] sm:$0x1]
        %v2957 = vld [vmem:[#allocation5 + $0x20] sm:$0x1]
        %v2958 = vld [vmem:[#allocation5 + $0x30] sm:$0x1]
        %v2959 = vld [vmem:[#allocation5 + $0x40] sm:$0x1]
        %v2960 = vld [vmem:[#allocation5 + $0x50] sm:$0x1]
        %v2961 = vld [vmem:[#allocation5 + $0x60] sm:$0x1]
        %v2962 = vld [vmem:[#allocation5 + $0x70] sm:$0x1]
        %vm2963 = vcmask 253952
        %2964 = vst.msk [vmem:[#allocation6] sm:$0x1] %vm2963, %v2955
        %2965 = vst.msk [vmem:[#allocation6 + $0x8] sm:$0x1] %vm2963, %v2956
        %2966 = vst.msk [vmem:[#allocation6 + $0x10] sm:$0x1] %vm2963, %v2957
        %2967 = vst.msk [vmem:[#allocation6 + $0x18] sm:$0x1] %vm2963, %v2958
        %2968 = vst.msk [vmem:[#allocation6 + $0x20] sm:$0x1] %vm2963, %v2959
        %2969 = vst.msk [vmem:[#allocation6 + $0x28] sm:$0x1] %vm2963, %v2960
        %2970 = vst.msk [vmem:[#allocation6 + $0x30] sm:$0x1] %vm2963, %v2961
        %2971 = vst.msk [vmem:[#allocation6 + $0x38] sm:$0x1] %vm2963, %v2962
        %v2972 = vld [vmem:[#allocation5 + $0x2] sm:$0x1]
        %v2973 = vld [vmem:[#allocation5 + $0x12] sm:$0x1]
        %v2974 = vld [vmem:[#allocation5 + $0x22] sm:$0x1]
        %v2975 = vld [vmem:[#allocation5 + $0x32] sm:$0x1]
        %v2976 = vld [vmem:[#allocation5 + $0x42] sm:$0x1]
        %v2977 = vld [vmem:[#allocation5 + $0x52] sm:$0x1]
        %v2978 = vld [vmem:[#allocation5 + $0x62] sm:$0x1]
        %v2979 = vld [vmem:[#allocation5 + $0x72] sm:$0x1]
        %2980 = vst.msk [vmem:[#allocation6 + $0x1] sm:$0x1] %vm2963, %v2972
        %2981 = vst.msk [vmem:[#allocation6 + $0x9] sm:$0x1] %vm2963, %v2973
        %2982 = vst.msk [vmem:[#allocation6 + $0x11] sm:$0x1] %vm2963, %v2974
        %2983 = vst.msk [vmem:[#allocation6 + $0x19] sm:$0x1] %vm2963, %v2975
        %2984 = vst.msk [vmem:[#allocation6 + $0x21] sm:$0x1] %vm2963, %v2976
        %2985 = vst.msk [vmem:[#allocation6 + $0x29] sm:$0x1] %vm2963, %v2977
        %2986 = vst.msk [vmem:[#allocation6 + $0x31] sm:$0x1] %vm2963, %v2978
        %2987 = vst.msk [vmem:[#allocation6 + $0x39] sm:$0x1] %vm2963, %v2979
        %v2988 = vld [vmem:[#allocation5 + $0x4] sm:$0x1]
        %v2989 = vld [vmem:[#allocation5 + $0x14] sm:$0x1]
        %v2990 = vld [vmem:[#allocation5 + $0x24] sm:$0x1]
        %v2991 = vld [vmem:[#allocation5 + $0x34] sm:$0x1]
        %v2992 = vld [vmem:[#allocation5 + $0x44] sm:$0x1]
        %v2993 = vld [vmem:[#allocation5 + $0x54] sm:$0x1]
        %v2994 = vld [vmem:[#allocation5 + $0x64] sm:$0x1]
        %v2995 = vld [vmem:[#allocation5 + $0x74] sm:$0x1]
        %2996 = vst.msk [vmem:[#allocation6 + $0x2] sm:$0x1] %vm2963, %v2988
        %2997 = vst.msk [vmem:[#allocation6 + $0xa] sm:$0x1] %vm2963, %v2989
        %2998 = vst.msk [vmem:[#allocation6 + $0x12] sm:$0x1] %vm2963, %v2990
        %2999 = vst.msk [vmem:[#allocation6 + $0x1a] sm:$0x1] %vm2963, %v2991
        %3000 = vst.msk [vmem:[#allocation6 + $0x22] sm:$0x1] %vm2963, %v2992
        %3001 = vst.msk [vmem:[#allocation6 + $0x2a] sm:$0x1] %vm2963, %v2993
        %3002 = vst.msk [vmem:[#allocation6 + $0x32] sm:$0x1] %vm2963, %v2994
        %3003 = vst.msk [vmem:[#allocation6 + $0x3a] sm:$0x1] %vm2963, %v2995
        %v3004 = vld [vmem:[#allocation5 + $0x6] sm:$0x1]
        %v3005 = vld [vmem:[#allocation5 + $0x16] sm:$0x1]
        %v3006 = vld [vmem:[#allocation5 + $0x26] sm:$0x1]
        %v3007 = vld [vmem:[#allocation5 + $0x36] sm:$0x1]
        %v3008 = vld [vmem:[#allocation5 + $0x46] sm:$0x1]
        %v3009 = vld [vmem:[#allocation5 + $0x56] sm:$0x1]
        %v3010 = vld [vmem:[#allocation5 + $0x66] sm:$0x1]
        %v3011 = vld [vmem:[#allocation5 + $0x76] sm:$0x1]
        %3012 = vst.msk [vmem:[#allocation6 + $0x3] sm:$0x1] %vm2963, %v3004
        %3013 = vst.msk [vmem:[#allocation6 + $0xb] sm:$0x1] %vm2963, %v3005
        %3014 = vst.msk [vmem:[#allocation6 + $0x13] sm:$0x1] %vm2963, %v3006
        %3015 = vst.msk [vmem:[#allocation6 + $0x1b] sm:$0x1] %vm2963, %v3007
        %3016 = vst.msk [vmem:[#allocation6 + $0x23] sm:$0x1] %vm2963, %v3008
        %3017 = vst.msk [vmem:[#allocation6 + $0x2b] sm:$0x1] %vm2963, %v3009
        %3018 = vst.msk [vmem:[#allocation6 + $0x33] sm:$0x1] %vm2963, %v3010
        %3019 = vst.msk [vmem:[#allocation6 + $0x3b] sm:$0x1] %vm2963, %v3011
        %v3020 = vld [vmem:[#allocation5 + $0x8] sm:$0x1]
        %v3021 = vld [vmem:[#allocation5 + $0x18] sm:$0x1]
        %v3022 = vld [vmem:[#allocation5 + $0x28] sm:$0x1]
        %v3023 = vld [vmem:[#allocation5 + $0x38] sm:$0x1]
        %v3024 = vld [vmem:[#allocation5 + $0x48] sm:$0x1]
        %v3025 = vld [vmem:[#allocation5 + $0x58] sm:$0x1]
        %v3026 = vld [vmem:[#allocation5 + $0x68] sm:$0x1]
        %v3027 = vld [vmem:[#allocation5 + $0x78] sm:$0x1]
        %3028 = vst.msk [vmem:[#allocation6 + $0x4] sm:$0x1] %vm2963, %v3020
        %3029 = vst.msk [vmem:[#allocation6 + $0xc] sm:$0x1] %vm2963, %v3021
        %3030 = vst.msk [vmem:[#allocation6 + $0x14] sm:$0x1] %vm2963, %v3022
        %3031 = vst.msk [vmem:[#allocation6 + $0x1c] sm:$0x1] %vm2963, %v3023
        %3032 = vst.msk [vmem:[#allocation6 + $0x24] sm:$0x1] %vm2963, %v3024
        %3033 = vst.msk [vmem:[#allocation6 + $0x2c] sm:$0x1] %vm2963, %v3025
        %3034 = vst.msk [vmem:[#allocation6 + $0x34] sm:$0x1] %vm2963, %v3026
        %3035 = vst.msk [vmem:[#allocation6 + $0x3c] sm:$0x1] %vm2963, %v3027
        %v3036 = vld [vmem:[#allocation5 + $0xa] sm:$0x1]
        %v3037 = vld [vmem:[#allocation5 + $0x1a] sm:$0x1]
        %v3038 = vld [vmem:[#allocation5 + $0x2a] sm:$0x1]
        %v3039 = vld [vmem:[#allocation5 + $0x3a] sm:$0x1]
        %v3040 = vld [vmem:[#allocation5 + $0x4a] sm:$0x1]
        %v3041 = vld [vmem:[#allocation5 + $0x5a] sm:$0x1]
        %v3042 = vld [vmem:[#allocation5 + $0x6a] sm:$0x1]
        %v3043 = vld [vmem:[#allocation5 + $0x7a] sm:$0x1]
        %3044 = vst.msk [vmem:[#allocation6 + $0x5] sm:$0x1] %vm2963, %v3036
        %3045 = vst.msk [vmem:[#allocation6 + $0xd] sm:$0x1] %vm2963, %v3037
        %3046 = vst.msk [vmem:[#allocation6 + $0x15] sm:$0x1] %vm2963, %v3038
        %3047 = vst.msk [vmem:[#allocation6 + $0x1d] sm:$0x1] %vm2963, %v3039
        %3048 = vst.msk [vmem:[#allocation6 + $0x25] sm:$0x1] %vm2963, %v3040
        %3049 = vst.msk [vmem:[#allocation6 + $0x2d] sm:$0x1] %vm2963, %v3041
        %3050 = vst.msk [vmem:[#allocation6 + $0x35] sm:$0x1] %vm2963, %v3042
        %3051 = vst.msk [vmem:[#allocation6 + $0x3d] sm:$0x1] %vm2963, %v3043
        %v3052 = vld [vmem:[#allocation5 + $0xc] sm:$0x1]
        %v3053 = vld [vmem:[#allocation5 + $0x1c] sm:$0x1]
        %v3054 = vld [vmem:[#allocation5 + $0x2c] sm:$0x1]
        %v3055 = vld [vmem:[#allocation5 + $0x3c] sm:$0x1]
        %v3056 = vld [vmem:[#allocation5 + $0x4c] sm:$0x1]
        %v3057 = vld [vmem:[#allocation5 + $0x5c] sm:$0x1]
        %v3058 = vld [vmem:[#allocation5 + $0x6c] sm:$0x1]
        %v3059 = vld [vmem:[#allocation5 + $0x7c] sm:$0x1]
        %3060 = vst.msk [vmem:[#allocation6 + $0x6] sm:$0x1] %vm2963, %v3052
        %3061 = vst.msk [vmem:[#allocation6 + $0xe] sm:$0x1] %vm2963, %v3053
        %3062 = vst.msk [vmem:[#allocation6 + $0x16] sm:$0x1] %vm2963, %v3054
        %3063 = vst.msk [vmem:[#allocation6 + $0x1e] sm:$0x1] %vm2963, %v3055
        %3064 = vst.msk [vmem:[#allocation6 + $0x26] sm:$0x1] %vm2963, %v3056
        %3065 = vst.msk [vmem:[#allocation6 + $0x2e] sm:$0x1] %vm2963, %v3057
        %3066 = vst.msk [vmem:[#allocation6 + $0x36] sm:$0x1] %vm2963, %v3058
        %3067 = vst.msk [vmem:[#allocation6 + $0x3e] sm:$0x1] %vm2963, %v3059
        %v3068 = vld [vmem:[#allocation5 + $0xe] sm:$0x1]
        %v3069 = vld [vmem:[#allocation5 + $0x1e] sm:$0x1]
        %v3070 = vld [vmem:[#allocation5 + $0x2e] sm:$0x1]
        %v3071 = vld [vmem:[#allocation5 + $0x3e] sm:$0x1]
        %v3072 = vld [vmem:[#allocation5 + $0x4e] sm:$0x1]
        %v3073 = vld [vmem:[#allocation5 + $0x5e] sm:$0x1]
        %v3074 = vld [vmem:[#allocation5 + $0x6e] sm:$0x1]
        %v3075 = vld [vmem:[#allocation5 + $0x7e] sm:$0x1]
        %3076 = vst.msk [vmem:[#allocation6 + $0x7] sm:$0x1] %vm2963, %v3068
        %3077 = vst.msk [vmem:[#allocation6 + $0xf] sm:$0x1] %vm2963, %v3069
        %3078 = vst.msk [vmem:[#allocation6 + $0x17] sm:$0x1] %vm2963, %v3070
        %3079 = vst.msk [vmem:[#allocation6 + $0x1f] sm:$0x1] %vm2963, %v3071
        %3080 = vst.msk [vmem:[#allocation6 + $0x27] sm:$0x1] %vm2963, %v3072
        %3081 = vst.msk [vmem:[#allocation6 + $0x2f] sm:$0x1] %vm2963, %v3073
        %3082 = vst.msk [vmem:[#allocation6 + $0x37] sm:$0x1] %vm2963, %v3074
        %3083 = vst.msk [vmem:[#allocation6 + $0x3f] sm:$0x1] %vm2963, %v3075
        %v3084 = vld [vmem:[#allocation6] sm:$0xff]
        %v3085 = vld [vmem:[#allocation6 + $0x8] sm:$0xff]
        %v3086 = vld [vmem:[#allocation6 + $0x10] sm:$0xff]
        %v3087 = vld [vmem:[#allocation6 + $0x18] sm:$0xff]
        %v3088 = vld [vmem:[#allocation6 + $0x20] sm:$0xff]
        %v3089 = vld [vmem:[#allocation6 + $0x28] sm:$0xff]
        %v3090 = vld [vmem:[#allocation6 + $0x30] sm:$0xff]
        %v3091 = vld [vmem:[#allocation6 + $0x38] sm:$0xff]
        %v3092 = vmul.f32 %v3084, 0.25
        %v3093 = vmul.f32 %v3085, 0.25
        %v3094 = vmul.f32 %v3086, 0.25
        %v3095 = vmul.f32 %v3087, 0.25
        %v3096 = vmul.f32 %v3088, 0.25
        %v3097 = vmul.f32 %v3089, 0.25
        %v3098 = vmul.f32 %v3090, 0.25
        %v3099 = vmul.f32 %v3091, 0.25
        %vm3100 = vcmp.lt.s32.totalorder %v726, 0
        %v3101 = vsub.s32 0, %v726
        %v3102 = vsel %vm3100, %v3101, %v726
        %v3103 = vshrl.u32 %v3102, 3
        %v3104 = vand.u32 %v3102, 7
        %v3105 = vsub.s32 0, %v3104
        %v3106 = vsel %vm3100, %v3105, %v3104
        %vm3107 = vcmp.lt.s32.totalorder %v727, 0
        %v3108 = vsub.s32 0, %v727
        %v3109 = vsel %vm3107, %v3108, %v727
        %v3110 = vshrl.u32 %v3109, 3
        %v3111 = vand.u32 %v3109, 7
        %v3112 = vsub.s32 0, %v3111
        %v3113 = vsel %vm3107, %v3112, %v3111
        %vm3114 = vcmp.lt.s32.totalorder %v728, 0
        %v3115 = vsub.s32 0, %v728
        %v3116 = vsel %vm3114, %v3115, %v728
        %v3117 = vshrl.u32 %v3116, 3
        %v3118 = vand.u32 %v3116, 7
        %v3119 = vsub.s32 0, %v3118
        %v3120 = vsel %vm3114, %v3119, %v3118
        %vm3121 = vcmp.lt.s32.totalorder %v729, 0
        %v3122 = vsub.s32 0, %v729
        %v3123 = vsel %vm3121, %v3122, %v729
        %v3124 = vshrl.u32 %v3123, 3
        %v3125 = vand.u32 %v3123, 7
        %v3126 = vsub.s32 0, %v3125
        %v3127 = vsel %vm3121, %v3126, %v3125
        %vm3128 = vcmp.lt.s32.totalorder %v730, 0
        %v3129 = vsub.s32 0, %v730
        %v3130 = vsel %vm3128, %v3129, %v730
        %v3131 = vshrl.u32 %v3130, 3
        %v3132 = vand.u32 %v3130, 7
        %v3133 = vsub.s32 0, %v3132
        %v3134 = vsel %vm3128, %v3133, %v3132
        %vm3135 = vcmp.lt.s32.totalorder %v731, 0
        %v3136 = vsub.s32 0, %v731
        %v3137 = vsel %vm3135, %v3136, %v731
        %v3138 = vshrl.u32 %v3137, 3
        %v3139 = vand.u32 %v3137, 7
        %v3140 = vsub.s32 0, %v3139
        %v3141 = vsel %vm3135, %v3140, %v3139
        %vm3142 = vcmp.lt.s32.totalorder %v732, 0
        %v3143 = vsub.s32 0, %v732
        %v3144 = vsel %vm3142, %v3143, %v732
        %v3145 = vshrl.u32 %v3144, 3
        %v3146 = vand.u32 %v3144, 7
        %v3147 = vsub.s32 0, %v3146
        %v3148 = vsel %vm3142, %v3147, %v3146
        %vm3149 = vcmp.lt.s32.totalorder %v733, 0
        %v3150 = vsub.s32 0, %v733
        %v3151 = vsel %vm3149, %v3150, %v733
        %v3152 = vshrl.u32 %v3151, 3
        %v3153 = vand.u32 %v3151, 7
        %v3154 = vsub.s32 0, %v3153
        %v3155 = vsel %vm3149, %v3154, %v3153
        %vm3156 = vcmp.ne.s32.totalorder %v3106, 0
        %vm3157 = vcmp.ne.s32.totalorder %v3113, 0
        %vm3158 = vcmp.ne.s32.totalorder %v3120, 0
        %vm3159 = vcmp.ne.s32.totalorder %v3127, 0
        %vm3160 = vcmp.ne.s32.totalorder %v3134, 0
        %vm3161 = vcmp.ne.s32.totalorder %v3141, 0
        %vm3162 = vcmp.ne.s32.totalorder %v3148, 0
        %vm3163 = vcmp.ne.s32.totalorder %v3155, 0
        %vm3164 = vcmp.lt.s32.totalorder %v3106, 0
        %vm3165 = vcmp.lt.s32.totalorder %v3113, 0
        %vm3166 = vcmp.lt.s32.totalorder %v3120, 0
        %vm3167 = vcmp.lt.s32.totalorder %v3127, 0
        %vm3168 = vcmp.lt.s32.totalorder %v3134, 0
        %vm3169 = vcmp.lt.s32.totalorder %v3141, 0
        %vm3170 = vcmp.lt.s32.totalorder %v3148, 0
        %vm3171 = vcmp.lt.s32.totalorder %v3155, 0
        %vm3172 = vmand %vm3164, %vm3156
        %vm3173 = vmand %vm3165, %vm3157
        %vm3174 = vmand %vm3166, %vm3158
        %vm3175 = vmand %vm3167, %vm3159
        %vm3176 = vmand %vm3168, %vm3160
        %vm3177 = vmand %vm3169, %vm3161
        %vm3178 = vmand %vm3170, %vm3162
        %vm3179 = vmand %vm3171, %vm3163
        %v3180 = vadd.s32 %v3106, 8
        %v3181 = vadd.s32 %v3113, 8
        %v3182 = vadd.s32 %v3120, 8
        %v3183 = vadd.s32 %v3127, 8
        %v3184 = vadd.s32 %v3134, 8
        %v3185 = vadd.s32 %v3141, 8
        %v3186 = vadd.s32 %v3148, 8
        %v3187 = vadd.s32 %v3155, 8
        %v3188 = vsel %vm3172, %v3180, %v3106
        %v3189 = vsel %vm3173, %v3181, %v3113
        %v3190 = vsel %vm3174, %v3182, %v3120
        %v3191 = vsel %vm3175, %v3183, %v3127
        %v3192 = vsel %vm3176, %v3184, %v3134
        %v3193 = vsel %vm3177, %v3185, %v3141
        %v3194 = vsel %vm3178, %v3186, %v3148
        %v3195 = vsel %vm3179, %v3187, %v3155
        %vm3196 = vcmp.ge.s32.totalorder %v3188, 1
        %vm3197 = vcmp.ge.s32.totalorder %v3189, 1
        %vm3198 = vcmp.ge.s32.totalorder %v3190, 1
        %vm3199 = vcmp.ge.s32.totalorder %v3191, 1
        %vm3200 = vcmp.ge.s32.totalorder %v3192, 1
        %vm3201 = vcmp.ge.s32.totalorder %v3193, 1
        %vm3202 = vcmp.ge.s32.totalorder %v3194, 1
        %vm3203 = vcmp.ge.s32.totalorder %v3195, 1
        %v3204 = vrot.slane %v3092, 7
        %v3205 = vrot.slane %v3093, 7
        %v3206 = vrot.slane %v3094, 7
        %v3207 = vrot.slane %v3095, 7
        %v3208 = vrot.slane %v3096, 7
        %v3209 = vrot.slane %v3097, 7
        %v3210 = vrot.slane %v3098, 7
        %v3211 = vrot.slane %v3099, 7
        %v3212 = vsel %vm1206, %v3210, %v3211
        %v3213 = vsel %vm1206, %v3209, %v3210
        %v3214 = vsel %vm1206, %v3208, %v3209
        %v3215 = vsel %vm1206, %v3207, %v3208
        %v3216 = vsel %vm1206, %v3206, %v3207
        %v3217 = vsel %vm1206, %v3205, %v3206
        %v3218 = vsel %vm1206, %v3204, %v3205
        %v3219 = vsel %vm1206, %v3211, %v3204
        %v3220 = vsel %vm3196, 1, 0
        %v3221 = vsel %vm3197, 1, 0
        %v3222 = vsel %vm3198, 1, 0
        %v3223 = vsel %vm3199, 1, 0
        %v3224 = vsel %vm3200, 1, 0
        %v3225 = vsel %vm3201, 1, 0
        %v3226 = vsel %vm3202, 1, 0
        %v3227 = vsel %vm3203, 1, 0
        %vm3228 = vcmp.eq.s32.totalorder %v3220, 1
        %vm3229 = vcmp.eq.s32.totalorder %v3221, 1
        %vm3230 = vcmp.eq.s32.totalorder %v3222, 1
        %vm3231 = vcmp.eq.s32.totalorder %v3223, 1
        %vm3232 = vcmp.eq.s32.totalorder %v3224, 1
        %vm3233 = vcmp.eq.s32.totalorder %v3225, 1
        %vm3234 = vcmp.eq.s32.totalorder %v3226, 1
        %vm3235 = vcmp.eq.s32.totalorder %v3227, 1
        %v3236 = vsel %vm3228, %v3219, 0.0
        %v3237 = vsel %vm3229, %v3218, 0.0
        %v3238 = vsel %vm3230, %v3217, 0.0
        %v3239 = vsel %vm3231, %v3216, 0.0
        %v3240 = vsel %vm3232, %v3215, 0.0
        %v3241 = vsel %vm3233, %v3214, 0.0
        %v3242 = vsel %vm3234, %v3213, 0.0
        %v3243 = vsel %vm3235, %v3212, 0.0
        %vm3244 = vcmp.le.s32.totalorder %v3188, 6
        %vm3245 = vcmp.le.s32.totalorder %v3189, 6
        %vm3246 = vcmp.le.s32.totalorder %v3190, 6
        %vm3247 = vcmp.le.s32.totalorder %v3191, 6
        %vm3248 = vcmp.le.s32.totalorder %v3192, 6
        %vm3249 = vcmp.le.s32.totalorder %v3193, 6
        %vm3250 = vcmp.le.s32.totalorder %v3194, 6
        %vm3251 = vcmp.le.s32.totalorder %v3195, 6
        %v3252 = vrot.slane %v3092, 1
        %v3253 = vrot.slane %v3093, 1
        %v3254 = vrot.slane %v3094, 1
        %v3255 = vrot.slane %v3095, 1
        %v3256 = vrot.slane %v3096, 1
        %v3257 = vrot.slane %v3097, 1
        %v3258 = vrot.slane %v3098, 1
        %v3259 = vrot.slane %v3099, 1
        %v3260 = vsel %vm1399, %v3258, %v3259
        %v3261 = vsel %vm1399, %v3257, %v3258
        %v3262 = vsel %vm1399, %v3256, %v3257
        %v3263 = vsel %vm1399, %v3255, %v3256
        %v3264 = vsel %vm1399, %v3254, %v3255
        %v3265 = vsel %vm1399, %v3253, %v3254
        %v3266 = vsel %vm1399, %v3252, %v3253
        %v3267 = vsel %vm1399, %v3259, %v3252
        %v3268 = vsel %vm3244, 1, 0
        %v3269 = vsel %vm3245, 1, 0
        %v3270 = vsel %vm3246, 1, 0
        %v3271 = vsel %vm3247, 1, 0
        %v3272 = vsel %vm3248, 1, 0
        %v3273 = vsel %vm3249, 1, 0
        %v3274 = vsel %vm3250, 1, 0
        %v3275 = vsel %vm3251, 1, 0
        %vm3276 = vcmp.eq.s32.totalorder %v3268, 1
        %vm3277 = vcmp.eq.s32.totalorder %v3269, 1
        %vm3278 = vcmp.eq.s32.totalorder %v3270, 1
        %vm3279 = vcmp.eq.s32.totalorder %v3271, 1
        %vm3280 = vcmp.eq.s32.totalorder %v3272, 1
        %vm3281 = vcmp.eq.s32.totalorder %v3273, 1
        %vm3282 = vcmp.eq.s32.totalorder %v3274, 1
        %vm3283 = vcmp.eq.s32.totalorder %v3275, 1
        %v3284 = vsel %vm3276, %v3266, 0.0
        %v3285 = vsel %vm3277, %v3265, 0.0
        %v3286 = vsel %vm3278, %v3264, 0.0
        %v3287 = vsel %vm3279, %v3263, 0.0
        %v3288 = vsel %vm3280, %v3262, 0.0
        %v3289 = vsel %vm3281, %v3261, 0.0
        %v3290 = vsel %vm3282, %v3260, 0.0
        %v3291 = vsel %vm3283, %v3267, 0.0
        %3292 = vst.msk [vmem:[#allocation3] sm:$0xf] %vm1528, 0
        %3293 = vst.msk [vmem:[#allocation3 + $0x24] sm:$0xf] %vm1528, 0
        %v3294 = vpack.c.bf16 %v3236, %v3236
        %v3295 = vpack.c.bf16 %v3237, %v3237
        %v3296 = vpack.c.bf16 %v3238, %v3238
        %v3297 = vpack.c.bf16 %v3239, %v3239
        %v3298 = vpack.c.bf16 %v3240, %v3240
        %v3299 = vpack.c.bf16 %v3241, %v3241
        %v3300 = vpack.c.bf16 %v3242, %v3242
        %v3301 = vpack.c.bf16 %v3243, %v3243
        %3302 = vst.msk [vmem:[#allocation3 + $0x4] sm:$0xf] %vm1565, %v3294
        %3303 = vst.msk [vmem:[#allocation3 + $0x8] sm:$0xf] %vm1565, %v3295
        %3304 = vst.msk [vmem:[#allocation3 + $0xc] sm:$0xf] %vm1565, %v3296
        %3305 = vst.msk [vmem:[#allocation3 + $0x10] sm:$0xf] %vm1565, %v3297
        %3306 = vst.msk [vmem:[#allocation3 + $0x14] sm:$0xf] %vm1565, %v3298
        %3307 = vst.msk [vmem:[#allocation3 + $0x18] sm:$0xf] %vm1565, %v3299
        %3308 = vst.msk [vmem:[#allocation3 + $0x1c] sm:$0xf] %vm1565, %v3300
        %3309 = vst.msk [vmem:[#allocation3 + $0x20] sm:$0xf] %vm1565, %v3301
        %v3310 = vpack.c.bf16 %v3092, %v3092
        %v3311 = vpack.c.bf16 %v3093, %v3093
        %v3312 = vpack.c.bf16 %v3094, %v3094
        %v3313 = vpack.c.bf16 %v3095, %v3095
        %v3314 = vpack.c.bf16 %v3096, %v3096
        %v3315 = vpack.c.bf16 %v3097, %v3097
        %v3316 = vpack.c.bf16 %v3098, %v3098
        %v3317 = vpack.c.bf16 %v3099, %v3099
        %3326 = vrot.lane.b32.xlu0 %v3310, 32
        %v3327 = vpop.permute.xlu0 %3326
        %3328 = vrot.lane.b32.xlu0 %v3311, 32
        %v3329 = vpop.permute.xlu0 %3328
        %3330 = vrot.lane.b32.xlu0 %v3312, 32
        %v3331 = vpop.permute.xlu0 %3330
        %3332 = vrot.lane.b32.xlu0 %v3313, 32
        %v3333 = vpop.permute.xlu0 %3332
        %3334 = vrot.lane.b32.xlu0 %v3314, 32
        %v3335 = vpop.permute.xlu0 %3334
        %3336 = vrot.lane.b32.xlu0 %v3315, 32
        %v3337 = vpop.permute.xlu0 %3336
        %3338 = vrot.lane.b32.xlu0 %v3316, 32
        %v3339 = vpop.permute.xlu0 %3338
        %3340 = vrot.lane.b32.xlu0 %v3317, 32
        %v3341 = vpop.permute.xlu0 %3340
        %3350 = vst.msk [vmem:[#allocation3 + $0x4] sm:$0xf] %vm1758, %v3327
        %3351 = vst.msk [vmem:[#allocation3 + $0x8] sm:$0xf] %vm1758, %v3329
        %3352 = vst.msk [vmem:[#allocation3 + $0xc] sm:$0xf] %vm1758, %v3331
        %3353 = vst.msk [vmem:[#allocation3 + $0x10] sm:$0xf] %vm1758, %v3333
        %3354 = vst.msk [vmem:[#allocation3 + $0x14] sm:$0xf] %vm1758, %v3335
        %3355 = vst.msk [vmem:[#allocation3 + $0x18] sm:$0xf] %vm1758, %v3337
        %3356 = vst.msk [vmem:[#allocation3 + $0x1c] sm:$0xf] %vm1758, %v3339
        %3357 = vst.msk [vmem:[#allocation3 + $0x20] sm:$0xf] %vm1758, %v3341
        %v3358 = vpack.c.bf16 %v3284, %v3284
        %v3359 = vpack.c.bf16 %v3285, %v3285
        %v3360 = vpack.c.bf16 %v3286, %v3286
        %v3361 = vpack.c.bf16 %v3287, %v3287
        %v3362 = vpack.c.bf16 %v3288, %v3288
        %v3363 = vpack.c.bf16 %v3289, %v3289
        %v3364 = vpack.c.bf16 %v3290, %v3290
        %v3365 = vpack.c.bf16 %v3291, %v3291
        %3374 = vrot.lane.b32.xlu0 %v3358, 64
        %v3375 = vpop.permute.xlu0 %3374
        %3376 = vrot.lane.b32.xlu0 %v3359, 64
        %v3377 = vpop.permute.xlu0 %3376
        %3378 = vrot.lane.b32.xlu0 %v3360, 64
        %v3379 = vpop.permute.xlu0 %3378
        %3380 = vrot.lane.b32.xlu0 %v3361, 64
        %v3381 = vpop.permute.xlu0 %3380
        %3382 = vrot.lane.b32.xlu0 %v3362, 64
        %v3383 = vpop.permute.xlu0 %3382
        %3384 = vrot.lane.b32.xlu0 %v3363, 64
        %v3385 = vpop.permute.xlu0 %3384
        %3386 = vrot.lane.b32.xlu0 %v3364, 64
        %v3387 = vpop.permute.xlu0 %3386
        %3388 = vrot.lane.b32.xlu0 %v3365, 64
        %v3389 = vpop.permute.xlu0 %3388
        %3398 = vst.msk [vmem:[#allocation3 + $0x4] sm:$0xf] %vm1951, %v3375
        %3399 = vst.msk [vmem:[#allocation3 + $0x8] sm:$0xf] %vm1951, %v3377
        %3400 = vst.msk [vmem:[#allocation3 + $0xc] sm:$0xf] %vm1951, %v3379
        %3401 = vst.msk [vmem:[#allocation3 + $0x10] sm:$0xf] %vm1951, %v3381
        %3402 = vst.msk [vmem:[#allocation3 + $0x14] sm:$0xf] %vm1951, %v3383
        %3403 = vst.msk [vmem:[#allocation3 + $0x18] sm:$0xf] %vm1951, %v3385
        %3404 = vst.msk [vmem:[#allocation3 + $0x1c] sm:$0xf] %vm1951, %v3387
        %3405 = vst.msk [vmem:[#allocation3 + $0x20] sm:$0xf] %vm1951, %v3389
        %v3406 = vld [vmem:[#allocation3] sm:$0xf]
        %v3407 = vld [vmem:[#allocation3 + $0x4] sm:$0xf]
        %v3408 = vld [vmem:[#allocation3 + $0x8] sm:$0xf]
        %v3409 = vld [vmem:[#allocation3 + $0xc] sm:$0xf]
        %v3410 = vld [vmem:[#allocation3 + $0x10] sm:$0xf]
        %v3411 = vld [vmem:[#allocation3 + $0x14] sm:$0xf]
        %v3412 = vld [vmem:[#allocation3 + $0x18] sm:$0xf]
        %v3413 = vld [vmem:[#allocation3 + $0x1c] sm:$0xf]
        %v3414 = vld [vmem:[%s5] sm:$0xf]
        %v3415 = vld [vmem:[%s5 + $0x4] sm:$0xf]
        %v3416 = vld [vmem:[%s5 + $0x8] sm:$0xf]
        %v3417 = vld [vmem:[%s5 + $0xc] sm:$0xf]
        %v3418 = vld [vmem:[%s5 + $0x10] sm:$0xf]
        %v3419 = vld [vmem:[%s5 + $0x14] sm:$0xf]
        %v3420 = vld [vmem:[%s5 + $0x18] sm:$0xf]
        %v3421 = vld [vmem:[%s5 + $0x1c] sm:$0xf]
        %v3422 = vld [vmem:[%s5 + $0x20] sm:$0xf]
        %v3423 = vld [vmem:[%s5 + $0x24] sm:$0xf]
        %v3424 = vld [vmem:[%s5 + $0x28] sm:$0xf]
        %v3425 = vld [vmem:[%s5 + $0x2c] sm:$0xf]
        %v3426 = vld [vmem:[#allocation3 + $0x20] sm:$0xf]
        %v3427 = vld [vmem:[%s5 + $0x30] sm:$0xf]
        %v3428 = vld [vmem:[%s5 + $0x34] sm:$0xf]
        %v3429 = vld [vmem:[%s5 + $0x38] sm:$0xf]
        %v3430 = vld [vmem:[%s5 + $0x3c] sm:$0xf]
        %v3431 = vld [vmem:[%s5 + $0x40] sm:$0xf]
        %v3432 = vld [vmem:[%s5 + $0x44] sm:$0xf]
        %v3433 = vld [vmem:[%s5 + $0x48] sm:$0xf]
        %v3434 = vld [vmem:[%s5 + $0x4c] sm:$0xf]
        %v3435 = vld [vmem:[%s5 + $0x50] sm:$0xf]
        %v3436 = vld [vmem:[%s5 + $0x54] sm:$0xf]
        %v3437 = vld [vmem:[%s5 + $0x58] sm:$0xf]
        %v3438 = vld [vmem:[%s5 + $0x5c] sm:$0xf]
        %v3447 = vunpack.c.l.b16 %v3407
        %v3448 = vunpack.c.l.b16 %v3408
        %v3449 = vunpack.c.l.b16 %v3409
        %v3450 = vunpack.c.l.b16 %v3410
        %v3451 = vunpack.c.l.b16 %v3411
        %v3452 = vunpack.c.l.b16 %v3412
        %v3453 = vunpack.c.l.b16 %v3413
        %v3454 = vunpack.c.l.b16 %v3426
        %v3455 = vpack.c.b16 %v3448, %v3447
        %v3456 = vpack.c.b16 %v3450, %v3449
        %v3457 = vpack.c.b16 %v3452, %v3451
        %v3458 = vpack.c.b16 %v3454, %v3453
        %v3471 = vunpack.c.l.b16 %v3427
        %v3472 = vunpack.c.l.b16 %v3428
        %v3473 = vunpack.c.l.b16 %v3429
        %v3474 = vunpack.c.l.b16 %v3430
        %v3475 = vunpack.c.l.b16 %v3431
        %v3476 = vunpack.c.l.b16 %v3432
        %v3477 = vunpack.c.l.b16 %v3433
        %v3478 = vunpack.c.l.b16 %v3434
        %v3479 = vunpack.c.l.b16 %v3435
        %v3480 = vunpack.c.l.b16 %v3436
        %v3481 = vunpack.c.l.b16 %v3437
        %v3482 = vunpack.c.l.b16 %v3438
        %v3483 = vpack.c.b16 %v3472, %v3471
        %v3484 = vpack.c.b16 %v3474, %v3473
        %v3485 = vpack.c.b16 %v3476, %v3475
        %v3486 = vpack.c.b16 %v3478, %v3477
        %v3487 = vpack.c.b16 %v3480, %v3479
        %v3488 = vpack.c.b16 %v3482, %v3481
        %v3496 = vsel %vm2158, %v3455, 0
        %v3499 = vsel %vm2158, %v3456, 0
        %v3502 = vsel %vm2158, %v3457, 0
        %v3505 = vsel %vm2158, %v3458, 0
        %3507 = vmatpush.bf16.msra.mxu0 0
        %3508 = vmatpush.bf16.msra.mxu0 0
        %3509 = vmatpush.bf16.msra.mxu0 %v3488
        %3510 = vmatpush.bf16.msra.mxu0 %v3487
        %3511 = vmatpush.bf16.msra.mxu0 %v3486
        %3512 = vmatpush.bf16.msra.mxu0 %v3485
        %3513 = vmatpush.bf16.msra.mxu0 %v3484
        %3514 = vmatpush.bf16.msra.mxu0 %v3483
        %3515 = vmatmul.bf16.gmra.mxu0 %v3496
        %v3516 = vpop.f32.mrf.mxu0
        %v3517 = vadd.f32 0.0, %v3516
        %v3518 = vpop.f32.mrf.mxu0
        %v3519 = vadd.f32 0.0, %v3518
        %3520 = vmatmul.bf16.gmra.mxu0 %v3499
        %v3521 = vpop.f32.mrf.mxu0
        %v3522 = vadd.f32 0.0, %v3521
        %v3523 = vpop.f32.mrf.mxu0
        %v3524 = vadd.f32 0.0, %v3523
        %3525 = vmatmul.bf16.gmra.mxu0 %v3502
        %v3526 = vpop.f32.mrf.mxu0
        %v3527 = vadd.f32 0.0, %v3526
        %v3528 = vpop.f32.mrf.mxu0
        %v3529 = vadd.f32 0.0, %v3528
        %3530 = vmatmul.bf16.gmra.mxu0 %v3505
        %v3531 = vpop.f32.mrf.mxu0
        %v3532 = vadd.f32 0.0, %v3531
        %v3533 = vpop.f32.mrf.mxu0
        %v3534 = vadd.f32 0.0, %v3533
        %3535 = vdwg.mxu0
        %v3537 = vunpack.c.l.b16 %v3406
        %v3538 = vpack.c.b16 %v3447, %v3537
        %v3539 = vpack.c.b16 %v3449, %v3448
        %v3540 = vpack.c.b16 %v3451, %v3450
        %v3541 = vpack.c.b16 %v3453, %v3452
        %v3554 = vunpack.c.l.b16 %v3414
        %v3555 = vunpack.c.l.b16 %v3415
        %v3556 = vunpack.c.l.b16 %v3416
        %v3557 = vunpack.c.l.b16 %v3417
        %v3558 = vunpack.c.l.b16 %v3418
        %v3559 = vunpack.c.l.b16 %v3419
        %v3560 = vunpack.c.l.b16 %v3420
        %v3561 = vunpack.c.l.b16 %v3421
        %v3562 = vunpack.c.l.b16 %v3422
        %v3563 = vunpack.c.l.b16 %v3423
        %v3564 = vunpack.c.l.b16 %v3424
        %v3565 = vunpack.c.l.b16 %v3425
        %v3566 = vpack.c.b16 %v3555, %v3554
        %v3567 = vpack.c.b16 %v3557, %v3556
        %v3568 = vpack.c.b16 %v3559, %v3558
        %v3569 = vpack.c.b16 %v3561, %v3560
        %v3570 = vpack.c.b16 %v3563, %v3562
        %v3571 = vpack.c.b16 %v3565, %v3564
        %v3579 = vsel %vm2158, %v3538, 0
        %v3582 = vsel %vm2158, %v3539, 0
        %v3585 = vsel %vm2158, %v3540, 0
        %v3588 = vsel %vm2158, %v3541, 0
        %3590 = vmatpush.bf16.msra.mxu0 0
        %3591 = vmatpush.bf16.msra.mxu0 0
        %3592 = vmatpush.bf16.msra.mxu0 %v3571
        %3593 = vmatpush.bf16.msra.mxu0 %v3570
        %3594 = vmatpush.bf16.msra.mxu0 %v3569
        %3595 = vmatpush.bf16.msra.mxu0 %v3568
        %3596 = vmatpush.bf16.msra.mxu0 %v3567
        %3597 = vmatpush.bf16.msra.mxu0 %v3566
        %3598 = vmatmul.bf16.gmra.mxu0 %v3579
        %v3599 = vpop.f32.mrf.mxu0
        %v3600 = vadd.f32 %v3517, %v3599
        %v3601 = vpop.f32.mrf.mxu0
        %v3602 = vadd.f32 %v3519, %v3601
        %3603 = vmatmul.bf16.gmra.mxu0 %v3582
        %v3604 = vpop.f32.mrf.mxu0
        %v3605 = vadd.f32 %v3522, %v3604
        %v3606 = vpop.f32.mrf.mxu0
        %v3607 = vadd.f32 %v3524, %v3606
        %3608 = vmatmul.bf16.gmra.mxu0 %v3585
        %v3609 = vpop.f32.mrf.mxu0
        %v3610 = vadd.f32 %v3527, %v3609
        %v3611 = vpop.f32.mrf.mxu0
        %v3612 = vadd.f32 %v3529, %v3611
        %3613 = vmatmul.bf16.gmra.mxu0 %v3588
        %v3614 = vpop.f32.mrf.mxu0
        %v3615 = vadd.f32 %v3532, %v3614
        %v3616 = vpop.f32.mrf.mxu0
        %v3617 = vadd.f32 %v3534, %v3616
        %3618 = vdwg.mxu0
        %v3619 = vld [vmem:[#allocation3 + $0x8] sm:$0xf]
        %v3620 = vld [vmem:[#allocation3 + $0xc] sm:$0xf]
        %v3621 = vld [vmem:[#allocation3 + $0x10] sm:$0xf]
        %v3622 = vld [vmem:[#allocation3 + $0x14] sm:$0xf]
        %v3623 = vld [vmem:[#allocation3 + $0x18] sm:$0xf]
        %v3624 = vld [vmem:[#allocation3 + $0x1c] sm:$0xf]
        %v3625 = vld [vmem:[#allocation3 + $0x20] sm:$0xf]
        %v3626 = vld [vmem:[#allocation3 + $0x24] sm:$0xf]
        %v3627 = vld [vmem:[%s5 + $0x60] sm:$0xf]
        %v3628 = vld [vmem:[%s5 + $0x64] sm:$0xf]
        %v3629 = vld [vmem:[%s5 + $0x68] sm:$0xf]
        %v3630 = vld [vmem:[%s5 + $0x6c] sm:$0xf]
        %v3631 = vld [vmem:[%s5 + $0x70] sm:$0xf]
        %v3632 = vld [vmem:[%s5 + $0x74] sm:$0xf]
        %v3633 = vld [vmem:[%s5 + $0x78] sm:$0xf]
        %v3634 = vld [vmem:[%s5 + $0x7c] sm:$0xf]
        %v3635 = vld [vmem:[%s5 + $0x80] sm:$0xf]
        %v3636 = vld [vmem:[%s5 + $0x84] sm:$0xf]
        %v3637 = vld [vmem:[%s5 + $0x88] sm:$0xf]
        %v3638 = vld [vmem:[%s5 + $0x8c] sm:$0xf]
        %v3647 = vunpack.c.l.b16 %v3619
        %v3648 = vunpack.c.l.b16 %v3620
        %v3649 = vunpack.c.l.b16 %v3621
        %v3650 = vunpack.c.l.b16 %v3622
        %v3651 = vunpack.c.l.b16 %v3623
        %v3652 = vunpack.c.l.b16 %v3624
        %v3653 = vunpack.c.l.b16 %v3625
        %v3654 = vunpack.c.l.b16 %v3626
        %v3655 = vpack.c.b16 %v3648, %v3647
        %v3656 = vpack.c.b16 %v3650, %v3649
        %v3657 = vpack.c.b16 %v3652, %v3651
        %v3658 = vpack.c.b16 %v3654, %v3653
        %v3671 = vunpack.c.l.b16 %v3627
        %v3672 = vunpack.c.l.b16 %v3628
        %v3673 = vunpack.c.l.b16 %v3629
        %v3674 = vunpack.c.l.b16 %v3630
        %v3675 = vunpack.c.l.b16 %v3631
        %v3676 = vunpack.c.l.b16 %v3632
        %v3677 = vunpack.c.l.b16 %v3633
        %v3678 = vunpack.c.l.b16 %v3634
        %v3679 = vunpack.c.l.b16 %v3635
        %v3680 = vunpack.c.l.b16 %v3636
        %v3681 = vunpack.c.l.b16 %v3637
        %v3682 = vunpack.c.l.b16 %v3638
        %v3683 = vpack.c.b16 %v3672, %v3671
        %v3684 = vpack.c.b16 %v3674, %v3673
        %v3685 = vpack.c.b16 %v3676, %v3675
        %v3686 = vpack.c.b16 %v3678, %v3677
        %v3687 = vpack.c.b16 %v3680, %v3679
        %v3688 = vpack.c.b16 %v3682, %v3681
        %v3696 = vsel %vm2158, %v3655, 0
        %v3699 = vsel %vm2158, %v3656, 0
        %v3702 = vsel %vm2158, %v3657, 0
        %v3705 = vsel %vm2158, %v3658, 0
        %3707 = vmatpush.bf16.msra.mxu0 0
        %3708 = vmatpush.bf16.msra.mxu0 0
        %3709 = vmatpush.bf16.msra.mxu0 %v3688
        %3710 = vmatpush.bf16.msra.mxu0 %v3687
        %3711 = vmatpush.bf16.msra.mxu0 %v3686
        %3712 = vmatpush.bf16.msra.mxu0 %v3685
        %3713 = vmatpush.bf16.msra.mxu0 %v3684
        %3714 = vmatpush.bf16.msra.mxu0 %v3683
        %3715 = vmatmul.bf16.gmra.mxu0 %v3696
        %v3716 = vpop.f32.mrf.mxu0
        %v3717 = vadd.f32 0.0, %v3716
        %v3718 = vpop.f32.mrf.mxu0
        %v3719 = vadd.f32 0.0, %v3718
        %3720 = vmatmul.bf16.gmra.mxu0 %v3699
        %v3721 = vpop.f32.mrf.mxu0
        %v3722 = vadd.f32 0.0, %v3721
        %v3723 = vpop.f32.mrf.mxu0
        %v3724 = vadd.f32 0.0, %v3723
        %3725 = vmatmul.bf16.gmra.mxu0 %v3702
        %v3726 = vpop.f32.mrf.mxu0
        %v3727 = vadd.f32 0.0, %v3726
        %v3728 = vpop.f32.mrf.mxu0
        %v3729 = vadd.f32 0.0, %v3728
        %3730 = vmatmul.bf16.gmra.mxu0 %v3705
        %v3731 = vpop.f32.mrf.mxu0
        %v3732 = vadd.f32 0.0, %v3731
        %v3733 = vpop.f32.mrf.mxu0
        %v3734 = vadd.f32 0.0, %v3733
        %3735 = vdwg.mxu0
        %v3736 = vadd.f32 %v3600, %v3717
        %v3737 = vadd.f32 %v3602, %v3719
        %v3738 = vadd.f32 %v3605, %v3722
        %v3739 = vadd.f32 %v3607, %v3724
        %v3740 = vadd.f32 %v3610, %v3727
        %v3741 = vadd.f32 %v3612, %v3729
        %v3742 = vadd.f32 %v3615, %v3732
        %v3743 = vadd.f32 %v3617, %v3734
        %v3744 = vld [vmem:[%s6] sm:$0x1]
        %v3746 = vperm.slane %v3744, 0
        %v3748 = vadd.f32 %v3736, %v3746
        %v3749 = vadd.f32 %v3737, %v3746
        %v3750 = vadd.f32 %v3738, %v3746
        %v3751 = vadd.f32 %v3739, %v3746
        %v3752 = vadd.f32 %v3740, %v3746
        %v3753 = vadd.f32 %v3741, %v3746
        %v3754 = vadd.f32 %v3742, %v3746
        %v3755 = vadd.f32 %v3743, %v3746
        %v3756 = vmax.f32 %v3748, 0.0
        %v3757 = vmax.f32 %v3749, 0.0
        %v3758 = vmax.f32 %v3750, 0.0
        %v3759 = vmax.f32 %v3751, 0.0
        %v3760 = vmax.f32 %v3752, 0.0
        %v3761 = vmax.f32 %v3753, 0.0
        %v3762 = vmax.f32 %v3754, 0.0
        %v3763 = vmax.f32 %v3755, 0.0
        %v3764 = vrot.slane %v3756, 7
        %v3765 = vrot.slane %v3757, 7
        %v3766 = vrot.slane %v3758, 7
        %v3767 = vrot.slane %v3759, 7
        %v3768 = vrot.slane %v3760, 7
        %v3769 = vrot.slane %v3761, 7
        %v3770 = vrot.slane %v3762, 7
        %v3771 = vrot.slane %v3763, 7
        %v3772 = vsel %vm1206, %v3770, %v3771
        %v3773 = vsel %vm1206, %v3769, %v3770
        %v3774 = vsel %vm1206, %v3768, %v3769
        %v3775 = vsel %vm1206, %v3767, %v3768
        %v3776 = vsel %vm1206, %v3766, %v3767
        %v3777 = vsel %vm1206, %v3765, %v3766
        %v3778 = vsel %vm1206, %v3764, %v3765
        %v3779 = vsel %vm1206, %v3771, %v3764
        %v3780 = vsel %vm3228, %v3779, 0.0
        %v3781 = vsel %vm3229, %v3778, 0.0
        %v3782 = vsel %vm3230, %v3777, 0.0
        %v3783 = vsel %vm3231, %v3776, 0.0
        %v3784 = vsel %vm3232, %v3775, 0.0
        %v3785 = vsel %vm3233, %v3774, 0.0
        %v3786 = vsel %vm3234, %v3773, 0.0
        %v3787 = vsel %vm3235, %v3772, 0.0
        %v3788 = vrot.slane %v3756, 1
        %v3789 = vrot.slane %v3757, 1
        %v3790 = vrot.slane %v3758, 1
        %v3791 = vrot.slane %v3759, 1
        %v3792 = vrot.slane %v3760, 1
        %v3793 = vrot.slane %v3761, 1
        %v3794 = vrot.slane %v3762, 1
        %v3795 = vrot.slane %v3763, 1
        %v3796 = vsel %vm1399, %v3794, %v3795
        %v3797 = vsel %vm1399, %v3793, %v3794
        %v3798 = vsel %vm1399, %v3792, %v3793
        %v3799 = vsel %vm1399, %v3791, %v3792
        %v3800 = vsel %vm1399, %v3790, %v3791
        %v3801 = vsel %vm1399, %v3789, %v3790
        %v3802 = vsel %vm1399, %v3788, %v3789
        %v3803 = vsel %vm1399, %v3795, %v3788
        %v3804 = vsel %vm3276, %v3802, 0.0
        %v3805 = vsel %vm3277, %v3801, 0.0
        %v3806 = vsel %vm3278, %v3800, 0.0
        %v3807 = vsel %vm3279, %v3799, 0.0
        %v3808 = vsel %vm3280, %v3798, 0.0
        %v3809 = vsel %vm3281, %v3797, 0.0
        %v3810 = vsel %vm3282, %v3796, 0.0
        %v3811 = vsel %vm3283, %v3803, 0.0
        %vm3812 = vcmask 1043456
        %vm3813 = vcmask 523268
        %vm3814 = vmor %vm3813, %vm3812
        %3815 = vst.msk [vmem:[#allocation4] sm:$0xff] %vm3814, 0
        %3816 = vst.msk [vmem:[#allocation4 + $0x48] sm:$0xff] %vm3814, 0
        %v3817 = vpack.c.bf16 %v3780, %v3780
        %v3818 = vpack.c.bf16 %v3781, %v3781
        %v3819 = vpack.c.bf16 %v3782, %v3782
        %v3820 = vpack.c.bf16 %v3783, %v3783
        %v3821 = vpack.c.bf16 %v3784, %v3784
        %v3822 = vpack.c.bf16 %v3785, %v3785
        %v3823 = vpack.c.bf16 %v3786, %v3786
        %v3824 = vpack.c.bf16 %v3787, %v3787
        %vm3825 = vcmask 519168
        %3826 = vst.msk [vmem:[#allocation4 + $0x8] sm:$0xf] %vm3825, %v3817
        %3827 = vst.msk [vmem:[#allocation4 + $0x10] sm:$0xf] %vm3825, %v3818
        %3828 = vst.msk [vmem:[#allocation4 + $0x18] sm:$0xf] %vm3825, %v3819
        %3829 = vst.msk [vmem:[#allocation4 + $0x20] sm:$0xf] %vm3825, %v3820
        %3830 = vst.msk [vmem:[#allocation4 + $0x28] sm:$0xf] %vm3825, %v3821
        %3831 = vst.msk [vmem:[#allocation4 + $0x30] sm:$0xf] %vm3825, %v3822
        %3832 = vst.msk [vmem:[#allocation4 + $0x38] sm:$0xf] %vm3825, %v3823
        %3833 = vst.msk [vmem:[#allocation4 + $0x40] sm:$0xf] %vm3825, %v3824
        %v3834 = vpack.c.bf16 %v3756, %v3756
        %v3835 = vpack.c.bf16 %v3757, %v3757
        %v3836 = vpack.c.bf16 %v3758, %v3758
        %v3837 = vpack.c.bf16 %v3759, %v3759
        %v3838 = vpack.c.bf16 %v3760, %v3760
        %v3839 = vpack.c.bf16 %v3761, %v3761
        %v3840 = vpack.c.bf16 %v3762, %v3762
        %v3841 = vpack.c.bf16 %v3763, %v3763
        %3850 = vrot.lane.b32.xlu0 %v3834, 64
        %v3851 = vpop.permute.xlu0 %3850
        %3852 = vrot.lane.b32.xlu0 %v3835, 64
        %v3853 = vpop.permute.xlu0 %3852
        %3854 = vrot.lane.b32.xlu0 %v3836, 64
        %v3855 = vpop.permute.xlu0 %3854
        %3856 = vrot.lane.b32.xlu0 %v3837, 64
        %v3857 = vpop.permute.xlu0 %3856
        %3858 = vrot.lane.b32.xlu0 %v3838, 64
        %v3859 = vpop.permute.xlu0 %3858
        %3860 = vrot.lane.b32.xlu0 %v3839, 64
        %v3861 = vpop.permute.xlu0 %3860
        %3862 = vrot.lane.b32.xlu0 %v3840, 64
        %v3863 = vpop.permute.xlu0 %3862
        %3864 = vrot.lane.b32.xlu0 %v3841, 64
        %v3865 = vpop.permute.xlu0 %3864
        %vm3874 = vcmask 1043968
        %3875 = vst.msk [vmem:[#allocation4 + $0x8] sm:$0xf] %vm3874, %v3851
        %3876 = vst.msk [vmem:[#allocation4 + $0x10] sm:$0xf] %vm3874, %v3853
        %3877 = vst.msk [vmem:[#allocation4 + $0x18] sm:$0xf] %vm3874, %v3855
        %3878 = vst.msk [vmem:[#allocation4 + $0x20] sm:$0xf] %vm3874, %v3857
        %3879 = vst.msk [vmem:[#allocation4 + $0x28] sm:$0xf] %vm3874, %v3859
        %3880 = vst.msk [vmem:[#allocation4 + $0x30] sm:$0xf] %vm3874, %v3861
        %3881 = vst.msk [vmem:[#allocation4 + $0x38] sm:$0xf] %vm3874, %v3863
        %3882 = vst.msk [vmem:[#allocation4 + $0x40] sm:$0xf] %vm3874, %v3865
        %v3883 = vpack.c.bf16 %v3804, %v3804
        %v3884 = vpack.c.bf16 %v3805, %v3805
        %v3885 = vpack.c.bf16 %v3806, %v3806
        %v3886 = vpack.c.bf16 %v3807, %v3807
        %v3887 = vpack.c.bf16 %v3808, %v3808
        %v3888 = vpack.c.bf16 %v3809, %v3809
        %v3889 = vpack.c.bf16 %v3810, %v3810
        %v3890 = vpack.c.bf16 %v3811, %v3811
        %3891 = vst.msk [vmem:[#allocation4 + $0xc] sm:$0xf] %vm3825, %v3883
        %3892 = vst.msk [vmem:[#allocation4 + $0x14] sm:$0xf] %vm3825, %v3884
        %3893 = vst.msk [vmem:[#allocation4 + $0x1c] sm:$0xf] %vm3825, %v3885
        %3894 = vst.msk [vmem:[#allocation4 + $0x24] sm:$0xf] %vm3825, %v3886
        %3895 = vst.msk [vmem:[#allocation4 + $0x2c] sm:$0xf] %vm3825, %v3887
        %3896 = vst.msk [vmem:[#allocation4 + $0x34] sm:$0xf] %vm3825, %v3888
        %3897 = vst.msk [vmem:[#allocation4 + $0x3c] sm:$0xf] %vm3825, %v3889
        %3898 = vst.msk [vmem:[#allocation4 + $0x44] sm:$0xf] %vm3825, %v3890
        %v3899 = vld [vmem:[#allocation4] sm:$0xff]
        %v3900 = vld [vmem:[#allocation4 + $0x8] sm:$0xff]
        %v3901 = vld [vmem:[#allocation4 + $0x10] sm:$0xff]
        %v3902 = vld [vmem:[#allocation4 + $0x18] sm:$0xff]
        %v3903 = vld [vmem:[#allocation4 + $0x20] sm:$0xff]
        %v3904 = vld [vmem:[#allocation4 + $0x28] sm:$0xff]
        %v3905 = vld [vmem:[#allocation4 + $0x30] sm:$0xff]
        %v3906 = vld [vmem:[#allocation4 + $0x38] sm:$0xff]
        %v3907 = vld [vmem:[%s7] sm:$0xf]
        %v3908 = vld [vmem:[%s7 + $0x4] sm:$0xf]
        %v3909 = vld [vmem:[%s7 + $0x8] sm:$0xf]
        %v3910 = vld [vmem:[%s7 + $0xc] sm:$0xf]
        %v3911 = vld [vmem:[%s7 + $0x10] sm:$0xf]
        %v3912 = vld [vmem:[%s7 + $0x14] sm:$0xf]
        %v3913 = vld [vmem:[%s7 + $0x18] sm:$0xf]
        %v3914 = vld [vmem:[%s7 + $0x1c] sm:$0xf]
        %v3915 = vld [vmem:[%s7 + $0x20] sm:$0xf]
        %v3916 = vld [vmem:[%s7 + $0x24] sm:$0xf]
        %v3917 = vld [vmem:[%s7 + $0x28] sm:$0xf]
        %v3918 = vld [vmem:[%s7 + $0x2c] sm:$0xf]
        %v3919 = vld [vmem:[%s7 + $0x30] sm:$0xf]
        %v3920 = vld [vmem:[%s7 + $0x34] sm:$0xf]
        %v3921 = vld [vmem:[%s7 + $0x38] sm:$0xf]
        %v3922 = vld [vmem:[%s7 + $0x3c] sm:$0xf]
        %v3923 = vld [vmem:[%s7 + $0x40] sm:$0xf]
        %v3924 = vld [vmem:[%s7 + $0x44] sm:$0xf]
        %v3925 = vld [vmem:[%s7 + $0x48] sm:$0xf]
        %v3926 = vld [vmem:[%s7 + $0x4c] sm:$0xf]
        %v3927 = vld [vmem:[%s7 + $0x50] sm:$0xf]
        %v3928 = vld [vmem:[%s7 + $0x54] sm:$0xf]
        %v3929 = vld [vmem:[%s7 + $0x58] sm:$0xf]
        %v3930 = vld [vmem:[%s7 + $0x5c] sm:$0xf]
        %v3931 = vld [vmem:[#allocation4 + $0x40] sm:$0xff]
        %v3932 = vld [vmem:[%s7 + $0x60] sm:$0xf]
        %v3933 = vld [vmem:[%s7 + $0x64] sm:$0xf]
        %v3934 = vld [vmem:[%s7 + $0x68] sm:$0xf]
        %v3935 = vld [vmem:[%s7 + $0x6c] sm:$0xf]
        %v3936 = vld [vmem:[%s7 + $0x70] sm:$0xf]
        %v3937 = vld [vmem:[%s7 + $0x74] sm:$0xf]
        %v3938 = vld [vmem:[%s7 + $0x78] sm:$0xf]
        %v3939 = vld [vmem:[%s7 + $0x7c] sm:$0xf]
        %v3940 = vld [vmem:[%s7 + $0x80] sm:$0xf]
        %v3941 = vld [vmem:[%s7 + $0x84] sm:$0xf]
        %v3942 = vld [vmem:[%s7 + $0x88] sm:$0xf]
        %v3943 = vld [vmem:[%s7 + $0x8c] sm:$0xf]
        %v3944 = vld [vmem:[%s7 + $0x90] sm:$0xf]
        %v3945 = vld [vmem:[%s7 + $0x94] sm:$0xf]
        %v3946 = vld [vmem:[%s7 + $0x98] sm:$0xf]
        %v3947 = vld [vmem:[%s7 + $0x9c] sm:$0xf]
        %v3948 = vld [vmem:[%s7 + $0xa0] sm:$0xf]
        %v3949 = vld [vmem:[%s7 + $0xa4] sm:$0xf]
        %v3950 = vld [vmem:[%s7 + $0xa8] sm:$0xf]
        %v3951 = vld [vmem:[%s7 + $0xac] sm:$0xf]
        %v3952 = vld [vmem:[%s7 + $0xb0] sm:$0xf]
        %v3953 = vld [vmem:[%s7 + $0xb4] sm:$0xf]
        %v3954 = vld [vmem:[%s7 + $0xb8] sm:$0xf]
        %v3955 = vld [vmem:[%s7 + $0xbc] sm:$0xf]
        %v3964 = vunpack.c.l.b16 %v3900
        %v3965 = vunpack.c.h.b16 %v3900
        %v3966 = vunpack.c.l.b16 %v3901
        %v3967 = vunpack.c.h.b16 %v3901
        %v3968 = vunpack.c.l.b16 %v3902
        %v3969 = vunpack.c.h.b16 %v3902
        %v3970 = vunpack.c.l.b16 %v3903
        %v3971 = vunpack.c.h.b16 %v3903
        %v3972 = vunpack.c.l.b16 %v3904
        %v3973 = vunpack.c.h.b16 %v3904
        %v3974 = vunpack.c.l.b16 %v3905
        %v3975 = vunpack.c.h.b16 %v3905
        %v3976 = vunpack.c.l.b16 %v3906
        %v3977 = vunpack.c.h.b16 %v3906
        %v3978 = vunpack.c.l.b16 %v3931
        %v3979 = vunpack.c.h.b16 %v3931
        %v3980 = vpack.c.b16 %v3966, %v3964
        %v3981 = vpack.c.b16 %v3967, %v3965
        %v3982 = vpack.c.b16 %v3970, %v3968
        %v3983 = vpack.c.b16 %v3971, %v3969
        %v3984 = vpack.c.b16 %v3974, %v3972
        %v3985 = vpack.c.b16 %v3975, %v3973
        %v3986 = vpack.c.b16 %v3978, %v3976
        %v3987 = vpack.c.b16 %v3979, %v3977
        %v4016 = vunpack.c.l.b16 %v3932
        %v4017 = vunpack.c.l.b16 %v3933
        %v4018 = vunpack.c.l.b16 %v3934
        %v4019 = vunpack.c.l.b16 %v3935
        %v4020 = vunpack.c.l.b16 %v3936
        %v4021 = vunpack.c.l.b16 %v3937
        %v4022 = vunpack.c.l.b16 %v3938
        %v4023 = vunpack.c.l.b16 %v3939
        %v4024 = vunpack.c.l.b16 %v3940
        %v4025 = vunpack.c.l.b16 %v3941
        %v4026 = vunpack.c.l.b16 %v3942
        %v4027 = vunpack.c.l.b16 %v3943
        %v4028 = vunpack.c.l.b16 %v3944
        %v4029 = vunpack.c.l.b16 %v3945
        %v4030 = vunpack.c.l.b16 %v3946
        %v4031 = vunpack.c.l.b16 %v3947
        %v4032 = vunpack.c.l.b16 %v3948
        %v4033 = vunpack.c.l.b16 %v3949
        %v4034 = vunpack.c.l.b16 %v3950
        %v4035 = vunpack.c.l.b16 %v3951
        %v4036 = vunpack.c.l.b16 %v3952
        %v4037 = vunpack.c.l.b16 %v3953
        %v4038 = vunpack.c.l.b16 %v3954
        %v4039 = vunpack.c.l.b16 %v3955
        %v4040 = vpack.c.b16 %v4017, %v4016
        %v4041 = vpack.c.b16 %v4019, %v4018
        %v4042 = vpack.c.b16 %v4021, %v4020
        %v4043 = vpack.c.b16 %v4023, %v4022
        %v4044 = vpack.c.b16 %v4025, %v4024
        %v4045 = vpack.c.b16 %v4027, %v4026
        %v4046 = vpack.c.b16 %v4029, %v4028
        %v4047 = vpack.c.b16 %v4031, %v4030
        %v4048 = vpack.c.b16 %v4033, %v4032
        %v4049 = vpack.c.b16 %v4035, %v4034
        %v4050 = vpack.c.b16 %v4037, %v4036
        %v4051 = vpack.c.b16 %v4039, %v4038
        %vm4064 = vcmask 523264
        %v4066 = vsel %vm4064, %v3981, 0
        %v4069 = vsel %vm4064, %v3983, 0
        %v4072 = vsel %vm4064, %v3985, 0
        %v4075 = vsel %vm4064, %v3987, 0
        %4077 = vmatpush.bf16.msra.mxu0 %v4047
        %4078 = vmatpush.bf16.msra.mxu0 %v4046
        %4079 = vmatpush.bf16.msra.mxu0 %v4045
        %4080 = vmatpush.bf16.msra.mxu0 %v4044
        %4081 = vmatpush.bf16.msra.mxu0 %v4043
        %4082 = vmatpush.bf16.msra.mxu0 %v4042
        %4083 = vmatpush.bf16.msra.mxu0 %v4041
        %4084 = vmatpush.bf16.msra.mxu0 %v4040
        %4085 = vmatmul.bf16.gmra.mxu0 %v3980
        %v4086 = vpop.f32.mrf.mxu0
        %v4087 = vadd.f32 0.0, %v4086
        %v4088 = vpop.f32.mrf.mxu0
        %v4089 = vadd.f32 0.0, %v4088
        %4090 = vmatmul.bf16.gmra.mxu0 %v3982
        %v4091 = vpop.f32.mrf.mxu0
        %v4092 = vadd.f32 0.0, %v4091
        %v4093 = vpop.f32.mrf.mxu0
        %v4094 = vadd.f32 0.0, %v4093
        %4095 = vmatmul.bf16.gmra.mxu0 %v3984
        %v4096 = vpop.f32.mrf.mxu0
        %v4097 = vadd.f32 0.0, %v4096
        %v4098 = vpop.f32.mrf.mxu0
        %v4099 = vadd.f32 0.0, %v4098
        %4100 = vmatmul.bf16.gmra.mxu0 %v3986
        %v4101 = vpop.f32.mrf.mxu0
        %v4102 = vadd.f32 0.0, %v4101
        %v4103 = vpop.f32.mrf.mxu0
        %v4104 = vadd.f32 0.0, %v4103
        %4105 = vdwg.mxu0
        %4106 = vmatpush.bf16.msra.mxu0 0
        %4107 = vmatpush.bf16.msra.mxu0 0
        %4108 = vmatpush.bf16.msra.mxu0 0
        %4109 = vmatpush.bf16.msra.mxu0 0
        %4110 = vmatpush.bf16.msra.mxu0 %v4051
        %4111 = vmatpush.bf16.msra.mxu0 %v4050
        %4112 = vmatpush.bf16.msra.mxu0 %v4049
        %4113 = vmatpush.bf16.msra.mxu0 %v4048
        %4114 = vmatmul.bf16.gmra.mxu0 %v4066
        %v4115 = vpop.f32.mrf.mxu0
        %v4116 = vadd.f32 %v4087, %v4115
        %v4117 = vpop.f32.mrf.mxu0
        %v4118 = vadd.f32 %v4089, %v4117
        %4119 = vmatmul.bf16.gmra.mxu0 %v4069
        %v4120 = vpop.f32.mrf.mxu0
        %v4121 = vadd.f32 %v4092, %v4120
        %v4122 = vpop.f32.mrf.mxu0
        %v4123 = vadd.f32 %v4094, %v4122
        %4124 = vmatmul.bf16.gmra.mxu0 %v4072
        %v4125 = vpop.f32.mrf.mxu0
        %v4126 = vadd.f32 %v4097, %v4125
        %v4127 = vpop.f32.mrf.mxu0
        %v4128 = vadd.f32 %v4099, %v4127
        %4129 = vmatmul.bf16.gmra.mxu0 %v4075
        %v4130 = vpop.f32.mrf.mxu0
        %v4131 = vadd.f32 %v4102, %v4130
        %v4132 = vpop.f32.mrf.mxu0
        %v4133 = vadd.f32 %v4104, %v4132
        %4134 = vdwg.mxu0
        %v4136 = vunpack.c.l.b16 %v3899
        %v4137 = vunpack.c.h.b16 %v3899
        %v4138 = vpack.c.b16 %v3964, %v4136
        %v4139 = vpack.c.b16 %v3965, %v4137
        %v4140 = vpack.c.b16 %v3968, %v3966
        %v4141 = vpack.c.b16 %v3969, %v3967
        %v4142 = vpack.c.b16 %v3972, %v3970
        %v4143 = vpack.c.b16 %v3973, %v3971
        %v4144 = vpack.c.b16 %v3976, %v3974
        %v4145 = vpack.c.b16 %v3977, %v3975
        %v4174 = vunpack.c.l.b16 %v3907
        %v4175 = vunpack.c.l.b16 %v3908
        %v4176 = vunpack.c.l.b16 %v3909
        %v4177 = vunpack.c.l.b16 %v3910
        %v4178 = vunpack.c.l.b16 %v3911
        %v4179 = vunpack.c.l.b16 %v3912
        %v4180 = vunpack.c.l.b16 %v3913
        %v4181 = vunpack.c.l.b16 %v3914
        %v4182 = vunpack.c.l.b16 %v3915
        %v4183 = vunpack.c.l.b16 %v3916
        %v4184 = vunpack.c.l.b16 %v3917
        %v4185 = vunpack.c.l.b16 %v3918
        %v4186 = vunpack.c.l.b16 %v3919
        %v4187 = vunpack.c.l.b16 %v3920
        %v4188 = vunpack.c.l.b16 %v3921
        %v4189 = vunpack.c.l.b16 %v3922
        %v4190 = vunpack.c.l.b16 %v3923
        %v4191 = vunpack.c.l.b16 %v3924
        %v4192 = vunpack.c.l.b16 %v3925
        %v4193 = vunpack.c.l.b16 %v3926
        %v4194 = vunpack.c.l.b16 %v3927
        %v4195 = vunpack.c.l.b16 %v3928
        %v4196 = vunpack.c.l.b16 %v3929
        %v4197 = vunpack.c.l.b16 %v3930
        %v4198 = vpack.c.b16 %v4175, %v4174
        %v4199 = vpack.c.b16 %v4177, %v4176
        %v4200 = vpack.c.b16 %v4179, %v4178
        %v4201 = vpack.c.b16 %v4181, %v4180
        %v4202 = vpack.c.b16 %v4183, %v4182
        %v4203 = vpack.c.b16 %v4185, %v4184
        %v4204 = vpack.c.b16 %v4187, %v4186
        %v4205 = vpack.c.b16 %v4189, %v4188
        %v4206 = vpack.c.b16 %v4191, %v4190
        %v4207 = vpack.c.b16 %v4193, %v4192
        %v4208 = vpack.c.b16 %v4195, %v4194
        %v4209 = vpack.c.b16 %v4197, %v4196
        %v4223 = vsel %vm4064, %v4139, 0
        %v4226 = vsel %vm4064, %v4141, 0
        %v4229 = vsel %vm4064, %v4143, 0
        %v4232 = vsel %vm4064, %v4145, 0
        %4234 = vmatpush.bf16.msra.mxu0 %v4205
        %4235 = vmatpush.bf16.msra.mxu0 %v4204
        %4236 = vmatpush.bf16.msra.mxu0 %v4203
        %4237 = vmatpush.bf16.msra.mxu0 %v4202
        %4238 = vmatpush.bf16.msra.mxu0 %v4201
        %4239 = vmatpush.bf16.msra.mxu0 %v4200
        %4240 = vmatpush.bf16.msra.mxu0 %v4199
        %4241 = vmatpush.bf16.msra.mxu0 %v4198
        %4242 = vmatmul.bf16.gmra.mxu0 %v4138
        %v4243 = vpop.f32.mrf.mxu0
        %v4244 = vadd.f32 %v4116, %v4243
        %v4245 = vpop.f32.mrf.mxu0
        %v4246 = vadd.f32 %v4118, %v4245
        %4247 = vmatmul.bf16.gmra.mxu0 %v4140
        %v4248 = vpop.f32.mrf.mxu0
        %v4249 = vadd.f32 %v4121, %v4248
        %v4250 = vpop.f32.mrf.mxu0
        %v4251 = vadd.f32 %v4123, %v4250
        %4252 = vmatmul.bf16.gmra.mxu0 %v4142
        %v4253 = vpop.f32.mrf.mxu0
        %v4254 = vadd.f32 %v4126, %v4253
        %v4255 = vpop.f32.mrf.mxu0
        %v4256 = vadd.f32 %v4128, %v4255
        %4257 = vmatmul.bf16.gmra.mxu0 %v4144
        %v4258 = vpop.f32.mrf.mxu0
        %v4259 = vadd.f32 %v4131, %v4258
        %v4260 = vpop.f32.mrf.mxu0
        %v4261 = vadd.f32 %v4133, %v4260
        %4262 = vdwg.mxu0
        %4263 = vmatpush.bf16.msra.mxu0 0
        %4264 = vmatpush.bf16.msra.mxu0 0
        %4265 = vmatpush.bf16.msra.mxu0 0
        %4266 = vmatpush.bf16.msra.mxu0 0
        %4267 = vmatpush.bf16.msra.mxu0 %v4209
        %4268 = vmatpush.bf16.msra.mxu0 %v4208
        %4269 = vmatpush.bf16.msra.mxu0 %v4207
        %4270 = vmatpush.bf16.msra.mxu0 %v4206
        %4271 = vmatmul.bf16.gmra.mxu0 %v4223
        %v4272 = vpop.f32.mrf.mxu0
        %v4273 = vadd.f32 %v4244, %v4272
        %v4274 = vpop.f32.mrf.mxu0
        %v4275 = vadd.f32 %v4246, %v4274
        %4276 = vmatmul.bf16.gmra.mxu0 %v4226
        %v4277 = vpop.f32.mrf.mxu0
        %v4278 = vadd.f32 %v4249, %v4277
        %v4279 = vpop.f32.mrf.mxu0
        %v4280 = vadd.f32 %v4251, %v4279
        %4281 = vmatmul.bf16.gmra.mxu0 %v4229
        %v4282 = vpop.f32.mrf.mxu0
        %v4283 = vadd.f32 %v4254, %v4282
        %v4284 = vpop.f32.mrf.mxu0
        %v4285 = vadd.f32 %v4256, %v4284
        %4286 = vmatmul.bf16.gmra.mxu0 %v4232
        %v4287 = vpop.f32.mrf.mxu0
        %v4288 = vadd.f32 %v4259, %v4287
        %v4289 = vpop.f32.mrf.mxu0
        %v4290 = vadd.f32 %v4261, %v4289
        %4291 = vdwg.mxu0
        %v4292 = vld [vmem:[#allocation4 + $0x10] sm:$0xff]
        %v4293 = vld [vmem:[#allocation4 + $0x18] sm:$0xff]
        %v4294 = vld [vmem:[#allocation4 + $0x20] sm:$0xff]
        %v4295 = vld [vmem:[#allocation4 + $0x28] sm:$0xff]
        %v4296 = vld [vmem:[#allocation4 + $0x30] sm:$0xff]
        %v4297 = vld [vmem:[#allocation4 + $0x38] sm:$0xff]
        %v4298 = vld [vmem:[#allocation4 + $0x40] sm:$0xff]
        %v4299 = vld [vmem:[#allocation4 + $0x48] sm:$0xff]
        %v4300 = vld [vmem:[%s7 + $0xc0] sm:$0xf]
        %v4301 = vld [vmem:[%s7 + $0xc4] sm:$0xf]
        %v4302 = vld [vmem:[%s7 + $0xc8] sm:$0xf]
        %v4303 = vld [vmem:[%s7 + $0xcc] sm:$0xf]
        %v4304 = vld [vmem:[%s7 + $0xd0] sm:$0xf]
        %v4305 = vld [vmem:[%s7 + $0xd4] sm:$0xf]
        %v4306 = vld [vmem:[%s7 + $0xd8] sm:$0xf]
        %v4307 = vld [vmem:[%s7 + $0xdc] sm:$0xf]
        %v4308 = vld [vmem:[%s7 + $0xe0] sm:$0xf]
        %v4309 = vld [vmem:[%s7 + $0xe4] sm:$0xf]
        %v4310 = vld [vmem:[%s7 + $0xe8] sm:$0xf]
        %v4311 = vld [vmem:[%s7 + $0xec] sm:$0xf]
        %v4312 = vld [vmem:[%s7 + $0xf0] sm:$0xf]
        %v4313 = vld [vmem:[%s7 + $0xf4] sm:$0xf]
        %v4314 = vld [vmem:[%s7 + $0xf8] sm:$0xf]
        %v4315 = vld [vmem:[%s7 + $0xfc] sm:$0xf]
        %v4316 = vld [vmem:[%s7 + $0x100] sm:$0xf]
        %v4317 = vld [vmem:[%s7 + $0x104] sm:$0xf]
        %v4318 = vld [vmem:[%s7 + $0x108] sm:$0xf]
        %v4319 = vld [vmem:[%s7 + $0x10c] sm:$0xf]
        %v4320 = vld [vmem:[%s7 + $0x110] sm:$0xf]
        %v4321 = vld [vmem:[%s7 + $0x114] sm:$0xf]
        %v4322 = vld [vmem:[%s7 + $0x118] sm:$0xf]
        %v4323 = vld [vmem:[%s7 + $0x11c] sm:$0xf]
        %v4332 = vunpack.c.l.b16 %v4292
        %v4333 = vunpack.c.h.b16 %v4292
        %v4334 = vunpack.c.l.b16 %v4293
        %v4335 = vunpack.c.h.b16 %v4293
        %v4336 = vunpack.c.l.b16 %v4294
        %v4337 = vunpack.c.h.b16 %v4294
        %v4338 = vunpack.c.l.b16 %v4295
        %v4339 = vunpack.c.h.b16 %v4295
        %v4340 = vunpack.c.l.b16 %v4296
        %v4341 = vunpack.c.h.b16 %v4296
        %v4342 = vunpack.c.l.b16 %v4297
        %v4343 = vunpack.c.h.b16 %v4297
        %v4344 = vunpack.c.l.b16 %v4298
        %v4345 = vunpack.c.h.b16 %v4298
        %v4346 = vunpack.c.l.b16 %v4299
        %v4347 = vunpack.c.h.b16 %v4299
        %v4348 = vpack.c.b16 %v4334, %v4332
        %v4349 = vpack.c.b16 %v4335, %v4333
        %v4350 = vpack.c.b16 %v4338, %v4336
        %v4351 = vpack.c.b16 %v4339, %v4337
        %v4352 = vpack.c.b16 %v4342, %v4340
        %v4353 = vpack.c.b16 %v4343, %v4341
        %v4354 = vpack.c.b16 %v4346, %v4344
        %v4355 = vpack.c.b16 %v4347, %v4345
        %v4384 = vunpack.c.l.b16 %v4300
        %v4385 = vunpack.c.l.b16 %v4301
        %v4386 = vunpack.c.l.b16 %v4302
        %v4387 = vunpack.c.l.b16 %v4303
        %v4388 = vunpack.c.l.b16 %v4304
        %v4389 = vunpack.c.l.b16 %v4305
        %v4390 = vunpack.c.l.b16 %v4306
        %v4391 = vunpack.c.l.b16 %v4307
        %v4392 = vunpack.c.l.b16 %v4308
        %v4393 = vunpack.c.l.b16 %v4309
        %v4394 = vunpack.c.l.b16 %v4310
        %v4395 = vunpack.c.l.b16 %v4311
        %v4396 = vunpack.c.l.b16 %v4312
        %v4397 = vunpack.c.l.b16 %v4313
        %v4398 = vunpack.c.l.b16 %v4314
        %v4399 = vunpack.c.l.b16 %v4315
        %v4400 = vunpack.c.l.b16 %v4316
        %v4401 = vunpack.c.l.b16 %v4317
        %v4402 = vunpack.c.l.b16 %v4318
        %v4403 = vunpack.c.l.b16 %v4319
        %v4404 = vunpack.c.l.b16 %v4320
        %v4405 = vunpack.c.l.b16 %v4321
        %v4406 = vunpack.c.l.b16 %v4322
        %v4407 = vunpack.c.l.b16 %v4323
        %v4408 = vpack.c.b16 %v4385, %v4384
        %v4409 = vpack.c.b16 %v4387, %v4386
        %v4410 = vpack.c.b16 %v4389, %v4388
        %v4411 = vpack.c.b16 %v4391, %v4390
        %v4412 = vpack.c.b16 %v4393, %v4392
        %v4413 = vpack.c.b16 %v4395, %v4394
        %v4414 = vpack.c.b16 %v4397, %v4396
        %v4415 = vpack.c.b16 %v4399, %v4398
        %v4416 = vpack.c.b16 %v4401, %v4400
        %v4417 = vpack.c.b16 %v4403, %v4402
        %v4418 = vpack.c.b16 %v4405, %v4404
        %v4419 = vpack.c.b16 %v4407, %v4406
        %v4433 = vsel %vm4064, %v4349, 0
        %v4436 = vsel %vm4064, %v4351, 0
        %v4439 = vsel %vm4064, %v4353, 0
        %v4442 = vsel %vm4064, %v4355, 0
        %4444 = vmatpush.bf16.msra.mxu0 %v4415
        %4445 = vmatpush.bf16.msra.mxu0 %v4414
        %4446 = vmatpush.bf16.msra.mxu0 %v4413
        %4447 = vmatpush.bf16.msra.mxu0 %v4412
        %4448 = vmatpush.bf16.msra.mxu0 %v4411
        %4449 = vmatpush.bf16.msra.mxu0 %v4410
        %4450 = vmatpush.bf16.msra.mxu0 %v4409
        %4451 = vmatpush.bf16.msra.mxu0 %v4408
        %4452 = vmatmul.bf16.gmra.mxu0 %v4348
        %v4453 = vpop.f32.mrf.mxu0
        %v4454 = vadd.f32 0.0, %v4453
        %v4455 = vpop.f32.mrf.mxu0
        %v4456 = vadd.f32 0.0, %v4455
        %4457 = vmatmul.bf16.gmra.mxu0 %v4350
        %v4458 = vpop.f32.mrf.mxu0
        %v4459 = vadd.f32 0.0, %v4458
        %v4460 = vpop.f32.mrf.mxu0
        %v4461 = vadd.f32 0.0, %v4460
        %4462 = vmatmul.bf16.gmra.mxu0 %v4352
        %v4463 = vpop.f32.mrf.mxu0
        %v4464 = vadd.f32 0.0, %v4463
        %v4465 = vpop.f32.mrf.mxu0
        %v4466 = vadd.f32 0.0, %v4465
        %4467 = vmatmul.bf16.gmra.mxu0 %v4354
        %v4468 = vpop.f32.mrf.mxu0
        %v4469 = vadd.f32 0.0, %v4468
        %v4470 = vpop.f32.mrf.mxu0
        %v4471 = vadd.f32 0.0, %v4470
        %4472 = vdwg.mxu0
        %4473 = vmatpush.bf16.msra.mxu0 0
        %4474 = vmatpush.bf16.msra.mxu0 0
        %4475 = vmatpush.bf16.msra.mxu0 0
        %4476 = vmatpush.bf16.msra.mxu0 0
        %4477 = vmatpush.bf16.msra.mxu0 %v4419
        %4478 = vmatpush.bf16.msra.mxu0 %v4418
        %4479 = vmatpush.bf16.msra.mxu0 %v4417
        %4480 = vmatpush.bf16.msra.mxu0 %v4416
        %4481 = vmatmul.bf16.gmra.mxu0 %v4433
        %v4482 = vpop.f32.mrf.mxu0
        %v4483 = vadd.f32 %v4454, %v4482
        %v4484 = vpop.f32.mrf.mxu0
        %v4485 = vadd.f32 %v4456, %v4484
        %4486 = vmatmul.bf16.gmra.mxu0 %v4436
        %v4487 = vpop.f32.mrf.mxu0
        %v4488 = vadd.f32 %v4459, %v4487
        %v4489 = vpop.f32.mrf.mxu0
        %v4490 = vadd.f32 %v4461, %v4489
        %4491 = vmatmul.bf16.gmra.mxu0 %v4439
        %v4492 = vpop.f32.mrf.mxu0
        %v4493 = vadd.f32 %v4464, %v4492
        %v4494 = vpop.f32.mrf.mxu0
        %v4495 = vadd.f32 %v4466, %v4494
        %4496 = vmatmul.bf16.gmra.mxu0 %v4442
        %v4497 = vpop.f32.mrf.mxu0
        %v4498 = vadd.f32 %v4469, %v4497
        %v4499 = vpop.f32.mrf.mxu0
        %v4500 = vadd.f32 %v4471, %v4499
        %4501 = vdwg.mxu0
        %v4502 = vadd.f32 %v4273, %v4483
        %v4503 = vadd.f32 %v4275, %v4485
        %v4504 = vadd.f32 %v4278, %v4488
        %v4505 = vadd.f32 %v4280, %v4490
        %v4506 = vadd.f32 %v4283, %v4493
        %v4507 = vadd.f32 %v4285, %v4495
        %v4508 = vadd.f32 %v4288, %v4498
        %v4509 = vadd.f32 %v4290, %v4500
        %v4510 = vld [vmem:[%s8] sm:$0x1]
        %v4512 = vperm.slane %v4510, 0
        %v4514 = vadd.f32 %v4502, %v4512
        %v4515 = vadd.f32 %v4503, %v4512
        %v4516 = vadd.f32 %v4504, %v4512
        %v4517 = vadd.f32 %v4505, %v4512
        %v4518 = vadd.f32 %v4506, %v4512
        %v4519 = vadd.f32 %v4507, %v4512
        %v4520 = vadd.f32 %v4508, %v4512
        %v4521 = vadd.f32 %v4509, %v4512
        %v4522 = vmax.f32 %v4514, 0.0
        %v4523 = vmax.f32 %v4515, 0.0
        %v4524 = vmax.f32 %v4516, 0.0
        %v4525 = vmax.f32 %v4517, 0.0
        %v4526 = vmax.f32 %v4518, 0.0
        %v4527 = vmax.f32 %v4519, 0.0
        %v4528 = vmax.f32 %v4520, 0.0
        %v4529 = vmax.f32 %v4521, 0.0
        %v4530 = vsel %vm4064, %v4522, 0.0
        %v4531 = vsel %vm4064, %v4523, 0.0
        %v4532 = vadd.f32 %v4530, %v4531
        %v4533 = vsel %vm4064, %v4524, 0.0
        %v4534 = vadd.f32 %v4532, %v4533
        %v4535 = vsel %vm4064, %v4525, 0.0
        %v4536 = vadd.f32 %v4534, %v4535
        %v4537 = vsel %vm4064, %v4526, 0.0
        %v4538 = vadd.f32 %v4536, %v4537
        %v4539 = vsel %vm4064, %v4527, 0.0
        %v4540 = vadd.f32 %v4538, %v4539
        %v4541 = vsel %vm4064, %v4528, 0.0
        %v4542 = vadd.f32 %v4540, %v4541
        %v4543 = vsel %vm4064, %v4529, 0.0
        %v4544 = vadd.f32 %v4542, %v4543
        %v4545 = vrot.slane %v4544, 4
        %v4546 = vadd.f32 %v4544, %v4545
        %v4547 = vrot.slane %v4546, 2
        %v4548 = vadd.f32 %v4546, %v4547
        %v4549 = vrot.slane %v4548, 1
        %v4550 = vadd.f32 %v4548, %v4549
        %v4551 = vmul.f32 %v4550, 0.015625
        %v4552 = vld [vmem:[%s9] sm:$0xff]
        %v4553 = vld [vmem:[%s9 + $0x8] sm:$0xff]
        %v4554 = vld [vmem:[%s9 + $0x10] sm:$0xff]
        %v4555 = vld [vmem:[%s9 + $0x18] sm:$0xff]
        %v4556 = vld [vmem:[%s9 + $0x20] sm:$0xff]
        %v4557 = vld [vmem:[%s9 + $0x28] sm:$0xff]
        %v4558 = vld [vmem:[%s9 + $0x30] sm:$0xff]
        %v4559 = vld [vmem:[%s9 + $0x38] sm:$0xff]
        %v4560 = vld [vmem:[%s9 + $0x40] sm:$0xff]
        %v4561 = vld [vmem:[%s9 + $0x48] sm:$0xff]
        %v4562 = vld [vmem:[%s9 + $0x50] sm:$0xff]
        %v4563 = vld [vmem:[%s9 + $0x58] sm:$0xff]
        %v4564 = vld [vmem:[%s9 + $0x60] sm:$0xff]
        %v4565 = vld [vmem:[%s9 + $0x68] sm:$0xff]
        %v4566 = vld [vmem:[%s9 + $0x70] sm:$0xff]
        %v4567 = vld [vmem:[%s9 + $0x78] sm:$0xff]
        %v4568 = vld [vmem:[%s10] sm:$0x3]
        %v4570 = vperm.slane %v4568, 0
        %v4571 = vperm.slane %v4568, 1
        %v4575 = vsel %vm4064, %v4551, 0
        %4577 = vmatpush.msra.mxu0 0.0
        %4578 = vmatpush.msra.mxu0 0.0
        %4579 = vmatpush.msra.mxu0 0.0
        %4580 = vmatpush.msra.mxu0 0.0
        %4581 = vmatpush.msra.mxu0 0.0
        %4582 = vmatpush.msra.mxu0 0.0
        %4583 = vmatpush.msra.mxu0 0.0
        %4584 = vmatpush.msra.mxu0 0.0
        %4585 = vmatpush.msra.mxu0 %v4566
        %4586 = vmatpush.msra.mxu0 %v4564
        %4587 = vmatpush.msra.mxu0 %v4562
        %4588 = vmatpush.msra.mxu0 %v4560
        %4589 = vmatpush.msra.mxu0 %v4558
        %4590 = vmatpush.msra.mxu0 %v4556
        %4591 = vmatpush.msra.mxu0 %v4554
        %4592 = vmatpush.msra.mxu0 %v4552
        %4593 = vmatmul.f32.gmra.mxu0 %v4575
        %v4594 = vpop.f32.mrf.mxu0
        %v4595 = vadd.f32 %v4570, %v4594
        %4596 = vdwg.mxu0
        %4597 = vmatpush.msra.mxu0 0.0
        %4598 = vmatpush.msra.mxu0 0.0
        %4599 = vmatpush.msra.mxu0 0.0
        %4600 = vmatpush.msra.mxu0 0.0
        %4601 = vmatpush.msra.mxu0 0.0
        %4602 = vmatpush.msra.mxu0 0.0
        %4603 = vmatpush.msra.mxu0 0.0
        %4604 = vmatpush.msra.mxu0 0.0
        %4605 = vmatpush.msra.mxu0 %v4567
        %4606 = vmatpush.msra.mxu0 %v4565
        %4607 = vmatpush.msra.mxu0 %v4563
        %4608 = vmatpush.msra.mxu0 %v4561
        %4609 = vmatpush.msra.mxu0 %v4559
        %4610 = vmatpush.msra.mxu0 %v4557
        %4611 = vmatpush.msra.mxu0 %v4555
        %4612 = vmatpush.msra.mxu0 %v4553
        %4613 = vmatmul.f32.gmra.mxu0 %v4575
        %v4614 = vpop.f32.mrf.mxu0
        %v4615 = vadd.f32 %v4571, %v4614
        %4616 = vdwg.mxu0
        %v4617 = vmax.f32 %v4595, 0.0
        %v4618 = vmax.f32 %v4615, 0.0
        %v4619 = vld [vmem:[%s11] sm:$0xff]
        %v4620 = vld [vmem:[%s11 + $0x8] sm:$0xff]
        %v4621 = vld [vmem:[%s11 + $0x10] sm:$0xff]
        %v4622 = vld [vmem:[%s11 + $0x18] sm:$0xff]
        %v4623 = vld [vmem:[%s11 + $0x20] sm:$0xff]
        %v4624 = vld [vmem:[%s11 + $0x28] sm:$0xff]
        %v4625 = vld [vmem:[%s11 + $0x30] sm:$0xff]
        %v4626 = vld [vmem:[%s11 + $0x38] sm:$0xff]
        %v4627 = vld [vmem:[%s11 + $0x40] sm:$0xff]
        %v4628 = vld [vmem:[%s11 + $0x48] sm:$0xff]
        %v4629 = vld [vmem:[%s11 + $0x50] sm:$0xff]
        %v4630 = vld [vmem:[%s11 + $0x58] sm:$0xff]
        %v4631 = vld [vmem:[%s11 + $0x60] sm:$0xff]
        %v4632 = vld [vmem:[%s11 + $0x68] sm:$0xff]
        %v4633 = vld [vmem:[%s11 + $0x70] sm:$0xff]
        %v4634 = vld [vmem:[%s11 + $0x78] sm:$0xff]
        %v4635 = vld [vmem:[%s11 + $0x80] sm:$0xff]
        %v4636 = vld [vmem:[%s11 + $0x88] sm:$0xff]
        %v4637 = vld [vmem:[%s11 + $0x90] sm:$0xff]
        %v4638 = vld [vmem:[%s11 + $0x98] sm:$0xff]
        %v4639 = vld [vmem:[%s11 + $0xa0] sm:$0xff]
        %v4640 = vld [vmem:[%s11 + $0xa8] sm:$0xff]
        %v4641 = vld [vmem:[%s11 + $0xb0] sm:$0xff]
        %v4642 = vld [vmem:[%s11 + $0xb8] sm:$0xff]
        %v4643 = vld [vmem:[%s11 + $0xc0] sm:$0xff]
        %v4644 = vld [vmem:[%s12] sm:$0x1]
        %vm4645 = vcmask 588800
        %v4647 = vsel %vm4645, %v4618, 0
        %4649 = vmatpush.msra.mxu0 %v4634
        %4650 = vmatpush.msra.mxu0 %v4633
        %4651 = vmatpush.msra.mxu0 %v4632
        %4652 = vmatpush.msra.mxu0 %v4631
        %4653 = vmatpush.msra.mxu0 %v4630
        %4654 = vmatpush.msra.mxu0 %v4629
        %4655 = vmatpush.msra.mxu0 %v4628
        %4656 = vmatpush.msra.mxu0 %v4627
        %4657 = vmatpush.msra.mxu0 %v4626
        %4658 = vmatpush.msra.mxu0 %v4625
        %4659 = vmatpush.msra.mxu0 %v4624
        %4660 = vmatpush.msra.mxu0 %v4623
        %4661 = vmatpush.msra.mxu0 %v4622
        %4662 = vmatpush.msra.mxu0 %v4621
        %4663 = vmatpush.msra.mxu0 %v4620
        %4664 = vmatpush.msra.mxu0 %v4619
        %4665 = vmatmul.f32.gmra.mxu0 %v4617
        %v4666 = vpop.f32.mrf.mxu0
        %v4667 = vadd.f32 %v4644, %v4666
        %4668 = vdwg.mxu0
        %4669 = vmatpush.msra.mxu0 0.0
        %4670 = vmatpush.msra.mxu0 0.0
        %4671 = vmatpush.msra.mxu0 0.0
        %4672 = vmatpush.msra.mxu0 0.0
        %4673 = vmatpush.msra.mxu0 0.0
        %4674 = vmatpush.msra.mxu0 0.0
        %4675 = vmatpush.msra.mxu0 0.0
        %4676 = vmatpush.msra.mxu0 %v4643
        %4677 = vmatpush.msra.mxu0 %v4642
        %4678 = vmatpush.msra.mxu0 %v4641
        %4679 = vmatpush.msra.mxu0 %v4640
        %4680 = vmatpush.msra.mxu0 %v4639
        %4681 = vmatpush.msra.mxu0 %v4638
        %4682 = vmatpush.msra.mxu0 %v4637
        %4683 = vmatpush.msra.mxu0 %v4636
        %4684 = vmatpush.msra.mxu0 %v4635
        %4685 = vmatmul.f32.gmra.mxu0 %v4647
        %v4686 = vpop.f32.mrf.mxu0
        %v4687 = vadd.f32 %v4667, %v4686
        %4688 = vdwg.mxu0
        %vm4689 = vcmask 73728
        %4690 = vst.msk [vmem:[%s433] sm:$0x1] %vm4689, %v4687
        %s4691 = sand.u32 %s313, 1
        %s4692 = scalar_lea.sflag [#allocation8], %s4691
        %s4693 = sand.u32 %s313, 1
        %s4694 = scalar_lea.vmem [#allocation7], %s4693
        // Predicated region
        $region73: #{small_cnn_forward.1} parent=71 // pred_check
          %p4695 = pneg %p323
        $region74: #{small_cnn_forward.1} parent=71 // pred_check_branch
          %4697 = sbr.rel (%p4695) target = $region76
        $region75: #{small_cnn_forward.1} parent=71 // pred_region
          %4699 = vsyncadd %s4692, 0
          %s4700 = scalar_lea.hbm %s13, %s27
          %s4702 = sshll.u32 %s4694, 4
          %s4703 = int_to_ptr.vmem [resolvable:$true] %s4702
          %s4704 = sshll.u32 %s4700, 4
          %s4705 = int_to_ptr.hbm [resolvable:$true] %s4704
          %4707 = dma.vmem_to_hbm [thread:$0]  %s4703, 16, %s4705, %s4692
        $region76: #{small_cnn_forward.1} parent=71 // pred_fallthru
          _
      $region72: #{small_cnn_forward.1} parent=5 // pred_fallthru
        _
      %p4708 = scmp.le.s32.totalorder 2, %s22
      // Predicated region
      $region77: #{small_cnn_forward.1} parent=5 // pred_check
        %p4709 = pneg %p4708
      $region78: #{small_cnn_forward.1} parent=5 // pred_check_branch
        %4711 = sbr.rel (%p4709) target = $region80
      $region79: #{small_cnn_forward.1} parent=5 // pred_region
        %s4712 = ssub.s32 %s22, 2
        // Predicated region
        $region81: #{small_cnn_forward.1} parent=79 // pred_check
          %p4713 = pneg %p329
        $region82: #{small_cnn_forward.1} parent=79 // pred_check_branch
          %4715 = sbr.rel (%p4713) target = $region84
        $region83: #{small_cnn_forward.1} parent=79 // pred_region
          %s4716 = sand.u32 %s314, 1
          %s4717 = scalar_lea.sflag [#allocation8], %s4716
          %s4718 = sand.u32 %s314, 1
          %s4719 = scalar_lea.vmem [#allocation7], %s4718
          %4721 = dma.done %s4717, 16
        $region84: #{small_cnn_forward.1} parent=79 // pred_fallthru
          _
      $region80: #{small_cnn_forward.1} parent=5 // pred_fallthru
        _
    $region6: #{small_cnn_forward.1} parent=1 // loop_footer
      %s26 = sadd.s32 1, %s22
    $region7: #{small_cnn_forward.1} parent=1 // loop_footer_branch
      %21 = sbr.rel target = $region3
    $region8: #{small_cnn_forward.1} parent=1 // loop_exit
      _
    %4722 = vsyncpa [#allocation8], 1
    %s4723 = scalar_lea.sflag [#allocation8], 1
    %4724 = vsyncpa %s4723, 1

</llo_original>
